<compile_context>
chip_gen: v7x
topology: tpu7x:2x2x1
jax: 0.10.0
libtpu: 0.0.40
codegen_flags: <defaults>
</compile_context>

<pallas_src>
import functools
import math

import jax
import jax.numpy as jnp
from jax import lax
from jax.experimental import pallas as pl
from jax.experimental.pallas import tpu as pltpu

KSIZE = 5  # nn.Conv1d(..., kernel_size=5) twice


def _dqn_kernel(xcol_ref, w1_ref, b1_ref, w2_ref, b2_ref,
                wfc1_ref, bfc1_ref, wfc2_ref, bfc2_ref,
                out_ref, *, L2, n_actions):
    Bt, L1, kc_in = xcol_ref.shape          # (batch tile, L1, KSIZE*C_in)
    c1 = w1_ref.shape[1]                    # 128
    c2 = w2_ref.shape[1]                    # 128

    # conv1 (+ bias, ReLU): single im2col matmul, K = KSIZE*C_in.
    xc = xcol_ref[...].reshape(Bt * L1, kc_in).astype(jnp.bfloat16)
    h1 = jnp.dot(xc, w1_ref[...], preferred_element_type=jnp.float32)
    h1 = jnp.maximum(h1 + b1_ref[...], 0.0).reshape(Bt, L1, c1)     # f32

    # conv2 (+ bias, ReLU): concat the 5 shifted views -> single K=640 matmul.
    h1cat = jnp.concatenate([h1[:, k:k + L2, :] for k in range(KSIZE)], axis=-1)
    h1cat = h1cat.reshape(Bt * L2, KSIZE * c1).astype(jnp.bfloat16)
    h2 = jnp.dot(h1cat, w2_ref[...], preferred_element_type=jnp.float32)
    h2 = jnp.maximum(h2 + b2_ref[...], 0.0)                         # (Bt*L2, c2)

    # fc1 of both heads, fused: (Bt, L2*c2) @ (L2*c2, 2H).
    flat = h2.reshape(Bt, L2 * c2).astype(jnp.bfloat16)
    h = jnp.dot(flat, wfc1_ref[...], preferred_element_type=jnp.float32)
    h = jnp.maximum(h + bfc1_ref[...], 0.0)                         # (Bt, 2H)

    # fc2 of both heads, fused via block-diagonal weights: (Bt, 2H) @ (2H, 1+A).
    y = jnp.dot(h.astype(jnp.bfloat16), wfc2_ref[...],
                preferred_element_type=jnp.float32) + bfc2_ref[...]
    val = y[:, 0:1]
    adv = y[:, 1:1 + n_actions]
    out_ref[...] = val + (adv - jnp.mean(adv, axis=1, keepdims=True))


def conv1d_dqn_forward(x, params, batch_tile=128):
    """x: (B, C_in, L) float32 (torch NCL). params are torch-layout tensors."""
    W1, b1, W2, b2, Wv1, bv1, Wv2, bv2, Wa1, ba1, Wa2, ba2 = params
    B, C_in, L = x.shape
    L1 = L - (KSIZE - 1)
    L2 = L1 - (KSIZE - 1)
    c1, c2 = W1.shape[0], W2.shape[0]
    H = Wv1.shape[0]
    A = Wa2.shape[0]
    mm_dtype = jnp.bfloat16

    # ---- glue: layout / weight prep in plain JAX ----
    # conv1 im2col activations: xcol[b, t, k*C_in + c] = x[b, c, t + k]
    x_t = jnp.transpose(x, (0, 2, 1)).astype(jnp.float32)            # (B, L, C_in)
    xcol = jnp.concatenate([x_t[:, k:k + L1, :] for k in range(KSIZE)], axis=-1)

    # conv weights as (KSIZE*C_in_layer, C_out): row index k*C_in + c.
    w1col = jnp.transpose(W1, (2, 1, 0)).reshape(KSIZE * C_in, c1).astype(mm_dtype)
    w2col = jnp.transpose(W2, (2, 1, 0)).reshape(KSIZE * c1, c2).astype(mm_dtype)
    b1_r = b1.reshape(1, c1).astype(jnp.float32)
    b2_r = b2.reshape(1, c2).astype(jnp.float32)

    # fc1 (both heads fused).  torch flatten is channel-major (row o*L2+t of
    # W.T); our in-kernel flatten is t*c2+o, so regroup the weight rows.
    def regroup(Wfc):
        return Wfc.T.reshape(c2, L2, H).transpose(1, 0, 2).reshape(L2 * c2, H)

    wfc1 = jnp.concatenate([regroup(Wv1), regroup(Wa1)], axis=1).astype(mm_dtype)
    bfc1 = jnp.concatenate([bv1, ba1]).reshape(1, 2 * H).astype(jnp.float32)

    # fc2 (both heads fused via a block-diagonal weight).
    wfc2 = jnp.zeros((2 * H, 1 + A), jnp.float32)
    wfc2 = wfc2.at[:H, 0:1].set(Wv2.T)
    wfc2 = wfc2.at[H:, 1:].set(Wa2.T)
    wfc2 = wfc2.astype(mm_dtype)
    bfc2 = jnp.concatenate([bv2, ba2]).reshape(1, 1 + A).astype(jnp.float32)

    weights = (w1col, b1_r, w2col, b2_r, wfc1, bfc1, wfc2, bfc2)

    # ---- batch blocking ----
    Bt = min(batch_tile, B)
    n_blocks = pl.cdiv(B, Bt)
    B_pad = n_blocks * Bt
    if B_pad != B:
        xcol = jnp.pad(xcol, ((0, B_pad - B), (0, 0), (0, 0)))

    def full_spec(a):
        return pl.BlockSpec(a.shape, lambda b, nd=a.ndim: (0,) * nd)

    kernel = functools.partial(_dqn_kernel, L2=L2, n_actions=A)
    out = pl.pallas_call(
        kernel,
        out_shape=jax.ShapeDtypeStruct((B_pad, A), jnp.float32),
        grid=(n_blocks,),
        in_specs=[pl.BlockSpec((Bt, L1, KSIZE * C_in), lambda b: (b, 0, 0))]
                 + [full_spec(w) for w in weights],
        out_specs=pl.BlockSpec((Bt, A), lambda b: (b, 0)),
        compiler_params=pltpu.CompilerParams(
            dimension_semantics=("parallel",),
            vmem_limit_bytes=32 * 1024 * 1024),
    )(xcol, *weights)
    return out[:B]


def reference_forward(x, params):
    """Independent pure-JAX reference matching the PyTorch forward (f32)."""
    W1, b1, W2, b2, Wv1, bv1, Wv2, bv2, Wa1, ba1, Wa2, ba2 = params
    dn = ('NCH', 'OIH', 'NCH')
    y = lax.conv_general_dilated(x, W1, (1,), 'VALID', dimension_numbers=dn)
    y = jnp.maximum(y + b1[None, :, None], 0.0)
    y = lax.conv_general_dilated(y, W2, (1,), 'VALID', dimension_numbers=dn)
    y = jnp.maximum(y + b2[None, :, None], 0.0)
    flat = y.reshape(x.shape[0], -1)
    hv = jnp.maximum(flat @ Wv1.T + bv1, 0.0)
    val = hv @ Wv2.T + bv2
    ha = jnp.maximum(flat @ Wa1.T + ba1, 0.0)
    adv = ha @ Wa2.T + ba2
    return val + (adv - adv.mean(axis=1, keepdims=True))


if __name__ == "__main__":
    # Small shapes consistent with Conv1DDQN(shape=(C_in, L), actions_n=A)
    B, C_in, L, A = 2, 4, 16, 6
    L1 = L - (KSIZE - 1)
    L2 = L1 - (KSIZE - 1)
    out_size = 128 * L2  # get_conv_out_size equivalent

    key = jax.random.PRNGKey(0)
    ks = jax.random.split(key, 13)

    def uinit(k, shape, fan_in):
        bound = 1.0 / math.sqrt(fan_in)
        return jax.random.uniform(k, shape, jnp.float32, -bound, bound)

    # Deterministic synthetic parameters in torch layout.
    W1 = uinit(ks[0], (128, C_in, KSIZE), C_in * KSIZE)
    b1 = uinit(ks[1], (128,), C_in * KSIZE)
    W2 = uinit(ks[2], (128, 128, KSIZE), 128 * KSIZE)
    b2 = uinit(ks[3], (128,), 128 * KSIZE)
    Wv1 = uinit(ks[4], (512, out_size), out_size)
    bv1 = uinit(ks[5], (512,), out_size)
    Wv2 = uinit(ks[6], (1, 512), 512)
    bv2 = uinit(ks[7], (1,), 512)
    Wa1 = uinit(ks[8], (512, out_size), out_size)
    ba1 = uinit(ks[9], (512,), out_size)
    Wa2 = uinit(ks[10], (A, 512), 512)
    ba2 = uinit(ks[11], (A,), 512)
    params = (W1, b1, W2, b2, Wv1, bv1, Wv2, bv2, Wa1, ba1, Wa2, ba2)

    x = jax.random.normal(ks[12], (B, C_in, L), jnp.float32)

    out = conv1d_dqn_forward(x, params)
    out = jax.block_until_ready(out)

    ref = reference_forward(x, params)
    assert out.shape == (B, A), (out.shape, (B, A))
    if not bool(jnp.allclose(out, ref, rtol=1e-2, atol=1e-2)):
        raise AssertionError(
            f"mismatch: max abs diff = {float(jnp.max(jnp.abs(out - ref)))}")
    print("KERNEL_OK")
</pallas_src>

<mosaic_0001>
module attributes {stable_mosaic.version = 11 : i64} {
  func.func @_dqn_kernel(%arg0: i32, %arg1: memref<2x12x20xf32, #tpu.memory_space<vmem>>, %arg2: memref<20x128xbf16, #tpu.memory_space<vmem>>, %arg3: memref<1x128xf32, #tpu.memory_space<vmem>>, %arg4: memref<640x128xbf16, #tpu.memory_space<vmem>>, %arg5: memref<1x128xf32, #tpu.memory_space<vmem>>, %arg6: memref<1024x1024xbf16, #tpu.memory_space<vmem>>, %arg7: memref<1x1024xf32, #tpu.memory_space<vmem>>, %arg8: memref<1024x7xbf16, #tpu.memory_space<vmem>>, %arg9: memref<1x7xf32, #tpu.memory_space<vmem>>, %arg10: memref<2x6xf32, #tpu.memory_space<vmem>>) attributes {dimension_semantics = [#tpu.dimension_semantics<parallel>], iteration_bounds = array<i64: 1>, scalar_prefetch = 0 : i64, scratch_operands = 0 : i64, tpu.core_type = #tpu.core_type<tc>, window_params = [{transform_indices = @transform_0, window_bounds = array<i64: 2, 12, 20>}, {pipeline_mode = #tpu.pipeline_mode<synchronous>, transform_indices = @transform_1, window_bounds = array<i64: 20, 128>}, {pipeline_mode = #tpu.pipeline_mode<synchronous>, transform_indices = @transform_2, window_bounds = array<i64: 1, 128>}, {pipeline_mode = #tpu.pipeline_mode<synchronous>, transform_indices = @transform_3, window_bounds = array<i64: 640, 128>}, {pipeline_mode = #tpu.pipeline_mode<synchronous>, transform_indices = @transform_4, window_bounds = array<i64: 1, 128>}, {pipeline_mode = #tpu.pipeline_mode<synchronous>, transform_indices = @transform_5, window_bounds = array<i64: 1024, 1024>}, {pipeline_mode = #tpu.pipeline_mode<synchronous>, transform_indices = @transform_6, window_bounds = array<i64: 1, 1024>}, {pipeline_mode = #tpu.pipeline_mode<synchronous>, transform_indices = @transform_7, window_bounds = array<i64: 1024, 7>}, {pipeline_mode = #tpu.pipeline_mode<synchronous>, transform_indices = @transform_8, window_bounds = array<i64: 1, 7>}, {transform_indices = @transform_9, window_bounds = array<i64: 2, 6>}]} {
    %c0 = arith.constant 0 : index
    %c0_0 = arith.constant 0 : index
    %c0_1 = arith.constant 0 : index
    %0 = vector.load %arg1[%c0, %c0_0, %c0_1] : memref<2x12x20xf32, #tpu.memory_space<vmem>>, vector<2x12x20xf32>
    %1 = vector.shape_cast %0 : vector<2x12x20xf32> to vector<24x20xf32>
    %2 = arith.truncf %1 : vector<24x20xf32> to vector<24x20xbf16>
    %c0_2 = arith.constant 0 : index
    %c0_3 = arith.constant 0 : index
    %3 = vector.load %arg2[%c0_2, %c0_3] : memref<20x128xbf16, #tpu.memory_space<vmem>>, vector<20x128xbf16>
    %cst = arith.constant dense<0.000000e+00> : vector<24x128xf32>
    %4 = tpu.matmul %2, %3, %cst {dimension_numbers = #tpu.dot_dimension_numbers<[1], [0], [0], [1], [0, 0, 1, 1], [], []>} : vector<24x20xbf16>, vector<20x128xbf16>, vector<24x128xf32> -> vector<24x128xf32>
    %c0_4 = arith.constant 0 : index
    %c0_5 = arith.constant 0 : index
    %5 = vector.load %arg3[%c0_4, %c0_5] : memref<1x128xf32, #tpu.memory_space<vmem>>, vector<1x128xf32>
    %6 = vector.broadcast %5 : vector<1x128xf32> to vector<24x128xf32>
    %7 = arith.addf %4, %6 : vector<24x128xf32>
    %cst_6 = arith.constant 0.000000e+00 : f32
    %8 = vector.broadcast %cst_6 : f32 to vector<24x128xf32>
    %9 = arith.maximumf %7, %8 : vector<24x128xf32>
    %10 = vector.shape_cast %9 : vector<24x128xf32> to vector<2x12x128xf32>
    %11 = vector.extract_strided_slice %10 {offsets = [0, 0, 0], sizes = [2, 8, 128], strides = [1, 1, 1]} : vector<2x12x128xf32> to vector<2x8x128xf32>
    %12 = vector.extract_strided_slice %10 {offsets = [0, 1, 0], sizes = [2, 8, 128], strides = [1, 1, 1]} : vector<2x12x128xf32> to vector<2x8x128xf32>
    %13 = vector.extract_strided_slice %10 {offsets = [0, 2, 0], sizes = [2, 8, 128], strides = [1, 1, 1]} : vector<2x12x128xf32> to vector<2x8x128xf32>
    %14 = vector.extract_strided_slice %10 {offsets = [0, 3, 0], sizes = [2, 8, 128], strides = [1, 1, 1]} : vector<2x12x128xf32> to vector<2x8x128xf32>
    %15 = vector.extract_strided_slice %10 {offsets = [0, 4, 0], sizes = [2, 8, 128], strides = [1, 1, 1]} : vector<2x12x128xf32> to vector<2x8x128xf32>
    %16 = tpu.concatenate %11, %12, %13, %14, %15 in 2 : vector<2x8x128xf32>, vector<2x8x128xf32>, vector<2x8x128xf32>, vector<2x8x128xf32>, vector<2x8x128xf32> -> vector<2x8x640xf32>
    %17 = vector.shape_cast %16 : vector<2x8x640xf32> to vector<16x640xf32>
    %18 = arith.truncf %17 : vector<16x640xf32> to vector<16x640xbf16>
    %c0_7 = arith.constant 0 : index
    %c0_8 = arith.constant 0 : index
    %19 = vector.load %arg4[%c0_7, %c0_8] : memref<640x128xbf16, #tpu.memory_space<vmem>>, vector<640x128xbf16>
    %cst_9 = arith.constant dense<0.000000e+00> : vector<16x128xf32>
    %20 = tpu.matmul %18, %19, %cst_9 {dimension_numbers = #tpu.dot_dimension_numbers<[1], [0], [0], [1], [0, 0, 1, 1], [], []>} : vector<16x640xbf16>, vector<640x128xbf16>, vector<16x128xf32> -> vector<16x128xf32>
    %c0_10 = arith.constant 0 : index
    %c0_11 = arith.constant 0 : index
    %21 = vector.load %arg5[%c0_10, %c0_11] : memref<1x128xf32, #tpu.memory_space<vmem>>, vector<1x128xf32>
    %22 = vector.broadcast %21 : vector<1x128xf32> to vector<16x128xf32>
    %23 = arith.addf %20, %22 : vector<16x128xf32>
    %cst_12 = arith.constant 0.000000e+00 : f32
    %24 = vector.broadcast %cst_12 : f32 to vector<16x128xf32>
    %25 = arith.maximumf %23, %24 : vector<16x128xf32>
    %26 = vector.shape_cast %25 : vector<16x128xf32> to vector<2x1024xf32>
    %27 = arith.truncf %26 : vector<2x1024xf32> to vector<2x1024xbf16>
    %c0_13 = arith.constant 0 : index
    %c0_14 = arith.constant 0 : index
    %28 = vector.load %arg6[%c0_13, %c0_14] : memref<1024x1024xbf16, #tpu.memory_space<vmem>>, vector<1024x1024xbf16>
    %cst_15 = arith.constant dense<0.000000e+00> : vector<2x1024xf32>
    %29 = tpu.matmul %27, %28, %cst_15 {dimension_numbers = #tpu.dot_dimension_numbers<[1], [0], [0], [1], [0, 0, 1, 1], [], []>} : vector<2x1024xbf16>, vector<1024x1024xbf16>, vector<2x1024xf32> -> vector<2x1024xf32>
    %c0_16 = arith.constant 0 : index
    %c0_17 = arith.constant 0 : index
    %30 = vector.load %arg7[%c0_16, %c0_17] : memref<1x1024xf32, #tpu.memory_space<vmem>>, vector<1x1024xf32>
    %31 = vector.broadcast %30 : vector<1x1024xf32> to vector<2x1024xf32>
    %32 = arith.addf %29, %31 : vector<2x1024xf32>
    %cst_18 = arith.constant 0.000000e+00 : f32
    %33 = vector.broadcast %cst_18 : f32 to vector<2x1024xf32>
    %34 = arith.maximumf %32, %33 : vector<2x1024xf32>
    %35 = arith.truncf %34 : vector<2x1024xf32> to vector<2x1024xbf16>
    %c0_19 = arith.constant 0 : index
    %c0_20 = arith.constant 0 : index
    %36 = vector.load %arg8[%c0_19, %c0_20] : memref<1024x7xbf16, #tpu.memory_space<vmem>>, vector<1024x7xbf16>
    %cst_21 = arith.constant dense<0.000000e+00> : vector<2x7xf32>
    %37 = tpu.matmul %35, %36, %cst_21 {dimension_numbers = #tpu.dot_dimension_numbers<[1], [0], [0], [1], [0, 0, 1, 1], [], []>} : vector<2x1024xbf16>, vector<1024x7xbf16>, vector<2x7xf32> -> vector<2x7xf32>
    %c0_22 = arith.constant 0 : index
    %c0_23 = arith.constant 0 : index
    %38 = vector.load %arg9[%c0_22, %c0_23] : memref<1x7xf32, #tpu.memory_space<vmem>>, vector<1x7xf32>
    %39 = vector.broadcast %38 : vector<1x7xf32> to vector<2x7xf32>
    %40 = arith.addf %37, %39 : vector<2x7xf32>
    %41 = vector.extract_strided_slice %40 {offsets = [0, 0], sizes = [2, 1], strides = [1, 1]} : vector<2x7xf32> to vector<2x1xf32>
    %42 = vector.extract_strided_slice %40 {offsets = [0, 1], sizes = [2, 6], strides = [1, 1]} : vector<2x7xf32> to vector<2x6xf32>
    %cst_24 = arith.constant dense<0.000000e+00> : vector<2xf32>
    %43 = vector.multi_reduction <add>, %42, %cst_24 [1] : vector<2x6xf32> to vector<2xf32>
    %44 = vector.shape_cast %43 : vector<2xf32> to vector<2x1xf32>
    %cst_25 = arith.constant 6.000000e+00 : f32
    %45 = vector.broadcast %cst_25 : f32 to vector<2x1xf32>
    %46 = arith.divf %44, %45 : vector<2x1xf32>
    %47 = vector.broadcast %46 : vector<2x1xf32> to vector<2x6xf32>
    %48 = arith.subf %42, %47 : vector<2x6xf32>
    %49 = vector.broadcast %41 : vector<2x1xf32> to vector<2x6xf32>
    %50 = arith.addf %49, %48 : vector<2x6xf32>
    %c0_26 = arith.constant 0 : index
    %c0_27 = arith.constant 0 : index
    %51 = vector.load %arg10[%c0_26, %c0_27] : memref<2x6xf32, #tpu.memory_space<vmem>>, vector<2x6xf32>
    tpu.vector_store %arg10[%c0_26, %c0_27], %50 {strides = array<i32>} : memref<2x6xf32, #tpu.memory_space<vmem>>, vector<2x6xf32>,
    return
  }
  func.func @transform_0(%arg0: i32) -> (i32, i32, i32) {
    %c0_i32 = arith.constant 0 : i32
    %c0_i32_0 = arith.constant 0 : i32
    %c0_i32_1 = arith.constant 0 : i32
    return %arg0, %c0_i32, %c0_i32_0 : i32, i32, i32
  }
  func.func @transform_1(%arg0: i32) -> (i32, i32) {
    %c0_i32 = arith.constant 0 : i32
    %c0_i32_0 = arith.constant 0 : i32
    %c0_i32_1 = arith.constant 0 : i32
    return %c0_i32, %c0_i32_0 : i32, i32
  }
  func.func @transform_2(%arg0: i32) -> (i32, i32) {
    %c0_i32 = arith.constant 0 : i32
    %c0_i32_0 = arith.constant 0 : i32
    %c0_i32_1 = arith.constant 0 : i32
    return %c0_i32, %c0_i32_0 : i32, i32
  }
  func.func @transform_3(%arg0: i32) -> (i32, i32) {
    %c0_i32 = arith.constant 0 : i32
    %c0_i32_0 = arith.constant 0 : i32
    %c0_i32_1 = arith.constant 0 : i32
    return %c0_i32, %c0_i32_0 : i32, i32
  }
  func.func @transform_4(%arg0: i32) -> (i32, i32) {
    %c0_i32 = arith.constant 0 : i32
    %c0_i32_0 = arith.constant 0 : i32
    %c0_i32_1 = arith.constant 0 : i32
    return %c0_i32, %c0_i32_0 : i32, i32
  }
  func.func @transform_5(%arg0: i32) -> (i32, i32) {
    %c0_i32 = arith.constant 0 : i32
    %c0_i32_0 = arith.constant 0 : i32
    %c0_i32_1 = arith.constant 0 : i32
    return %c0_i32, %c0_i32_0 : i32, i32
  }
  func.func @transform_6(%arg0: i32) -> (i32, i32) {
    %c0_i32 = arith.constant 0 : i32
    %c0_i32_0 = arith.constant 0 : i32
    %c0_i32_1 = arith.constant 0 : i32
    return %c0_i32, %c0_i32_0 : i32, i32
  }
  func.func @transform_7(%arg0: i32) -> (i32, i32) {
    %c0_i32 = arith.constant 0 : i32
    %c0_i32_0 = arith.constant 0 : i32
    %c0_i32_1 = arith.constant 0 : i32
    return %c0_i32, %c0_i32_0 : i32, i32
  }
  func.func @transform_8(%arg0: i32) -> (i32, i32) {
    %c0_i32 = arith.constant 0 : i32
    %c0_i32_0 = arith.constant 0 : i32
    %c0_i32_1 = arith.constant 0 : i32
    return %c0_i32, %c0_i32_0 : i32, i32
  }
  func.func @transform_9(%arg0: i32) -> (i32, i32) {
    %c0_i32 = arith.constant 0 : i32
    %c0_i32_0 = arith.constant 0 : i32
    return %arg0, %c0_i32 : i32, i32
  }
}

</mosaic_0001>

<llo_original>
// kernel: tpu_custom_call.1
$region0: #{tpu_custom_call.1}
  #allocation0 [shape = 'u32[]', space=smem, size = 0x4, offset = 0x4, fixed_abs, tag = 'smem constant byte address 0x4 - core index']
  #allocation1 [shape = 'u32[144,128]{1,0:T(1,128)}', space=vmem, size = 0x12000, scoped, tag = 'internal scratch']
  %s0 = inlined_call_operand.vmem [shape: f32[2,12,20], index: 0, kind: input, shape index: {}]
  %s1 = inlined_call_operand.hbm [shape: bf16[20,128], index: 1, kind: input, shape index: {}]
  %s2 = inlined_call_operand.hbm [shape: f32[1,128], index: 2, kind: input, shape index: {}]
  %s3 = inlined_call_operand.hbm [shape: bf16[640,128], index: 3, kind: input, shape index: {}]
  %s4 = inlined_call_operand.hbm [shape: f32[1,128], index: 4, kind: input, shape index: {}]
  %s5 = inlined_call_operand.hbm [shape: bf16[1024,1024], index: 5, kind: input, shape index: {}]
  %s6 = inlined_call_operand.hbm [shape: f32[1,1024], index: 6, kind: input, shape index: {}]
  %s7 = inlined_call_operand.vmem [shape: bf16[1024,7], index: 7, kind: input, shape index: {}]
  %s8 = inlined_call_operand.hbm [shape: f32[1,7], index: 8, kind: input, shape index: {}]
  %s9 = inlined_call_operand.hbm [shape: f32[2,6], index: 9, kind: output, shape index: {}]
  %s10 = sld [smem:[#allocation0]]
  $region74: #{tpu_custom_call.1} parent=0
    _
  %s12 = ssub.s32 1, %s10
  %s13 = scalar_select 0, %s12, %s10
  $region1: #{tpu_custom_call.1} parent=0
    #allocation2 [shape = 'u8[6144]{0}', space=vmem, size = 0x1800, scoped, tag = 'input window, operand 1, single buffered']
    #allocation3 [shape = 's32[1]{0}', space=sflag, size = 0x4, scoped, tag = 'scoped memory for tpu_custom_call.1']
    #allocation4 [shape = 's32[1]{0}', space=sflag, size = 0x4, scoped, tag = 'scoped memory for tpu_custom_call.1']
    #allocation5 [shape = 'u8[512]{0}', space=vmem, size = 0x400, scoped, tag = 'input window, operand 2, single buffered']
    #allocation6 [shape = 's32[1]{0}', space=sflag, size = 0x4, scoped, tag = 'scoped memory for tpu_custom_call.1']
    #allocation7 [shape = 'u8[163840]{0}', space=vmem, size = 0x28000, scoped, tag = 'input window, operand 3, single buffered']
    #allocation8 [shape = 'u8[512]{0}', space=vmem, size = 0x400, scoped, tag = 'input window, operand 4, single buffered']
    #allocation9 [shape = 's32[1]{0}', space=sflag, size = 0x4, scoped, tag = 'scoped memory for tpu_custom_call.1']
    #allocation10 [shape = 'u8[2097152]{0}', space=vmem, size = 0x200000, scoped, tag = 'input window, operand 5, single buffered']
    #allocation11 [shape = 'u8[4096]{0}', space=vmem, size = 0x1000, scoped, tag = 'input window, operand 6, single buffered']
    #allocation12 [shape = 's32[1]{0}', space=sflag, size = 0x4, scoped, tag = 'scoped memory for tpu_custom_call.1']
    #allocation13 [shape = 'u8[512]{0}', space=vmem, size = 0x400, scoped, tag = 'input window, operand 8, single buffered']
    #allocation14 [shape = 'u8[1024]{0}', space=vmem, size = 0x400, scoped, tag = 'output window, operand 0, single buffered']
    %14 = vsyncpa [#allocation3], 0
    %15 = vsyncpa [#allocation6], 0
    %16 = vsyncpa [#allocation9], 0
    %17 = vsyncpa [#allocation12], 0
    %18 = vsyncpa [#allocation4], 0
    // Predicated region
    $region2: #{tpu_custom_call.1} parent=1 // pred_check
      _
    $region3: #{tpu_custom_call.1} parent=1 // pred_check_branch
      %20 = sbr.rel (0) target = $region5
    $region4: #{tpu_custom_call.1} parent=1 // pred_region
      _
    $region5: #{tpu_custom_call.1} parent=1 // pred_fallthru
      _
    // Predicated region
    $region6: #{tpu_custom_call.1} parent=1 // pred_check
      _
    $region7: #{tpu_custom_call.1} parent=1 // pred_check_branch
      %22 = sbr.rel (0) target = $region9
    $region8: #{tpu_custom_call.1} parent=1 // pred_region
      %s24 = ssub.s32 192, 192
      %25 = vsyncadd [#allocation3], %s24
      %s26 = sshll.u32 [#allocation2], 4
      %s27 = int_to_ptr.vmem [resolvable:$true] %s26
      %32 = dma.hbm_to_vmem [thread:$0]  %s1, 192, %s27, [#allocation3], 64, 64, 4
    $region9: #{tpu_custom_call.1} parent=1 // pred_fallthru
      _
    // Predicated region
    $region10: #{tpu_custom_call.1} parent=1 // pred_check
      _
    $region11: #{tpu_custom_call.1} parent=1 // pred_check_branch
      %34 = sbr.rel (0) target = $region13
    $region12: #{tpu_custom_call.1} parent=1 // pred_region
      %s36 = ssub.s32 16, 16
      %37 = vsyncadd [#allocation6], %s36
      %s39 = sshll.u32 [#allocation5], 4
      %s40 = int_to_ptr.vmem [resolvable:$true] %s39
      %42 = dma.hbm_to_vmem [thread:$0]  %s2, 16, %s40, [#allocation6]
    $region13: #{tpu_custom_call.1} parent=1 // pred_fallthru
      _
    // Predicated region
    $region14: #{tpu_custom_call.1} parent=1 // pred_check
      _
    $region15: #{tpu_custom_call.1} parent=1 // pred_check_branch
      %44 = sbr.rel (0) target = $region17
    $region16: #{tpu_custom_call.1} parent=1 // pred_region
      %s46 = ssub.s32 5120, 5120
      %47 = vsyncadd [#allocation6], %s46
      %s48 = sshll.u32 [#allocation7], 4
      %s49 = int_to_ptr.vmem [resolvable:$true] %s48
      %54 = dma.hbm_to_vmem [thread:$0]  %s3, 5120, %s49, [#allocation6], 64, 64, 4
    $region17: #{tpu_custom_call.1} parent=1 // pred_fallthru
      _
    // Predicated region
    $region18: #{tpu_custom_call.1} parent=1 // pred_check
      _
    $region19: #{tpu_custom_call.1} parent=1 // pred_check_branch
      %56 = sbr.rel (0) target = $region21
    $region20: #{tpu_custom_call.1} parent=1 // pred_region
      %s58 = ssub.s32 16, 16
      %59 = vsyncadd [#allocation9], %s58
      %s61 = sshll.u32 [#allocation8], 4
      %s62 = int_to_ptr.vmem [resolvable:$true] %s61
      %64 = dma.hbm_to_vmem [thread:$0]  %s4, 16, %s62, [#allocation9]
    $region21: #{tpu_custom_call.1} parent=1 // pred_fallthru
      _
    // Predicated region
    $region22: #{tpu_custom_call.1} parent=1 // pred_check
      _
    $region23: #{tpu_custom_call.1} parent=1 // pred_check_branch
      %66 = sbr.rel (0) target = $region25
    $region24: #{tpu_custom_call.1} parent=1 // pred_region
      %s68 = ssub.s32 65536, 65536
      %69 = vsyncadd [#allocation9], %s68
      %s70 = sshll.u32 [#allocation10], 4
      %s71 = int_to_ptr.vmem [resolvable:$true] %s70
      %76 = dma.hbm_to_vmem [thread:$0]  %s5, 65536, %s71, [#allocation9], 512, 512, 32
    $region25: #{tpu_custom_call.1} parent=1 // pred_fallthru
      _
    // Predicated region
    $region26: #{tpu_custom_call.1} parent=1 // pred_check
      _
    $region27: #{tpu_custom_call.1} parent=1 // pred_check_branch
      %78 = sbr.rel (0) target = $region29
    $region28: #{tpu_custom_call.1} parent=1 // pred_region
      %s80 = ssub.s32 128, 128
      %81 = vsyncadd [#allocation12], %s80
      %s83 = sshll.u32 [#allocation11], 4
      %s84 = int_to_ptr.vmem [resolvable:$true] %s83
      %86 = dma.hbm_to_vmem [thread:$0]  %s6, 128, %s84, [#allocation12]
    $region29: #{tpu_custom_call.1} parent=1 // pred_fallthru
      _
    // Predicated region
    $region30: #{tpu_custom_call.1} parent=1 // pred_check
      _
    $region31: #{tpu_custom_call.1} parent=1 // pred_check_branch
      %88 = sbr.rel (0) target = $region33
    $region32: #{tpu_custom_call.1} parent=1 // pred_region
      _
    $region33: #{tpu_custom_call.1} parent=1 // pred_fallthru
      _
    // Predicated region
    $region34: #{tpu_custom_call.1} parent=1 // pred_check
      _
    $region35: #{tpu_custom_call.1} parent=1 // pred_check_branch
      %90 = sbr.rel (0) target = $region37
    $region36: #{tpu_custom_call.1} parent=1 // pred_region
      %s92 = ssub.s32 16, 16
      %93 = vsyncadd [#allocation12], %s92
      %s95 = sshll.u32 [#allocation13], 4
      %s96 = int_to_ptr.vmem [resolvable:$true] %s95
      %98 = dma.hbm_to_vmem [thread:$0]  %s8, 16, %s96, [#allocation12]
    $region37: #{tpu_custom_call.1} parent=1 // pred_fallthru
      _
    // Predicated region
    $region38: #{tpu_custom_call.1} parent=1 // pred_check
      _
    $region39: #{tpu_custom_call.1} parent=1 // pred_check_branch
      %100 = sbr.rel (0) target = $region41
    $region40: #{tpu_custom_call.1} parent=1 // pred_region
      %101 = dma.done [#allocation3], 192
    $region41: #{tpu_custom_call.1} parent=1 // pred_fallthru
      _
    // Predicated region
    $region42: #{tpu_custom_call.1} parent=1 // pred_check
      _
    $region43: #{tpu_custom_call.1} parent=1 // pred_check_branch
      %103 = sbr.rel (0) target = $region45
    $region44: #{tpu_custom_call.1} parent=1 // pred_region
      %104 = dma.done [#allocation6], 16
    $region45: #{tpu_custom_call.1} parent=1 // pred_fallthru
      _
    // Predicated region
    $region46: #{tpu_custom_call.1} parent=1 // pred_check
      _
    $region47: #{tpu_custom_call.1} parent=1 // pred_check_branch
      %106 = sbr.rel (0) target = $region49
    $region48: #{tpu_custom_call.1} parent=1 // pred_region
      %107 = dma.done [#allocation6], 5120
    $region49: #{tpu_custom_call.1} parent=1 // pred_fallthru
      _
    // Predicated region
    $region50: #{tpu_custom_call.1} parent=1 // pred_check
      _
    $region51: #{tpu_custom_call.1} parent=1 // pred_check_branch
      %109 = sbr.rel (0) target = $region53
    $region52: #{tpu_custom_call.1} parent=1 // pred_region
      %110 = dma.done [#allocation9], 16
    $region53: #{tpu_custom_call.1} parent=1 // pred_fallthru
      _
    // Predicated region
    $region54: #{tpu_custom_call.1} parent=1 // pred_check
      _
    $region55: #{tpu_custom_call.1} parent=1 // pred_check_branch
      %112 = sbr.rel (0) target = $region57
    $region56: #{tpu_custom_call.1} parent=1 // pred_region
      %113 = dma.done [#allocation9], 65536
    $region57: #{tpu_custom_call.1} parent=1 // pred_fallthru
      _
    // Predicated region
    $region58: #{tpu_custom_call.1} parent=1 // pred_check
      _
    $region59: #{tpu_custom_call.1} parent=1 // pred_check_branch
      %115 = sbr.rel (0) target = $region61
    $region60: #{tpu_custom_call.1} parent=1 // pred_region
      %116 = dma.done [#allocation12], 128
    $region61: #{tpu_custom_call.1} parent=1 // pred_fallthru
      _
    // Predicated region
    $region62: #{tpu_custom_call.1} parent=1 // pred_check
      _
    $region63: #{tpu_custom_call.1} parent=1 // pred_check_branch
      %118 = sbr.rel (0) target = $region65
    $region64: #{tpu_custom_call.1} parent=1 // pred_region
      %119 = dma.done [#allocation12], 16
    $region65: #{tpu_custom_call.1} parent=1 // pred_fallthru
      _
    %v121 = vld [vmem:[%s0] sm:$0xff]
    %v122 = vld [vmem:[%s0 + $0x8] sm:$0xf]
    %v123 = vld [vmem:[%s0 + $0x10] sm:$0xff]
    %v124 = vld [vmem:[%s0 + $0x18] sm:$0xf]
    %v129 = vcombine.high %v121, %v121
    %v130 = vcombine.high %v123, %v123
    %v131 = vcombine.low %v121, %v129
    %v132 = vcombine.low %v122, %v123
    %v133 = vcombine.low %v130, %v124
    %v137 = vpack.c.bf16 %v132, %v131
    %v138 = vpack.c.bf16 %v133, %v133
    %v139 = vld [vmem:[#allocation2] sm:$0xf]
    %v140 = vld [vmem:[#allocation2 + $0x4] sm:$0xf]
    %v141 = vld [vmem:[#allocation2 + $0x8] sm:$0x3]
    %v142 = vld [vmem:[#allocation5] sm:$0x1]
    %v144 = vlaneseq
    %v145 = vshrl.u32 %v144, 7
    %v146 = vsub.s32 0, %v145
    %v147 = vrot.slane %v142, %v146
    %v152 = vunpack.c.l.b16 %v139
    %v153 = vunpack.c.l.b16 %v140
    %v154 = vunpack.c.l.b16 %v141
    %v155 = vpack.c.b16 %v153, %v152
    %v156 = vpack.c.b16 %v154, %v154
    %vm158 = vcmask 162816
    %v160 = vsel %vm158, %v137, 0
    %v163 = vsel %vm158, %v138, 0
    %vm165 = vcmask 1041408
    %v167 = vsel %vm165, %v156, 0
    %169 = vmatprep.subr.bf16.mxu0 0
    %170 = vmatpush1.bf16.msra.mxu0 %v155
    %171 = vmatprep.subr.bf16.mxu0 0
    %172 = vmatpush1.bf16.msra.mxu0 %v167
    %173 = vmatprep.subr.bf16.mxu0 0
    %174 = vmatpush1.bf16.msra.mxu0 0
    %175 = vmatprep.subr.bf16.mxu0 0
    %176 = vmatpush1.bf16.msra.mxu0 0
    %177 = vmatprep.subr.bf16.mxu0 0
    %178 = vmatpush1.bf16.msra.mxu0 0
    %179 = vmatprep.subr.bf16.mxu0 0
    %180 = vmatpush1.bf16.msra.mxu0 0
    %181 = vmatprep.subr.bf16.mxu0 0
    %182 = vmatpush1.bf16.msra.mxu0 0
    %183 = vmatprep.subr.bf16.mxu0 0
    %184 = vmatpush1.bf16.msra.mxu0 0
    %185 = vmatprep.subr.bf16.mxu0 0
    %186 = vmatpush1.bf16.msra.mxu0 0
    %187 = vmatprep.subr.bf16.mxu0 0
    %188 = vmatpush1.bf16.msra.mxu0 0
    %189 = vmatprep.subr.bf16.mxu0 0
    %190 = vmatpush1.bf16.msra.mxu0 0
    %191 = vmatprep.subr.bf16.mxu0 0
    %192 = vmatpush1.bf16.msra.mxu0 0
    %193 = vmatprep.subr.bf16.mxu0 0
    %194 = vmatpush1.bf16.msra.mxu0 0
    %195 = vmatprep.subr.bf16.mxu0 0
    %196 = vmatpush1.bf16.msra.mxu0 0
    %197 = vmatprep.subr.bf16.mxu0 0
    %198 = vmatpush1.bf16.msra.mxu0 0
    %199 = vmatprep.subr.bf16.mxu0 0
    %200 = vmatpush1.bf16.msra.mxu0 0
    %201 = vmatprep.mubr.bf16.mxu0 0
    %202 = vmatmul.mubr.bf16.gmra.mrb[0].mxu0 %v160
    %v203 = vpop.f32.mrb[0].mxu0
    %v204 = vadd.f32 %v147, %v203
    %v205 = vpop.f32.mrb[0].mxu0
    %v206 = vpop.f32.mrb[0].mxu0
    %v207 = vadd.f32 %v147, %v206
    %v208 = vpop.f32.mrb[0].mxu0
    %209 = vmatprep.mubr.bf16.mxu0 0
    %210 = vmatmul.mubr.bf16.gmra.mrb[0].mxu0 %v163
    %v211 = vpop.f32.mrb[0].mxu0
    %v212 = vadd.f32 %v147, %v211
    %v213 = vpop.f32.mrb[0].mxu0
    %v214 = vpop.f32.mrb[0].mxu0
    %v215 = vpop.f32.mrb[0].mxu0
    %216 = vdwg.mxu0
    %v217 = vmax.f32 %v204, 0.0
    %v218 = vmax.f32 %v207, 0.0
    %v219 = vmax.f32 %v212, 0.0
    %v223 = vcombine.high %v217, %v217
    %v224 = vcombine.high %v218, %v218
    %v225 = vcombine.high %v219, %v219
    %v226 = vcombine.low %v217, %v223
    %v227 = vcombine.low %v224, %v219
    %vm230 = vcmask 1046528
    %v231 = vrot.slane %v226, 1
    %v232 = vrot.slane %v218, 1
    %v233 = vsel %vm230, %v231, %v232
    %v234 = vrot.slane %v227, 1
    %v235 = vrot.slane %v225, 1
    %v236 = vsel %vm230, %v234, %v235
    %vm239 = vcmask 1045504
    %v240 = vrot.slane %v226, 2
    %v241 = vrot.slane %v218, 2
    %v242 = vsel %vm239, %v240, %v241
    %v243 = vrot.slane %v227, 2
    %v244 = vrot.slane %v225, 2
    %v245 = vsel %vm239, %v243, %v244
    %vm248 = vcmask 1044480
    %v249 = vrot.slane %v226, 3
    %v250 = vrot.slane %v218, 3
    %v251 = vsel %vm248, %v249, %v250
    %v252 = vrot.slane %v227, 3
    %v253 = vrot.slane %v225, 3
    %v254 = vsel %vm248, %v252, %v253
    %v257 = vcombine.low %v223, %v218
    %v258 = vcombine.low %v219, %v225
    %v261 = vpack.c.bf16 %v227, %v226
    %v262 = vpack.c.bf16 %v236, %v233
    %v263 = vpack.c.bf16 %v245, %v242
    %v264 = vpack.c.bf16 %v254, %v251
    %v265 = vpack.c.bf16 %v258, %v257
    %v266 = vld [vmem:[#allocation7] sm:$0xf]
    %v267 = vld [vmem:[#allocation7 + $0x4] sm:$0xf]
    %v268 = vld [vmem:[#allocation7 + $0x8] sm:$0xf]
    %v269 = vld [vmem:[#allocation7 + $0xc] sm:$0xf]
    %v270 = vld [vmem:[#allocation7 + $0x10] sm:$0xf]
    %v271 = vld [vmem:[#allocation7 + $0x14] sm:$0xf]
    %v272 = vld [vmem:[#allocation7 + $0x18] sm:$0xf]
    %v273 = vld [vmem:[#allocation7 + $0x1c] sm:$0xf]
    %v274 = vld [vmem:[#allocation7 + $0x20] sm:$0xf]
    %v275 = vld [vmem:[#allocation7 + $0x24] sm:$0xf]
    %v276 = vld [vmem:[#allocation7 + $0x28] sm:$0xf]
    %v277 = vld [vmem:[#allocation7 + $0x2c] sm:$0xf]
    %v278 = vld [vmem:[#allocation7 + $0x30] sm:$0xf]
    %v279 = vld [vmem:[#allocation7 + $0x34] sm:$0xf]
    %v280 = vld [vmem:[#allocation7 + $0x38] sm:$0xf]
    %v281 = vld [vmem:[#allocation7 + $0x3c] sm:$0xf]
    %v282 = vld [vmem:[#allocation7 + $0x40] sm:$0xf]
    %v283 = vld [vmem:[#allocation7 + $0x44] sm:$0xf]
    %v284 = vld [vmem:[#allocation7 + $0x48] sm:$0xf]
    %v285 = vld [vmem:[#allocation7 + $0x4c] sm:$0xf]
    %v286 = vld [vmem:[#allocation7 + $0x50] sm:$0xf]
    %v287 = vld [vmem:[#allocation7 + $0x54] sm:$0xf]
    %v288 = vld [vmem:[#allocation7 + $0x58] sm:$0xf]
    %v289 = vld [vmem:[#allocation7 + $0x5c] sm:$0xf]
    %v290 = vld [vmem:[#allocation7 + $0x60] sm:$0xf]
    %v291 = vld [vmem:[#allocation7 + $0x64] sm:$0xf]
    %v292 = vld [vmem:[#allocation7 + $0x68] sm:$0xf]
    %v293 = vld [vmem:[#allocation7 + $0x6c] sm:$0xf]
    %v294 = vld [vmem:[#allocation7 + $0x70] sm:$0xf]
    %v295 = vld [vmem:[#allocation7 + $0x74] sm:$0xf]
    %v296 = vld [vmem:[#allocation7 + $0x78] sm:$0xf]
    %v297 = vld [vmem:[#allocation7 + $0x7c] sm:$0xf]
    %v298 = vld [vmem:[#allocation7 + $0x80] sm:$0xf]
    %v299 = vld [vmem:[#allocation7 + $0x84] sm:$0xf]
    %v300 = vld [vmem:[#allocation7 + $0x88] sm:$0xf]
    %v301 = vld [vmem:[#allocation7 + $0x8c] sm:$0xf]
    %v302 = vld [vmem:[#allocation7 + $0x90] sm:$0xf]
    %v303 = vld [vmem:[#allocation7 + $0x94] sm:$0xf]
    %v304 = vld [vmem:[#allocation7 + $0x98] sm:$0xf]
    %v305 = vld [vmem:[#allocation7 + $0x9c] sm:$0xf]
    %v306 = vld [vmem:[#allocation7 + $0xa0] sm:$0xf]
    %v307 = vld [vmem:[#allocation7 + $0xa4] sm:$0xf]
    %v308 = vld [vmem:[#allocation7 + $0xa8] sm:$0xf]
    %v309 = vld [vmem:[#allocation7 + $0xac] sm:$0xf]
    %v310 = vld [vmem:[#allocation7 + $0xb0] sm:$0xf]
    %v311 = vld [vmem:[#allocation7 + $0xb4] sm:$0xf]
    %v312 = vld [vmem:[#allocation7 + $0xb8] sm:$0xf]
    %v313 = vld [vmem:[#allocation7 + $0xbc] sm:$0xf]
    %v314 = vld [vmem:[#allocation7 + $0xc0] sm:$0xf]
    %v315 = vld [vmem:[#allocation7 + $0xc4] sm:$0xf]
    %v316 = vld [vmem:[#allocation7 + $0xc8] sm:$0xf]
    %v317 = vld [vmem:[#allocation7 + $0xcc] sm:$0xf]
    %v318 = vld [vmem:[#allocation7 + $0xd0] sm:$0xf]
    %v319 = vld [vmem:[#allocation7 + $0xd4] sm:$0xf]
    %v320 = vld [vmem:[#allocation7 + $0xd8] sm:$0xf]
    %v321 = vld [vmem:[#allocation7 + $0xdc] sm:$0xf]
    %v322 = vld [vmem:[#allocation7 + $0xe0] sm:$0xf]
    %v323 = vld [vmem:[#allocation7 + $0xe4] sm:$0xf]
    %v324 = vld [vmem:[#allocation7 + $0xe8] sm:$0xf]
    %v325 = vld [vmem:[#allocation7 + $0xec] sm:$0xf]
    %v326 = vld [vmem:[#allocation7 + $0xf0] sm:$0xf]
    %v327 = vld [vmem:[#allocation7 + $0xf4] sm:$0xf]
    %v328 = vld [vmem:[#allocation7 + $0xf8] sm:$0xf]
    %v329 = vld [vmem:[#allocation7 + $0xfc] sm:$0xf]
    %v330 = vld [vmem:[#allocation7 + $0x100] sm:$0xf]
    %v331 = vld [vmem:[#allocation7 + $0x104] sm:$0xf]
    %v332 = vld [vmem:[#allocation7 + $0x108] sm:$0xf]
    %v333 = vld [vmem:[#allocation7 + $0x10c] sm:$0xf]
    %v334 = vld [vmem:[#allocation7 + $0x110] sm:$0xf]
    %v335 = vld [vmem:[#allocation7 + $0x114] sm:$0xf]
    %v336 = vld [vmem:[#allocation7 + $0x118] sm:$0xf]
    %v337 = vld [vmem:[#allocation7 + $0x11c] sm:$0xf]
    %v338 = vld [vmem:[#allocation7 + $0x120] sm:$0xf]
    %v339 = vld [vmem:[#allocation7 + $0x124] sm:$0xf]
    %v340 = vld [vmem:[#allocation7 + $0x128] sm:$0xf]
    %v341 = vld [vmem:[#allocation7 + $0x12c] sm:$0xf]
    %v342 = vld [vmem:[#allocation7 + $0x130] sm:$0xf]
    %v343 = vld [vmem:[#allocation7 + $0x134] sm:$0xf]
    %v344 = vld [vmem:[#allocation7 + $0x138] sm:$0xf]
    %v345 = vld [vmem:[#allocation7 + $0x13c] sm:$0xf]
    %v346 = vld [vmem:[#allocation8] sm:$0x1]
    %v348 = vlaneseq
    %v349 = vshrl.u32 %v348, 7
    %v350 = vsub.s32 0, %v349
    %v351 = vrot.slane %v346, %v350
    %v433 = vunpack.c.l.b16 %v266
    %v434 = vunpack.c.l.b16 %v267
    %v435 = vunpack.c.l.b16 %v268
    %v436 = vunpack.c.l.b16 %v269
    %v437 = vunpack.c.l.b16 %v270
    %v438 = vunpack.c.l.b16 %v271
    %v439 = vunpack.c.l.b16 %v272
    %v440 = vunpack.c.l.b16 %v273
    %v441 = vunpack.c.l.b16 %v274
    %v442 = vunpack.c.l.b16 %v275
    %v443 = vunpack.c.l.b16 %v276
    %v444 = vunpack.c.l.b16 %v277
    %v445 = vunpack.c.l.b16 %v278
    %v446 = vunpack.c.l.b16 %v279
    %v447 = vunpack.c.l.b16 %v280
    %v448 = vunpack.c.l.b16 %v281
    %v449 = vunpack.c.l.b16 %v282
    %v450 = vunpack.c.l.b16 %v283
    %v451 = vunpack.c.l.b16 %v284
    %v452 = vunpack.c.l.b16 %v285
    %v453 = vunpack.c.l.b16 %v286
    %v454 = vunpack.c.l.b16 %v287
    %v455 = vunpack.c.l.b16 %v288
    %v456 = vunpack.c.l.b16 %v289
    %v457 = vunpack.c.l.b16 %v290
    %v458 = vunpack.c.l.b16 %v291
    %v459 = vunpack.c.l.b16 %v292
    %v460 = vunpack.c.l.b16 %v293
    %v461 = vunpack.c.l.b16 %v294
    %v462 = vunpack.c.l.b16 %v295
    %v463 = vunpack.c.l.b16 %v296
    %v464 = vunpack.c.l.b16 %v297
    %v465 = vunpack.c.l.b16 %v298
    %v466 = vunpack.c.l.b16 %v299
    %v467 = vunpack.c.l.b16 %v300
    %v468 = vunpack.c.l.b16 %v301
    %v469 = vunpack.c.l.b16 %v302
    %v470 = vunpack.c.l.b16 %v303
    %v471 = vunpack.c.l.b16 %v304
    %v472 = vunpack.c.l.b16 %v305
    %v473 = vunpack.c.l.b16 %v306
    %v474 = vunpack.c.l.b16 %v307
    %v475 = vunpack.c.l.b16 %v308
    %v476 = vunpack.c.l.b16 %v309
    %v477 = vunpack.c.l.b16 %v310
    %v478 = vunpack.c.l.b16 %v311
    %v479 = vunpack.c.l.b16 %v312
    %v480 = vunpack.c.l.b16 %v313
    %v481 = vunpack.c.l.b16 %v314
    %v482 = vunpack.c.l.b16 %v315
    %v483 = vunpack.c.l.b16 %v316
    %v484 = vunpack.c.l.b16 %v317
    %v485 = vunpack.c.l.b16 %v318
    %v486 = vunpack.c.l.b16 %v319
    %v487 = vunpack.c.l.b16 %v320
    %v488 = vunpack.c.l.b16 %v321
    %v489 = vunpack.c.l.b16 %v322
    %v490 = vunpack.c.l.b16 %v323
    %v491 = vunpack.c.l.b16 %v324
    %v492 = vunpack.c.l.b16 %v325
    %v493 = vunpack.c.l.b16 %v326
    %v494 = vunpack.c.l.b16 %v327
    %v495 = vunpack.c.l.b16 %v328
    %v496 = vunpack.c.l.b16 %v329
    %v497 = vunpack.c.l.b16 %v330
    %v498 = vunpack.c.l.b16 %v331
    %v499 = vunpack.c.l.b16 %v332
    %v500 = vunpack.c.l.b16 %v333
    %v501 = vunpack.c.l.b16 %v334
    %v502 = vunpack.c.l.b16 %v335
    %v503 = vunpack.c.l.b16 %v336
    %v504 = vunpack.c.l.b16 %v337
    %v505 = vunpack.c.l.b16 %v338
    %v506 = vunpack.c.l.b16 %v339
    %v507 = vunpack.c.l.b16 %v340
    %v508 = vunpack.c.l.b16 %v341
    %v509 = vunpack.c.l.b16 %v342
    %v510 = vunpack.c.l.b16 %v343
    %v511 = vunpack.c.l.b16 %v344
    %v512 = vunpack.c.l.b16 %v345
    %v513 = vpack.c.b16 %v434, %v433
    %v514 = vpack.c.b16 %v436, %v435
    %v515 = vpack.c.b16 %v438, %v437
    %v516 = vpack.c.b16 %v440, %v439
    %v517 = vpack.c.b16 %v442, %v441
    %v518 = vpack.c.b16 %v444, %v443
    %v519 = vpack.c.b16 %v446, %v445
    %v520 = vpack.c.b16 %v448, %v447
    %v521 = vpack.c.b16 %v450, %v449
    %v522 = vpack.c.b16 %v452, %v451
    %v523 = vpack.c.b16 %v454, %v453
    %v524 = vpack.c.b16 %v456, %v455
    %v525 = vpack.c.b16 %v458, %v457
    %v526 = vpack.c.b16 %v460, %v459
    %v527 = vpack.c.b16 %v462, %v461
    %v528 = vpack.c.b16 %v464, %v463
    %v529 = vpack.c.b16 %v466, %v465
    %v530 = vpack.c.b16 %v468, %v467
    %v531 = vpack.c.b16 %v470, %v469
    %v532 = vpack.c.b16 %v472, %v471
    %v533 = vpack.c.b16 %v474, %v473
    %v534 = vpack.c.b16 %v476, %v475
    %v535 = vpack.c.b16 %v478, %v477
    %v536 = vpack.c.b16 %v480, %v479
    %v537 = vpack.c.b16 %v482, %v481
    %v538 = vpack.c.b16 %v484, %v483
    %v539 = vpack.c.b16 %v486, %v485
    %v540 = vpack.c.b16 %v488, %v487
    %v541 = vpack.c.b16 %v490, %v489
    %v542 = vpack.c.b16 %v492, %v491
    %v543 = vpack.c.b16 %v494, %v493
    %v544 = vpack.c.b16 %v496, %v495
    %v545 = vpack.c.b16 %v498, %v497
    %v546 = vpack.c.b16 %v500, %v499
    %v547 = vpack.c.b16 %v502, %v501
    %v548 = vpack.c.b16 %v504, %v503
    %v549 = vpack.c.b16 %v506, %v505
    %v550 = vpack.c.b16 %v508, %v507
    %v551 = vpack.c.b16 %v510, %v509
    %v552 = vpack.c.b16 %v512, %v511
    %593 = vmatprep.subr.bf16.mxu0 0
    %594 = vmatpush1.bf16.msra.mxu0 %v513
    %595 = vmatprep.subr.bf16.mxu0 0
    %596 = vmatpush1.bf16.msra.mxu0 %v514
    %597 = vmatprep.subr.bf16.mxu0 0
    %598 = vmatpush1.bf16.msra.mxu0 %v515
    %599 = vmatprep.subr.bf16.mxu0 0
    %600 = vmatpush1.bf16.msra.mxu0 %v516
    %601 = vmatprep.subr.bf16.mxu0 0
    %602 = vmatpush1.bf16.msra.mxu0 %v517
    %603 = vmatprep.subr.bf16.mxu0 0
    %604 = vmatpush1.bf16.msra.mxu0 %v518
    %605 = vmatprep.subr.bf16.mxu0 0
    %606 = vmatpush1.bf16.msra.mxu0 %v519
    %607 = vmatprep.subr.bf16.mxu0 0
    %608 = vmatpush1.bf16.msra.mxu0 %v520
    %609 = vmatprep.subr.bf16.mxu0 0
    %610 = vmatpush1.bf16.msra.mxu0 %v521
    %611 = vmatprep.subr.bf16.mxu0 0
    %612 = vmatpush1.bf16.msra.mxu0 %v522
    %613 = vmatprep.subr.bf16.mxu0 0
    %614 = vmatpush1.bf16.msra.mxu0 %v523
    %615 = vmatprep.subr.bf16.mxu0 0
    %616 = vmatpush1.bf16.msra.mxu0 %v524
    %617 = vmatprep.subr.bf16.mxu0 0
    %618 = vmatpush1.bf16.msra.mxu0 %v525
    %619 = vmatprep.subr.bf16.mxu0 0
    %620 = vmatpush1.bf16.msra.mxu0 %v526
    %621 = vmatprep.subr.bf16.mxu0 0
    %622 = vmatpush1.bf16.msra.mxu0 %v527
    %623 = vmatprep.subr.bf16.mxu0 0
    %624 = vmatpush1.bf16.msra.mxu0 %v528
    %625 = vmatprep.mubr.bf16.mxu0 %v262
    %626 = vmatmul.mubr.bf16.gmra.mrb[0].mxu0 %v261
    %v627 = vpop.f32.mrb[0].mxu0
    %v628 = vadd.f32 %v351, %v627
    %v629 = vpop.f32.mrb[0].mxu0
    %v630 = vpop.f32.mrb[0].mxu0
    %v631 = vadd.f32 %v351, %v630
    %v632 = vpop.f32.mrb[0].mxu0
    %633 = vdwg.mxu0
    %634 = vmatprep.subr.bf16.mxu0 0
    %635 = vmatpush1.bf16.msra.mxu0 %v529
    %636 = vmatprep.subr.bf16.mxu0 0
    %637 = vmatpush1.bf16.msra.mxu0 %v530
    %638 = vmatprep.subr.bf16.mxu0 0
    %639 = vmatpush1.bf16.msra.mxu0 %v531
    %640 = vmatprep.subr.bf16.mxu0 0
    %641 = vmatpush1.bf16.msra.mxu0 %v532
    %642 = vmatprep.subr.bf16.mxu0 0
    %643 = vmatpush1.bf16.msra.mxu0 %v533
    %644 = vmatprep.subr.bf16.mxu0 0
    %645 = vmatpush1.bf16.msra.mxu0 %v534
    %646 = vmatprep.subr.bf16.mxu0 0
    %647 = vmatpush1.bf16.msra.mxu0 %v535
    %648 = vmatprep.subr.bf16.mxu0 0
    %649 = vmatpush1.bf16.msra.mxu0 %v536
    %650 = vmatprep.subr.bf16.mxu0 0
    %651 = vmatpush1.bf16.msra.mxu0 %v537
    %652 = vmatprep.subr.bf16.mxu0 0
    %653 = vmatpush1.bf16.msra.mxu0 %v538
    %654 = vmatprep.subr.bf16.mxu0 0
    %655 = vmatpush1.bf16.msra.mxu0 %v539
    %656 = vmatprep.subr.bf16.mxu0 0
    %657 = vmatpush1.bf16.msra.mxu0 %v540
    %658 = vmatprep.subr.bf16.mxu0 0
    %659 = vmatpush1.bf16.msra.mxu0 %v541
    %660 = vmatprep.subr.bf16.mxu0 0
    %661 = vmatpush1.bf16.msra.mxu0 %v542
    %662 = vmatprep.subr.bf16.mxu0 0
    %663 = vmatpush1.bf16.msra.mxu0 %v543
    %664 = vmatprep.subr.bf16.mxu0 0
    %665 = vmatpush1.bf16.msra.mxu0 %v544
    %666 = vmatprep.mubr.bf16.mxu0 %v264
    %667 = vmatmul.mubr.bf16.gmra.mrb[0].mxu0 %v263
    %v668 = vpop.f32.mrb[0].mxu0
    %v669 = vadd.f32 %v628, %v668
    %v670 = vpop.f32.mrb[0].mxu0
    %v671 = vpop.f32.mrb[0].mxu0
    %v672 = vadd.f32 %v631, %v671
    %v673 = vpop.f32.mrb[0].mxu0
    %674 = vdwg.mxu0
    %675 = vmatprep.subr.bf16.mxu0 0
    %676 = vmatpush1.bf16.msra.mxu0 %v545
    %677 = vmatprep.subr.bf16.mxu0 0
    %678 = vmatpush1.bf16.msra.mxu0 %v546
    %679 = vmatprep.subr.bf16.mxu0 0
    %680 = vmatpush1.bf16.msra.mxu0 %v547
    %681 = vmatprep.subr.bf16.mxu0 0
    %682 = vmatpush1.bf16.msra.mxu0 %v548
    %683 = vmatprep.subr.bf16.mxu0 0
    %684 = vmatpush1.bf16.msra.mxu0 %v549
    %685 = vmatprep.subr.bf16.mxu0 0
    %686 = vmatpush1.bf16.msra.mxu0 %v550
    %687 = vmatprep.subr.bf16.mxu0 0
    %688 = vmatpush1.bf16.msra.mxu0 %v551
    %689 = vmatprep.subr.bf16.mxu0 0
    %690 = vmatpush1.bf16.msra.mxu0 %v552
    %691 = vmatprep.subr.bf16.mxu0 0
    %692 = vmatpush1.bf16.msra.mxu0 0
    %693 = vmatprep.subr.bf16.mxu0 0
    %694 = vmatpush1.bf16.msra.mxu0 0
    %695 = vmatprep.subr.bf16.mxu0 0
    %696 = vmatpush1.bf16.msra.mxu0 0
    %697 = vmatprep.subr.bf16.mxu0 0
    %698 = vmatpush1.bf16.msra.mxu0 0
    %699 = vmatprep.subr.bf16.mxu0 0
    %700 = vmatpush1.bf16.msra.mxu0 0
    %701 = vmatprep.subr.bf16.mxu0 0
    %702 = vmatpush1.bf16.msra.mxu0 0
    %703 = vmatprep.subr.bf16.mxu0 0
    %704 = vmatpush1.bf16.msra.mxu0 0
    %705 = vmatprep.subr.bf16.mxu0 0
    %706 = vmatpush1.bf16.msra.mxu0 0
    %707 = vmatprep.mubr.bf16.mxu0 0
    %708 = vmatmul.mubr.bf16.gmra.mrb[0].mxu0 %v265
    %v709 = vpop.f32.mrb[0].mxu0
    %v710 = vadd.f32 %v669, %v709
    %v711 = vpop.f32.mrb[0].mxu0
    %v712 = vpop.f32.mrb[0].mxu0
    %v713 = vadd.f32 %v672, %v712
    %v714 = vpop.f32.mrb[0].mxu0
    %715 = vdwg.mxu0
    %v716 = vmax.f32 %v710, 0.0
    %v717 = vmax.f32 %v713, 0.0
    %v720 = vcombine.low %v716, %v717
    %v721 = vcombine.high %v716, %v717
    %v723 = vunpack.c.l.s4 1966171168
    %v724 = vunpack.c.0.s8 %v723
    %v725 = vlaneseq
    %v726 = vshrl.u32 %v725, 7
    %v727 = vsub.s32 %v724, %v726
    %v728 = vrot.slane %v720, %v727
    %v730 = vunpack.c.l.s4 1966171168
    %v731 = vunpack.c.0.s8 %v730
    %v732 = vlaneseq
    %v733 = vshrl.u32 %v732, 7
    %v734 = vsub.s32 %v731, %v733
    %v735 = vrot.slane %v721, %v734
    %v736 = vcombine.high %v728, %v728
    %v737 = vcombine.high %v735, %v735
    %v739 = vunpack.c.l.s4 1966171168
    %v740 = vunpack.c.0.s8 %v739
    %v741 = vlaneseq
    %v742 = vshrl.u32 %v741, 7
    %v743 = vsub.s32 %v740, %v742
    %v744 = vrot.slane %v728, %v743
    %v746 = vunpack.c.l.s4 1966171168
    %v747 = vunpack.c.0.s8 %v746
    %v748 = vlaneseq
    %v749 = vshrl.u32 %v748, 7
    %v750 = vsub.s32 %v747, %v749
    %v751 = vrot.slane %v735, %v750
    %v753 = vunpack.c.l.s4 1966171168
    %v754 = vunpack.c.0.s8 %v753
    %v755 = vlaneseq
    %v756 = vshrl.u32 %v755, 7
    %v757 = vsub.s32 %v754, %v756
    %v758 = vrot.slane %v736, %v757
    %v760 = vunpack.c.l.s4 1966171168
    %v761 = vunpack.c.0.s8 %v760
    %v762 = vlaneseq
    %v763 = vshrl.u32 %v762, 7
    %v764 = vsub.s32 %v761, %v763
    %v765 = vrot.slane %v737, %v764
    %v766 = vcombine.high %v744, %v744
    %v767 = vcombine.high %v751, %v751
    %v768 = vcombine.high %v758, %v758
    %v769 = vcombine.high %v765, %v765
    %v778 = vpack.c.bf16 %v744, %v744
    %v779 = vpack.c.bf16 %v758, %v758
    %v780 = vpack.c.bf16 %v766, %v766
    %v781 = vpack.c.bf16 %v768, %v768
    %v782 = vpack.c.bf16 %v751, %v751
    %v783 = vpack.c.bf16 %v765, %v765
    %v784 = vpack.c.bf16 %v767, %v767
    %v785 = vpack.c.bf16 %v769, %v769
    %v786 = vld [vmem:[#allocation10] sm:$0xff]
    %v787 = vld [vmem:[#allocation10 + $0x8] sm:$0xff]
    %v788 = vld [vmem:[#allocation10 + $0x10] sm:$0xff]
    %v789 = vld [vmem:[#allocation10 + $0x18] sm:$0xff]
    %v790 = vld [vmem:[#allocation10 + $0x20] sm:$0xff]
    %v791 = vld [vmem:[#allocation10 + $0x28] sm:$0xff]
    %v792 = vld [vmem:[#allocation10 + $0x30] sm:$0xff]
    %v793 = vld [vmem:[#allocation10 + $0x38] sm:$0xff]
    %v794 = vld [vmem:[#allocation10 + $0x40] sm:$0xff]
    %v795 = vld [vmem:[#allocation10 + $0x48] sm:$0xff]
    %v796 = vld [vmem:[#allocation10 + $0x50] sm:$0xff]
    %v797 = vld [vmem:[#allocation10 + $0x58] sm:$0xff]
    %v798 = vld [vmem:[#allocation10 + $0x60] sm:$0xff]
    %v799 = vld [vmem:[#allocation10 + $0x68] sm:$0xff]
    %v800 = vld [vmem:[#allocation10 + $0x70] sm:$0xff]
    %v801 = vld [vmem:[#allocation10 + $0x78] sm:$0xff]
    %v802 = vld [vmem:[#allocation10 + $0x80] sm:$0xff]
    %v803 = vld [vmem:[#allocation10 + $0x88] sm:$0xff]
    %v804 = vld [vmem:[#allocation10 + $0x90] sm:$0xff]
    %v805 = vld [vmem:[#allocation10 + $0x98] sm:$0xff]
    %v806 = vld [vmem:[#allocation10 + $0xa0] sm:$0xff]
    %v807 = vld [vmem:[#allocation10 + $0xa8] sm:$0xff]
    %v808 = vld [vmem:[#allocation10 + $0xb0] sm:$0xff]
    %v809 = vld [vmem:[#allocation10 + $0xb8] sm:$0xff]
    %v810 = vld [vmem:[#allocation10 + $0xc0] sm:$0xff]
    %v811 = vld [vmem:[#allocation10 + $0xc8] sm:$0xff]
    %v812 = vld [vmem:[#allocation10 + $0xd0] sm:$0xff]
    %v813 = vld [vmem:[#allocation10 + $0xd8] sm:$0xff]
    %v814 = vld [vmem:[#allocation10 + $0xe0] sm:$0xff]
    %v815 = vld [vmem:[#allocation10 + $0xe8] sm:$0xff]
    %v816 = vld [vmem:[#allocation10 + $0xf0] sm:$0xff]
    %v817 = vld [vmem:[#allocation10 + $0xf8] sm:$0xff]
    %v818 = vld [vmem:[#allocation10 + $0x100] sm:$0xff]
    %v819 = vld [vmem:[#allocation10 + $0x108] sm:$0xff]
    %v820 = vld [vmem:[#allocation10 + $0x110] sm:$0xff]
    %v821 = vld [vmem:[#allocation10 + $0x118] sm:$0xff]
    %v822 = vld [vmem:[#allocation10 + $0x120] sm:$0xff]
    %v823 = vld [vmem:[#allocation10 + $0x128] sm:$0xff]
    %v824 = vld [vmem:[#allocation10 + $0x130] sm:$0xff]
    %v825 = vld [vmem:[#allocation10 + $0x138] sm:$0xff]
    %v826 = vld [vmem:[#allocation10 + $0x140] sm:$0xff]
    %v827 = vld [vmem:[#allocation10 + $0x148] sm:$0xff]
    %v828 = vld [vmem:[#allocation10 + $0x150] sm:$0xff]
    %v829 = vld [vmem:[#allocation10 + $0x158] sm:$0xff]
    %v830 = vld [vmem:[#allocation10 + $0x160] sm:$0xff]
    %v831 = vld [vmem:[#allocation10 + $0x168] sm:$0xff]
    %v832 = vld [vmem:[#allocation10 + $0x170] sm:$0xff]
    %v833 = vld [vmem:[#allocation10 + $0x178] sm:$0xff]
    %v834 = vld [vmem:[#allocation10 + $0x180] sm:$0xff]
    %v835 = vld [vmem:[#allocation10 + $0x188] sm:$0xff]
    %v836 = vld [vmem:[#allocation10 + $0x190] sm:$0xff]
    %v837 = vld [vmem:[#allocation10 + $0x198] sm:$0xff]
    %v838 = vld [vmem:[#allocation10 + $0x1a0] sm:$0xff]
    %v839 = vld [vmem:[#allocation10 + $0x1a8] sm:$0xff]
    %v840 = vld [vmem:[#allocation10 + $0x1b0] sm:$0xff]
    %v841 = vld [vmem:[#allocation10 + $0x1b8] sm:$0xff]
    %v842 = vld [vmem:[#allocation10 + $0x1c0] sm:$0xff]
    %v843 = vld [vmem:[#allocation10 + $0x1c8] sm:$0xff]
    %v844 = vld [vmem:[#allocation10 + $0x1d0] sm:$0xff]
    %v845 = vld [vmem:[#allocation10 + $0x1d8] sm:$0xff]
    %v846 = vld [vmem:[#allocation10 + $0x1e0] sm:$0xff]
    %v847 = vld [vmem:[#allocation10 + $0x1e8] sm:$0xff]
    %v848 = vld [vmem:[#allocation10 + $0x1f0] sm:$0xff]
    %v849 = vld [vmem:[#allocation10 + $0x1f8] sm:$0xff]
    %v850 = vld [vmem:[#allocation10 + $0x200] sm:$0xff]
    %v851 = vld [vmem:[#allocation10 + $0x208] sm:$0xff]
    %v852 = vld [vmem:[#allocation10 + $0x210] sm:$0xff]
    %v853 = vld [vmem:[#allocation10 + $0x218] sm:$0xff]
    %v854 = vld [vmem:[#allocation10 + $0x220] sm:$0xff]
    %v855 = vld [vmem:[#allocation10 + $0x228] sm:$0xff]
    %v856 = vld [vmem:[#allocation10 + $0x230] sm:$0xff]
    %v857 = vld [vmem:[#allocation10 + $0x238] sm:$0xff]
    %v858 = vld [vmem:[#allocation10 + $0x240] sm:$0xff]
    %v859 = vld [vmem:[#allocation10 + $0x248] sm:$0xff]
    %v860 = vld [vmem:[#allocation10 + $0x250] sm:$0xff]
    %v861 = vld [vmem:[#allocation10 + $0x258] sm:$0xff]
    %v862 = vld [vmem:[#allocation10 + $0x260] sm:$0xff]
    %v863 = vld [vmem:[#allocation10 + $0x268] sm:$0xff]
    %v864 = vld [vmem:[#allocation10 + $0x270] sm:$0xff]
    %v865 = vld [vmem:[#allocation10 + $0x278] sm:$0xff]
    %v866 = vld [vmem:[#allocation10 + $0x280] sm:$0xff]
    %v867 = vld [vmem:[#allocation10 + $0x288] sm:$0xff]
    %v868 = vld [vmem:[#allocation10 + $0x290] sm:$0xff]
    %v869 = vld [vmem:[#allocation10 + $0x298] sm:$0xff]
    %v870 = vld [vmem:[#allocation10 + $0x2a0] sm:$0xff]
    %v871 = vld [vmem:[#allocation10 + $0x2a8] sm:$0xff]
    %v872 = vld [vmem:[#allocation10 + $0x2b0] sm:$0xff]
    %v873 = vld [vmem:[#allocation10 + $0x2b8] sm:$0xff]
    %v874 = vld [vmem:[#allocation10 + $0x2c0] sm:$0xff]
    %v875 = vld [vmem:[#allocation10 + $0x2c8] sm:$0xff]
    %v876 = vld [vmem:[#allocation10 + $0x2d0] sm:$0xff]
    %v877 = vld [vmem:[#allocation10 + $0x2d8] sm:$0xff]
    %v878 = vld [vmem:[#allocation10 + $0x2e0] sm:$0xff]
    %v879 = vld [vmem:[#allocation10 + $0x2e8] sm:$0xff]
    %v880 = vld [vmem:[#allocation10 + $0x2f0] sm:$0xff]
    %v881 = vld [vmem:[#allocation10 + $0x2f8] sm:$0xff]
    %v882 = vld [vmem:[#allocation10 + $0x300] sm:$0xff]
    %v883 = vld [vmem:[#allocation10 + $0x308] sm:$0xff]
    %v884 = vld [vmem:[#allocation10 + $0x310] sm:$0xff]
    %v885 = vld [vmem:[#allocation10 + $0x318] sm:$0xff]
    %v886 = vld [vmem:[#allocation10 + $0x320] sm:$0xff]
    %v887 = vld [vmem:[#allocation10 + $0x328] sm:$0xff]
    %v888 = vld [vmem:[#allocation10 + $0x330] sm:$0xff]
    %v889 = vld [vmem:[#allocation10 + $0x338] sm:$0xff]
    %v890 = vld [vmem:[#allocation10 + $0x340] sm:$0xff]
    %v891 = vld [vmem:[#allocation10 + $0x348] sm:$0xff]
    %v892 = vld [vmem:[#allocation10 + $0x350] sm:$0xff]
    %v893 = vld [vmem:[#allocation10 + $0x358] sm:$0xff]
    %v894 = vld [vmem:[#allocation10 + $0x360] sm:$0xff]
    %v895 = vld [vmem:[#allocation10 + $0x368] sm:$0xff]
    %v896 = vld [vmem:[#allocation10 + $0x370] sm:$0xff]
    %v897 = vld [vmem:[#allocation10 + $0x378] sm:$0xff]
    %v898 = vld [vmem:[#allocation10 + $0x380] sm:$0xff]
    %v899 = vld [vmem:[#allocation10 + $0x388] sm:$0xff]
    %v900 = vld [vmem:[#allocation10 + $0x390] sm:$0xff]
    %v901 = vld [vmem:[#allocation10 + $0x398] sm:$0xff]
    %v902 = vld [vmem:[#allocation10 + $0x3a0] sm:$0xff]
    %v903 = vld [vmem:[#allocation10 + $0x3a8] sm:$0xff]
    %v904 = vld [vmem:[#allocation10 + $0x3b0] sm:$0xff]
    %v905 = vld [vmem:[#allocation10 + $0x3b8] sm:$0xff]
    %v906 = vld [vmem:[#allocation10 + $0x3c0] sm:$0xff]
    %v907 = vld [vmem:[#allocation10 + $0x3c8] sm:$0xff]
    %v908 = vld [vmem:[#allocation10 + $0x3d0] sm:$0xff]
    %v909 = vld [vmem:[#allocation10 + $0x3d8] sm:$0xff]
    %v910 = vld [vmem:[#allocation10 + $0x3e0] sm:$0xff]
    %v911 = vld [vmem:[#allocation10 + $0x3e8] sm:$0xff]
    %v912 = vld [vmem:[#allocation10 + $0x3f0] sm:$0xff]
    %v913 = vld [vmem:[#allocation10 + $0x3f8] sm:$0xff]
    %v914 = vld [vmem:[#allocation10 + $0x400] sm:$0xff]
    %v915 = vld [vmem:[#allocation10 + $0x408] sm:$0xff]
    %v916 = vld [vmem:[#allocation10 + $0x410] sm:$0xff]
    %v917 = vld [vmem:[#allocation10 + $0x418] sm:$0xff]
    %v918 = vld [vmem:[#allocation10 + $0x420] sm:$0xff]
    %v919 = vld [vmem:[#allocation10 + $0x428] sm:$0xff]
    %v920 = vld [vmem:[#allocation10 + $0x430] sm:$0xff]
    %v921 = vld [vmem:[#allocation10 + $0x438] sm:$0xff]
    %v922 = vld [vmem:[#allocation10 + $0x440] sm:$0xff]
    %v923 = vld [vmem:[#allocation10 + $0x448] sm:$0xff]
    %v924 = vld [vmem:[#allocation10 + $0x450] sm:$0xff]
    %v925 = vld [vmem:[#allocation10 + $0x458] sm:$0xff]
    %v926 = vld [vmem:[#allocation10 + $0x460] sm:$0xff]
    %v927 = vld [vmem:[#allocation10 + $0x468] sm:$0xff]
    %v928 = vld [vmem:[#allocation10 + $0x470] sm:$0xff]
    %v929 = vld [vmem:[#allocation10 + $0x478] sm:$0xff]
    %v930 = vld [vmem:[#allocation10 + $0x480] sm:$0xff]
    %v931 = vld [vmem:[#allocation10 + $0x488] sm:$0xff]
    %v932 = vld [vmem:[#allocation10 + $0x490] sm:$0xff]
    %v933 = vld [vmem:[#allocation10 + $0x498] sm:$0xff]
    %v934 = vld [vmem:[#allocation10 + $0x4a0] sm:$0xff]
    %v935 = vld [vmem:[#allocation10 + $0x4a8] sm:$0xff]
    %v936 = vld [vmem:[#allocation10 + $0x4b0] sm:$0xff]
    %v937 = vld [vmem:[#allocation10 + $0x4b8] sm:$0xff]
    %v938 = vld [vmem:[#allocation10 + $0x4c0] sm:$0xff]
    %v939 = vld [vmem:[#allocation10 + $0x4c8] sm:$0xff]
    %v940 = vld [vmem:[#allocation10 + $0x4d0] sm:$0xff]
    %v941 = vld [vmem:[#allocation10 + $0x4d8] sm:$0xff]
    %v942 = vld [vmem:[#allocation10 + $0x4e0] sm:$0xff]
    %v943 = vld [vmem:[#allocation10 + $0x4e8] sm:$0xff]
    %v944 = vld [vmem:[#allocation10 + $0x4f0] sm:$0xff]
    %v945 = vld [vmem:[#allocation10 + $0x4f8] sm:$0xff]
    %v946 = vld [vmem:[#allocation10 + $0x500] sm:$0xff]
    %v947 = vld [vmem:[#allocation10 + $0x508] sm:$0xff]
    %v948 = vld [vmem:[#allocation10 + $0x510] sm:$0xff]
    %v949 = vld [vmem:[#allocation10 + $0x518] sm:$0xff]
    %v950 = vld [vmem:[#allocation10 + $0x520] sm:$0xff]
    %v951 = vld [vmem:[#allocation10 + $0x528] sm:$0xff]
    %v952 = vld [vmem:[#allocation10 + $0x530] sm:$0xff]
    %v953 = vld [vmem:[#allocation10 + $0x538] sm:$0xff]
    %v954 = vld [vmem:[#allocation10 + $0x540] sm:$0xff]
    %v955 = vld [vmem:[#allocation10 + $0x548] sm:$0xff]
    %v956 = vld [vmem:[#allocation10 + $0x550] sm:$0xff]
    %v957 = vld [vmem:[#allocation10 + $0x558] sm:$0xff]
    %v958 = vld [vmem:[#allocation10 + $0x560] sm:$0xff]
    %v959 = vld [vmem:[#allocation10 + $0x568] sm:$0xff]
    %v960 = vld [vmem:[#allocation10 + $0x570] sm:$0xff]
    %v961 = vld [vmem:[#allocation10 + $0x578] sm:$0xff]
    %v962 = vld [vmem:[#allocation10 + $0x580] sm:$0xff]
    %v963 = vld [vmem:[#allocation10 + $0x588] sm:$0xff]
    %v964 = vld [vmem:[#allocation10 + $0x590] sm:$0xff]
    %v965 = vld [vmem:[#allocation10 + $0x598] sm:$0xff]
    %v966 = vld [vmem:[#allocation10 + $0x5a0] sm:$0xff]
    %v967 = vld [vmem:[#allocation10 + $0x5a8] sm:$0xff]
    %v968 = vld [vmem:[#allocation10 + $0x5b0] sm:$0xff]
    %v969 = vld [vmem:[#allocation10 + $0x5b8] sm:$0xff]
    %v970 = vld [vmem:[#allocation10 + $0x5c0] sm:$0xff]
    %v971 = vld [vmem:[#allocation10 + $0x5c8] sm:$0xff]
    %v972 = vld [vmem:[#allocation10 + $0x5d0] sm:$0xff]
    %v973 = vld [vmem:[#allocation10 + $0x5d8] sm:$0xff]
    %v974 = vld [vmem:[#allocation10 + $0x5e0] sm:$0xff]
    %v975 = vld [vmem:[#allocation10 + $0x5e8] sm:$0xff]
    %v976 = vld [vmem:[#allocation10 + $0x5f0] sm:$0xff]
    %v977 = vld [vmem:[#allocation10 + $0x5f8] sm:$0xff]
    %v978 = vld [vmem:[#allocation10 + $0x600] sm:$0xff]
    %v979 = vld [vmem:[#allocation10 + $0x608] sm:$0xff]
    %v980 = vld [vmem:[#allocation10 + $0x610] sm:$0xff]
    %v981 = vld [vmem:[#allocation10 + $0x618] sm:$0xff]
    %v982 = vld [vmem:[#allocation10 + $0x620] sm:$0xff]
    %v983 = vld [vmem:[#allocation10 + $0x628] sm:$0xff]
    %v984 = vld [vmem:[#allocation10 + $0x630] sm:$0xff]
    %v985 = vld [vmem:[#allocation10 + $0x638] sm:$0xff]
    %v986 = vld [vmem:[#allocation10 + $0x640] sm:$0xff]
    %v987 = vld [vmem:[#allocation10 + $0x648] sm:$0xff]
    %v988 = vld [vmem:[#allocation10 + $0x650] sm:$0xff]
    %v989 = vld [vmem:[#allocation10 + $0x658] sm:$0xff]
    %v990 = vld [vmem:[#allocation10 + $0x660] sm:$0xff]
    %v991 = vld [vmem:[#allocation10 + $0x668] sm:$0xff]
    %v992 = vld [vmem:[#allocation10 + $0x670] sm:$0xff]
    %v993 = vld [vmem:[#allocation10 + $0x678] sm:$0xff]
    %v994 = vld [vmem:[#allocation10 + $0x680] sm:$0xff]
    %v995 = vld [vmem:[#allocation10 + $0x688] sm:$0xff]
    %v996 = vld [vmem:[#allocation10 + $0x690] sm:$0xff]
    %v997 = vld [vmem:[#allocation10 + $0x698] sm:$0xff]
    %v998 = vld [vmem:[#allocation10 + $0x6a0] sm:$0xff]
    %v999 = vld [vmem:[#allocation10 + $0x6a8] sm:$0xff]
    %v1000 = vld [vmem:[#allocation10 + $0x6b0] sm:$0xff]
    %v1001 = vld [vmem:[#allocation10 + $0x6b8] sm:$0xff]
    %v1002 = vld [vmem:[#allocation10 + $0x6c0] sm:$0xff]
    %v1003 = vld [vmem:[#allocation10 + $0x6c8] sm:$0xff]
    %v1004 = vld [vmem:[#allocation10 + $0x6d0] sm:$0xff]
    %v1005 = vld [vmem:[#allocation10 + $0x6d8] sm:$0xff]
    %v1006 = vld [vmem:[#allocation10 + $0x6e0] sm:$0xff]
    %v1007 = vld [vmem:[#allocation10 + $0x6e8] sm:$0xff]
    %v1008 = vld [vmem:[#allocation10 + $0x6f0] sm:$0xff]
    %v1009 = vld [vmem:[#allocation10 + $0x6f8] sm:$0xff]
    %v1010 = vld [vmem:[#allocation10 + $0x700] sm:$0xff]
    %v1011 = vld [vmem:[#allocation10 + $0x708] sm:$0xff]
    %v1012 = vld [vmem:[#allocation10 + $0x710] sm:$0xff]
    %v1013 = vld [vmem:[#allocation10 + $0x718] sm:$0xff]
    %v1014 = vld [vmem:[#allocation10 + $0x720] sm:$0xff]
    %v1015 = vld [vmem:[#allocation10 + $0x728] sm:$0xff]
    %v1016 = vld [vmem:[#allocation10 + $0x730] sm:$0xff]
    %v1017 = vld [vmem:[#allocation10 + $0x738] sm:$0xff]
    %v1018 = vld [vmem:[#allocation10 + $0x740] sm:$0xff]
    %v1019 = vld [vmem:[#allocation10 + $0x748] sm:$0xff]
    %v1020 = vld [vmem:[#allocation10 + $0x750] sm:$0xff]
    %v1021 = vld [vmem:[#allocation10 + $0x758] sm:$0xff]
    %v1022 = vld [vmem:[#allocation10 + $0x760] sm:$0xff]
    %v1023 = vld [vmem:[#allocation10 + $0x768] sm:$0xff]
    %v1024 = vld [vmem:[#allocation10 + $0x770] sm:$0xff]
    %v1025 = vld [vmem:[#allocation10 + $0x778] sm:$0xff]
    %v1026 = vld [vmem:[#allocation10 + $0x780] sm:$0xff]
    %v1027 = vld [vmem:[#allocation10 + $0x788] sm:$0xff]
    %v1028 = vld [vmem:[#allocation10 + $0x790] sm:$0xff]
    %v1029 = vld [vmem:[#allocation10 + $0x798] sm:$0xff]
    %v1030 = vld [vmem:[#allocation10 + $0x7a0] sm:$0xff]
    %v1031 = vld [vmem:[#allocation10 + $0x7a8] sm:$0xff]
    %v1032 = vld [vmem:[#allocation10 + $0x7b0] sm:$0xff]
    %v1033 = vld [vmem:[#allocation10 + $0x7b8] sm:$0xff]
    %v1034 = vld [vmem:[#allocation10 + $0x7c0] sm:$0xff]
    %v1035 = vld [vmem:[#allocation10 + $0x7c8] sm:$0xff]
    %v1036 = vld [vmem:[#allocation10 + $0x7d0] sm:$0xff]
    %v1037 = vld [vmem:[#allocation10 + $0x7d8] sm:$0xff]
    %v1038 = vld [vmem:[#allocation10 + $0x7e0] sm:$0xff]
    %v1039 = vld [vmem:[#allocation10 + $0x7e8] sm:$0xff]
    %v1040 = vld [vmem:[#allocation10 + $0x7f0] sm:$0xff]
    %v1041 = vld [vmem:[#allocation10 + $0x7f8] sm:$0xff]
    %v1042 = vld [vmem:[#allocation10 + $0x800] sm:$0xff]
    %v1043 = vld [vmem:[#allocation10 + $0x808] sm:$0xff]
    %v1044 = vld [vmem:[#allocation10 + $0x810] sm:$0xff]
    %v1045 = vld [vmem:[#allocation10 + $0x818] sm:$0xff]
    %v1046 = vld [vmem:[#allocation10 + $0x820] sm:$0xff]
    %v1047 = vld [vmem:[#allocation10 + $0x828] sm:$0xff]
    %v1048 = vld [vmem:[#allocation10 + $0x830] sm:$0xff]
    %v1049 = vld [vmem:[#allocation10 + $0x838] sm:$0xff]
    %v1050 = vld [vmem:[#allocation10 + $0x840] sm:$0xff]
    %v1051 = vld [vmem:[#allocation10 + $0x848] sm:$0xff]
    %v1052 = vld [vmem:[#allocation10 + $0x850] sm:$0xff]
    %v1053 = vld [vmem:[#allocation10 + $0x858] sm:$0xff]
    %v1054 = vld [vmem:[#allocation10 + $0x860] sm:$0xff]
    %v1055 = vld [vmem:[#allocation10 + $0x868] sm:$0xff]
    %v1056 = vld [vmem:[#allocation10 + $0x870] sm:$0xff]
    %v1057 = vld [vmem:[#allocation10 + $0x878] sm:$0xff]
    %v1058 = vld [vmem:[#allocation10 + $0x880] sm:$0xff]
    %v1059 = vld [vmem:[#allocation10 + $0x888] sm:$0xff]
    %v1060 = vld [vmem:[#allocation10 + $0x890] sm:$0xff]
    %v1061 = vld [vmem:[#allocation10 + $0x898] sm:$0xff]
    %v1062 = vld [vmem:[#allocation10 + $0x8a0] sm:$0xff]
    %v1063 = vld [vmem:[#allocation10 + $0x8a8] sm:$0xff]
    %v1064 = vld [vmem:[#allocation10 + $0x8b0] sm:$0xff]
    %v1065 = vld [vmem:[#allocation10 + $0x8b8] sm:$0xff]
    %v1066 = vld [vmem:[#allocation10 + $0x8c0] sm:$0xff]
    %v1067 = vld [vmem:[#allocation10 + $0x8c8] sm:$0xff]
    %v1068 = vld [vmem:[#allocation10 + $0x8d0] sm:$0xff]
    %v1069 = vld [vmem:[#allocation10 + $0x8d8] sm:$0xff]
    %v1070 = vld [vmem:[#allocation10 + $0x8e0] sm:$0xff]
    %v1071 = vld [vmem:[#allocation10 + $0x8e8] sm:$0xff]
    %v1072 = vld [vmem:[#allocation10 + $0x8f0] sm:$0xff]
    %v1073 = vld [vmem:[#allocation10 + $0x8f8] sm:$0xff]
    %v1074 = vld [vmem:[#allocation10 + $0x900] sm:$0xff]
    %v1075 = vld [vmem:[#allocation10 + $0x908] sm:$0xff]
    %v1076 = vld [vmem:[#allocation10 + $0x910] sm:$0xff]
    %v1077 = vld [vmem:[#allocation10 + $0x918] sm:$0xff]
    %v1078 = vld [vmem:[#allocation10 + $0x920] sm:$0xff]
    %v1079 = vld [vmem:[#allocation10 + $0x928] sm:$0xff]
    %v1080 = vld [vmem:[#allocation10 + $0x930] sm:$0xff]
    %v1081 = vld [vmem:[#allocation10 + $0x938] sm:$0xff]
    %v1082 = vld [vmem:[#allocation10 + $0x940] sm:$0xff]
    %v1083 = vld [vmem:[#allocation10 + $0x948] sm:$0xff]
    %v1084 = vld [vmem:[#allocation10 + $0x950] sm:$0xff]
    %v1085 = vld [vmem:[#allocation10 + $0x958] sm:$0xff]
    %v1086 = vld [vmem:[#allocation10 + $0x960] sm:$0xff]
    %v1087 = vld [vmem:[#allocation10 + $0x968] sm:$0xff]
    %v1088 = vld [vmem:[#allocation10 + $0x970] sm:$0xff]
    %v1089 = vld [vmem:[#allocation10 + $0x978] sm:$0xff]
    %v1090 = vld [vmem:[#allocation10 + $0x980] sm:$0xff]
    %v1091 = vld [vmem:[#allocation10 + $0x988] sm:$0xff]
    %v1092 = vld [vmem:[#allocation10 + $0x990] sm:$0xff]
    %v1093 = vld [vmem:[#allocation10 + $0x998] sm:$0xff]
    %v1094 = vld [vmem:[#allocation10 + $0x9a0] sm:$0xff]
    %v1095 = vld [vmem:[#allocation10 + $0x9a8] sm:$0xff]
    %v1096 = vld [vmem:[#allocation10 + $0x9b0] sm:$0xff]
    %v1097 = vld [vmem:[#allocation10 + $0x9b8] sm:$0xff]
    %v1098 = vld [vmem:[#allocation10 + $0x9c0] sm:$0xff]
    %v1099 = vld [vmem:[#allocation10 + $0x9c8] sm:$0xff]
    %v1100 = vld [vmem:[#allocation10 + $0x9d0] sm:$0xff]
    %v1101 = vld [vmem:[#allocation10 + $0x9d8] sm:$0xff]
    %v1102 = vld [vmem:[#allocation10 + $0x9e0] sm:$0xff]
    %v1103 = vld [vmem:[#allocation10 + $0x9e8] sm:$0xff]
    %v1104 = vld [vmem:[#allocation10 + $0x9f0] sm:$0xff]
    %v1105 = vld [vmem:[#allocation10 + $0x9f8] sm:$0xff]
    %v1106 = vld [vmem:[#allocation10 + $0xa00] sm:$0xff]
    %v1107 = vld [vmem:[#allocation10 + $0xa08] sm:$0xff]
    %v1108 = vld [vmem:[#allocation10 + $0xa10] sm:$0xff]
    %v1109 = vld [vmem:[#allocation10 + $0xa18] sm:$0xff]
    %v1110 = vld [vmem:[#allocation10 + $0xa20] sm:$0xff]
    %v1111 = vld [vmem:[#allocation10 + $0xa28] sm:$0xff]
    %v1112 = vld [vmem:[#allocation10 + $0xa30] sm:$0xff]
    %v1113 = vld [vmem:[#allocation10 + $0xa38] sm:$0xff]
    %v1114 = vld [vmem:[#allocation10 + $0xa40] sm:$0xff]
    %v1115 = vld [vmem:[#allocation10 + $0xa48] sm:$0xff]
    %v1116 = vld [vmem:[#allocation10 + $0xa50] sm:$0xff]
    %v1117 = vld [vmem:[#allocation10 + $0xa58] sm:$0xff]
    %v1118 = vld [vmem:[#allocation10 + $0xa60] sm:$0xff]
    %v1119 = vld [vmem:[#allocation10 + $0xa68] sm:$0xff]
    %v1120 = vld [vmem:[#allocation10 + $0xa70] sm:$0xff]
    %v1121 = vld [vmem:[#allocation10 + $0xa78] sm:$0xff]
    %v1122 = vld [vmem:[#allocation10 + $0xa80] sm:$0xff]
    %v1123 = vld [vmem:[#allocation10 + $0xa88] sm:$0xff]
    %v1124 = vld [vmem:[#allocation10 + $0xa90] sm:$0xff]
    %v1125 = vld [vmem:[#allocation10 + $0xa98] sm:$0xff]
    %v1126 = vld [vmem:[#allocation10 + $0xaa0] sm:$0xff]
    %v1127 = vld [vmem:[#allocation10 + $0xaa8] sm:$0xff]
    %v1128 = vld [vmem:[#allocation10 + $0xab0] sm:$0xff]
    %v1129 = vld [vmem:[#allocation10 + $0xab8] sm:$0xff]
    %v1130 = vld [vmem:[#allocation10 + $0xac0] sm:$0xff]
    %v1131 = vld [vmem:[#allocation10 + $0xac8] sm:$0xff]
    %v1132 = vld [vmem:[#allocation10 + $0xad0] sm:$0xff]
    %v1133 = vld [vmem:[#allocation10 + $0xad8] sm:$0xff]
    %v1134 = vld [vmem:[#allocation10 + $0xae0] sm:$0xff]
    %v1135 = vld [vmem:[#allocation10 + $0xae8] sm:$0xff]
    %v1136 = vld [vmem:[#allocation10 + $0xaf0] sm:$0xff]
    %v1137 = vld [vmem:[#allocation10 + $0xaf8] sm:$0xff]
    %v1138 = vld [vmem:[#allocation10 + $0xb00] sm:$0xff]
    %v1139 = vld [vmem:[#allocation10 + $0xb08] sm:$0xff]
    %v1140 = vld [vmem:[#allocation10 + $0xb10] sm:$0xff]
    %v1141 = vld [vmem:[#allocation10 + $0xb18] sm:$0xff]
    %v1142 = vld [vmem:[#allocation10 + $0xb20] sm:$0xff]
    %v1143 = vld [vmem:[#allocation10 + $0xb28] sm:$0xff]
    %v1144 = vld [vmem:[#allocation10 + $0xb30] sm:$0xff]
    %v1145 = vld [vmem:[#allocation10 + $0xb38] sm:$0xff]
    %v1146 = vld [vmem:[#allocation10 + $0xb40] sm:$0xff]
    %v1147 = vld [vmem:[#allocation10 + $0xb48] sm:$0xff]
    %v1148 = vld [vmem:[#allocation10 + $0xb50] sm:$0xff]
    %v1149 = vld [vmem:[#allocation10 + $0xb58] sm:$0xff]
    %v1150 = vld [vmem:[#allocation10 + $0xb60] sm:$0xff]
    %v1151 = vld [vmem:[#allocation10 + $0xb68] sm:$0xff]
    %v1152 = vld [vmem:[#allocation10 + $0xb70] sm:$0xff]
    %v1153 = vld [vmem:[#allocation10 + $0xb78] sm:$0xff]
    %v1154 = vld [vmem:[#allocation10 + $0xb80] sm:$0xff]
    %v1155 = vld [vmem:[#allocation10 + $0xb88] sm:$0xff]
    %v1156 = vld [vmem:[#allocation10 + $0xb90] sm:$0xff]
    %v1157 = vld [vmem:[#allocation10 + $0xb98] sm:$0xff]
    %v1158 = vld [vmem:[#allocation10 + $0xba0] sm:$0xff]
    %v1159 = vld [vmem:[#allocation10 + $0xba8] sm:$0xff]
    %v1160 = vld [vmem:[#allocation10 + $0xbb0] sm:$0xff]
    %v1161 = vld [vmem:[#allocation10 + $0xbb8] sm:$0xff]
    %v1162 = vld [vmem:[#allocation10 + $0xbc0] sm:$0xff]
    %v1163 = vld [vmem:[#allocation10 + $0xbc8] sm:$0xff]
    %v1164 = vld [vmem:[#allocation10 + $0xbd0] sm:$0xff]
    %v1165 = vld [vmem:[#allocation10 + $0xbd8] sm:$0xff]
    %v1166 = vld [vmem:[#allocation10 + $0xbe0] sm:$0xff]
    %v1167 = vld [vmem:[#allocation10 + $0xbe8] sm:$0xff]
    %v1168 = vld [vmem:[#allocation10 + $0xbf0] sm:$0xff]
    %v1169 = vld [vmem:[#allocation10 + $0xbf8] sm:$0xff]
    %v1170 = vld [vmem:[#allocation10 + $0xc00] sm:$0xff]
    %v1171 = vld [vmem:[#allocation10 + $0xc08] sm:$0xff]
    %v1172 = vld [vmem:[#allocation10 + $0xc10] sm:$0xff]
    %v1173 = vld [vmem:[#allocation10 + $0xc18] sm:$0xff]
    %v1174 = vld [vmem:[#allocation10 + $0xc20] sm:$0xff]
    %v1175 = vld [vmem:[#allocation10 + $0xc28] sm:$0xff]
    %v1176 = vld [vmem:[#allocation10 + $0xc30] sm:$0xff]
    %v1177 = vld [vmem:[#allocation10 + $0xc38] sm:$0xff]
    %v1178 = vld [vmem:[#allocation10 + $0xc40] sm:$0xff]
    %v1179 = vld [vmem:[#allocation10 + $0xc48] sm:$0xff]
    %v1180 = vld [vmem:[#allocation10 + $0xc50] sm:$0xff]
    %v1181 = vld [vmem:[#allocation10 + $0xc58] sm:$0xff]
    %v1182 = vld [vmem:[#allocation10 + $0xc60] sm:$0xff]
    %v1183 = vld [vmem:[#allocation10 + $0xc68] sm:$0xff]
    %v1184 = vld [vmem:[#allocation10 + $0xc70] sm:$0xff]
    %v1185 = vld [vmem:[#allocation10 + $0xc78] sm:$0xff]
    %v1186 = vld [vmem:[#allocation10 + $0xc80] sm:$0xff]
    %v1187 = vld [vmem:[#allocation10 + $0xc88] sm:$0xff]
    %v1188 = vld [vmem:[#allocation10 + $0xc90] sm:$0xff]
    %v1189 = vld [vmem:[#allocation10 + $0xc98] sm:$0xff]
    %v1190 = vld [vmem:[#allocation10 + $0xca0] sm:$0xff]
    %v1191 = vld [vmem:[#allocation10 + $0xca8] sm:$0xff]
    %v1192 = vld [vmem:[#allocation10 + $0xcb0] sm:$0xff]
    %v1193 = vld [vmem:[#allocation10 + $0xcb8] sm:$0xff]
    %v1194 = vld [vmem:[#allocation10 + $0xcc0] sm:$0xff]
    %v1195 = vld [vmem:[#allocation10 + $0xcc8] sm:$0xff]
    %v1196 = vld [vmem:[#allocation10 + $0xcd0] sm:$0xff]
    %v1197 = vld [vmem:[#allocation10 + $0xcd8] sm:$0xff]
    %v1198 = vld [vmem:[#allocation10 + $0xce0] sm:$0xff]
    %v1199 = vld [vmem:[#allocation10 + $0xce8] sm:$0xff]
    %v1200 = vld [vmem:[#allocation10 + $0xcf0] sm:$0xff]
    %v1201 = vld [vmem:[#allocation10 + $0xcf8] sm:$0xff]
    %v1202 = vld [vmem:[#allocation10 + $0xd00] sm:$0xff]
    %v1203 = vld [vmem:[#allocation10 + $0xd08] sm:$0xff]
    %v1204 = vld [vmem:[#allocation10 + $0xd10] sm:$0xff]
    %v1205 = vld [vmem:[#allocation10 + $0xd18] sm:$0xff]
    %v1206 = vld [vmem:[#allocation10 + $0xd20] sm:$0xff]
    %v1207 = vld [vmem:[#allocation10 + $0xd28] sm:$0xff]
    %v1208 = vld [vmem:[#allocation10 + $0xd30] sm:$0xff]
    %v1209 = vld [vmem:[#allocation10 + $0xd38] sm:$0xff]
    %v1210 = vld [vmem:[#allocation10 + $0xd40] sm:$0xff]
    %v1211 = vld [vmem:[#allocation10 + $0xd48] sm:$0xff]
    %v1212 = vld [vmem:[#allocation10 + $0xd50] sm:$0xff]
    %v1213 = vld [vmem:[#allocation10 + $0xd58] sm:$0xff]
    %v1214 = vld [vmem:[#allocation10 + $0xd60] sm:$0xff]
    %v1215 = vld [vmem:[#allocation10 + $0xd68] sm:$0xff]
    %v1216 = vld [vmem:[#allocation10 + $0xd70] sm:$0xff]
    %v1217 = vld [vmem:[#allocation10 + $0xd78] sm:$0xff]
    %v1218 = vld [vmem:[#allocation10 + $0xd80] sm:$0xff]
    %v1219 = vld [vmem:[#allocation10 + $0xd88] sm:$0xff]
    %v1220 = vld [vmem:[#allocation10 + $0xd90] sm:$0xff]
    %v1221 = vld [vmem:[#allocation10 + $0xd98] sm:$0xff]
    %v1222 = vld [vmem:[#allocation10 + $0xda0] sm:$0xff]
    %v1223 = vld [vmem:[#allocation10 + $0xda8] sm:$0xff]
    %v1224 = vld [vmem:[#allocation10 + $0xdb0] sm:$0xff]
    %v1225 = vld [vmem:[#allocation10 + $0xdb8] sm:$0xff]
    %v1226 = vld [vmem:[#allocation10 + $0xdc0] sm:$0xff]
    %v1227 = vld [vmem:[#allocation10 + $0xdc8] sm:$0xff]
    %v1228 = vld [vmem:[#allocation10 + $0xdd0] sm:$0xff]
    %v1229 = vld [vmem:[#allocation10 + $0xdd8] sm:$0xff]
    %v1230 = vld [vmem:[#allocation10 + $0xde0] sm:$0xff]
    %v1231 = vld [vmem:[#allocation10 + $0xde8] sm:$0xff]
    %v1232 = vld [vmem:[#allocation10 + $0xdf0] sm:$0xff]
    %v1233 = vld [vmem:[#allocation10 + $0xdf8] sm:$0xff]
    %v1234 = vld [vmem:[#allocation10 + $0xe00] sm:$0xff]
    %v1235 = vld [vmem:[#allocation10 + $0xe08] sm:$0xff]
    %v1236 = vld [vmem:[#allocation10 + $0xe10] sm:$0xff]
    %v1237 = vld [vmem:[#allocation10 + $0xe18] sm:$0xff]
    %v1238 = vld [vmem:[#allocation10 + $0xe20] sm:$0xff]
    %v1239 = vld [vmem:[#allocation10 + $0xe28] sm:$0xff]
    %v1240 = vld [vmem:[#allocation10 + $0xe30] sm:$0xff]
    %v1241 = vld [vmem:[#allocation10 + $0xe38] sm:$0xff]
    %v1242 = vld [vmem:[#allocation10 + $0xe40] sm:$0xff]
    %v1243 = vld [vmem:[#allocation10 + $0xe48] sm:$0xff]
    %v1244 = vld [vmem:[#allocation10 + $0xe50] sm:$0xff]
    %v1245 = vld [vmem:[#allocation10 + $0xe58] sm:$0xff]
    %v1246 = vld [vmem:[#allocation10 + $0xe60] sm:$0xff]
    %v1247 = vld [vmem:[#allocation10 + $0xe68] sm:$0xff]
    %v1248 = vld [vmem:[#allocation10 + $0xe70] sm:$0xff]
    %v1249 = vld [vmem:[#allocation10 + $0xe78] sm:$0xff]
    %v1250 = vld [vmem:[#allocation10 + $0xe80] sm:$0xff]
    %v1251 = vld [vmem:[#allocation10 + $0xe88] sm:$0xff]
    %v1252 = vld [vmem:[#allocation10 + $0xe90] sm:$0xff]
    %v1253 = vld [vmem:[#allocation10 + $0xe98] sm:$0xff]
    %v1254 = vld [vmem:[#allocation10 + $0xea0] sm:$0xff]
    %v1255 = vld [vmem:[#allocation10 + $0xea8] sm:$0xff]
    %v1256 = vld [vmem:[#allocation10 + $0xeb0] sm:$0xff]
    %v1257 = vld [vmem:[#allocation10 + $0xeb8] sm:$0xff]
    %v1258 = vld [vmem:[#allocation10 + $0xec0] sm:$0xff]
    %v1259 = vld [vmem:[#allocation10 + $0xec8] sm:$0xff]
    %v1260 = vld [vmem:[#allocation10 + $0xed0] sm:$0xff]
    %v1261 = vld [vmem:[#allocation10 + $0xed8] sm:$0xff]
    %v1262 = vld [vmem:[#allocation10 + $0xee0] sm:$0xff]
    %v1263 = vld [vmem:[#allocation10 + $0xee8] sm:$0xff]
    %v1264 = vld [vmem:[#allocation10 + $0xef0] sm:$0xff]
    %v1265 = vld [vmem:[#allocation10 + $0xef8] sm:$0xff]
    %v1266 = vld [vmem:[#allocation10 + $0xf00] sm:$0xff]
    %v1267 = vld [vmem:[#allocation10 + $0xf08] sm:$0xff]
    %v1268 = vld [vmem:[#allocation10 + $0xf10] sm:$0xff]
    %v1269 = vld [vmem:[#allocation10 + $0xf18] sm:$0xff]
    %v1270 = vld [vmem:[#allocation10 + $0xf20] sm:$0xff]
    %v1271 = vld [vmem:[#allocation10 + $0xf28] sm:$0xff]
    %v1272 = vld [vmem:[#allocation10 + $0xf30] sm:$0xff]
    %v1273 = vld [vmem:[#allocation10 + $0xf38] sm:$0xff]
    %v1274 = vld [vmem:[#allocation10 + $0xf40] sm:$0xff]
    %v1275 = vld [vmem:[#allocation10 + $0xf48] sm:$0xff]
    %v1276 = vld [vmem:[#allocation10 + $0xf50] sm:$0xff]
    %v1277 = vld [vmem:[#allocation10 + $0xf58] sm:$0xff]
    %v1278 = vld [vmem:[#allocation10 + $0xf60] sm:$0xff]
    %v1279 = vld [vmem:[#allocation10 + $0xf68] sm:$0xff]
    %v1280 = vld [vmem:[#allocation10 + $0xf70] sm:$0xff]
    %v1281 = vld [vmem:[#allocation10 + $0xf78] sm:$0xff]
    %v1282 = vld [vmem:[#allocation10 + $0xf80] sm:$0xff]
    %v1283 = vld [vmem:[#allocation10 + $0xf88] sm:$0xff]
    %v1284 = vld [vmem:[#allocation10 + $0xf90] sm:$0xff]
    %v1285 = vld [vmem:[#allocation10 + $0xf98] sm:$0xff]
    %v1286 = vld [vmem:[#allocation10 + $0xfa0] sm:$0xff]
    %v1287 = vld [vmem:[#allocation10 + $0xfa8] sm:$0xff]
    %v1288 = vld [vmem:[#allocation10 + $0xfb0] sm:$0xff]
    %v1289 = vld [vmem:[#allocation10 + $0xfb8] sm:$0xff]
    %v1290 = vld [vmem:[#allocation10 + $0xfc0] sm:$0xff]
    %v1291 = vld [vmem:[#allocation10 + $0xfc8] sm:$0xff]
    %v1292 = vld [vmem:[#allocation10 + $0xfd0] sm:$0xff]
    %v1293 = vld [vmem:[#allocation10 + $0xfd8] sm:$0xff]
    %v1294 = vld [vmem:[#allocation10 + $0xfe0] sm:$0xff]
    %v1295 = vld [vmem:[#allocation10 + $0xfe8] sm:$0xff]
    %v1296 = vld [vmem:[#allocation10 + $0xff0] sm:$0xff]
    %v1297 = vld [vmem:[#allocation10 + $0xff8] sm:$0xff]
    %v1298 = vld [vmem:[#allocation11] sm:$0xff]
    %v1300 = vlaneseq
    %v1301 = vshrl.u32 %v1300, 7
    %v1302 = vsub.s32 0, %v1301
    %v1303 = vrot.slane %v1298, %v1302
    %v1304 = vlaneseq
    %v1305 = vshrl.u32 %v1304, 7
    %v1306 = vsub.s32 1, %v1305
    %v1307 = vrot.slane %v1298, %v1306
    %v1308 = vlaneseq
    %v1309 = vshrl.u32 %v1308, 7
    %v1310 = vsub.s32 2, %v1309
    %v1311 = vrot.slane %v1298, %v1310
    %v1312 = vlaneseq
    %v1313 = vshrl.u32 %v1312, 7
    %v1314 = vsub.s32 3, %v1313
    %v1315 = vrot.slane %v1298, %v1314
    %v1316 = vlaneseq
    %v1317 = vshrl.u32 %v1316, 7
    %v1318 = vsub.s32 4, %v1317
    %v1319 = vrot.slane %v1298, %v1318
    %v1320 = vlaneseq
    %v1321 = vshrl.u32 %v1320, 7
    %v1322 = vsub.s32 5, %v1321
    %v1323 = vrot.slane %v1298, %v1322
    %v1324 = vlaneseq
    %v1325 = vshrl.u32 %v1324, 7
    %v1326 = vsub.s32 6, %v1325
    %v1327 = vrot.slane %v1298, %v1326
    %v1328 = vlaneseq
    %v1329 = vshrl.u32 %v1328, 7
    %v1330 = vsub.s32 7, %v1329
    %v1331 = vrot.slane %v1298, %v1330
    %v1852 = vunpack.c.l.b16 %v786
    %v1853 = vunpack.c.h.b16 %v786
    %v1854 = vunpack.c.l.b16 %v787
    %v1855 = vunpack.c.h.b16 %v787
    %v1856 = vunpack.c.l.b16 %v788
    %v1857 = vunpack.c.h.b16 %v788
    %v1858 = vunpack.c.l.b16 %v789
    %v1859 = vunpack.c.h.b16 %v789
    %v1860 = vunpack.c.l.b16 %v790
    %v1861 = vunpack.c.h.b16 %v790
    %v1862 = vunpack.c.l.b16 %v791
    %v1863 = vunpack.c.h.b16 %v791
    %v1864 = vunpack.c.l.b16 %v792
    %v1865 = vunpack.c.h.b16 %v792
    %v1866 = vunpack.c.l.b16 %v793
    %v1867 = vunpack.c.h.b16 %v793
    %v1868 = vunpack.c.l.b16 %v794
    %v1869 = vunpack.c.h.b16 %v794
    %v1870 = vunpack.c.l.b16 %v795
    %v1871 = vunpack.c.h.b16 %v795
    %v1872 = vunpack.c.l.b16 %v796
    %v1873 = vunpack.c.h.b16 %v796
    %v1874 = vunpack.c.l.b16 %v797
    %v1875 = vunpack.c.h.b16 %v797
    %v1876 = vunpack.c.l.b16 %v798
    %v1877 = vunpack.c.h.b16 %v798
    %v1878 = vunpack.c.l.b16 %v799
    %v1879 = vunpack.c.h.b16 %v799
    %v1880 = vunpack.c.l.b16 %v800
    %v1881 = vunpack.c.h.b16 %v800
    %v1882 = vunpack.c.l.b16 %v801
    %v1883 = vunpack.c.h.b16 %v801
    %v1884 = vunpack.c.l.b16 %v802
    %v1885 = vunpack.c.h.b16 %v802
    %v1886 = vunpack.c.l.b16 %v803
    %v1887 = vunpack.c.h.b16 %v803
    %v1888 = vunpack.c.l.b16 %v804
    %v1889 = vunpack.c.h.b16 %v804
    %v1890 = vunpack.c.l.b16 %v805
    %v1891 = vunpack.c.h.b16 %v805
    %v1892 = vunpack.c.l.b16 %v806
    %v1893 = vunpack.c.h.b16 %v806
    %v1894 = vunpack.c.l.b16 %v807
    %v1895 = vunpack.c.h.b16 %v807
    %v1896 = vunpack.c.l.b16 %v808
    %v1897 = vunpack.c.h.b16 %v808
    %v1898 = vunpack.c.l.b16 %v809
    %v1899 = vunpack.c.h.b16 %v809
    %v1900 = vunpack.c.l.b16 %v810
    %v1901 = vunpack.c.h.b16 %v810
    %v1902 = vunpack.c.l.b16 %v811
    %v1903 = vunpack.c.h.b16 %v811
    %v1904 = vunpack.c.l.b16 %v812
    %v1905 = vunpack.c.h.b16 %v812
    %v1906 = vunpack.c.l.b16 %v813
    %v1907 = vunpack.c.h.b16 %v813
    %v1908 = vunpack.c.l.b16 %v814
    %v1909 = vunpack.c.h.b16 %v814
    %v1910 = vunpack.c.l.b16 %v815
    %v1911 = vunpack.c.h.b16 %v815
    %v1912 = vunpack.c.l.b16 %v816
    %v1913 = vunpack.c.h.b16 %v816
    %v1914 = vunpack.c.l.b16 %v817
    %v1915 = vunpack.c.h.b16 %v817
    %v1916 = vunpack.c.l.b16 %v818
    %v1917 = vunpack.c.h.b16 %v818
    %v1918 = vunpack.c.l.b16 %v819
    %v1919 = vunpack.c.h.b16 %v819
    %v1920 = vunpack.c.l.b16 %v820
    %v1921 = vunpack.c.h.b16 %v820
    %v1922 = vunpack.c.l.b16 %v821
    %v1923 = vunpack.c.h.b16 %v821
    %v1924 = vunpack.c.l.b16 %v822
    %v1925 = vunpack.c.h.b16 %v822
    %v1926 = vunpack.c.l.b16 %v823
    %v1927 = vunpack.c.h.b16 %v823
    %v1928 = vunpack.c.l.b16 %v824
    %v1929 = vunpack.c.h.b16 %v824
    %v1930 = vunpack.c.l.b16 %v825
    %v1931 = vunpack.c.h.b16 %v825
    %v1932 = vunpack.c.l.b16 %v826
    %v1933 = vunpack.c.h.b16 %v826
    %v1934 = vunpack.c.l.b16 %v827
    %v1935 = vunpack.c.h.b16 %v827
    %v1936 = vunpack.c.l.b16 %v828
    %v1937 = vunpack.c.h.b16 %v828
    %v1938 = vunpack.c.l.b16 %v829
    %v1939 = vunpack.c.h.b16 %v829
    %v1940 = vunpack.c.l.b16 %v830
    %v1941 = vunpack.c.h.b16 %v830
    %v1942 = vunpack.c.l.b16 %v831
    %v1943 = vunpack.c.h.b16 %v831
    %v1944 = vunpack.c.l.b16 %v832
    %v1945 = vunpack.c.h.b16 %v832
    %v1946 = vunpack.c.l.b16 %v833
    %v1947 = vunpack.c.h.b16 %v833
    %v1948 = vunpack.c.l.b16 %v834
    %v1949 = vunpack.c.h.b16 %v834
    %v1950 = vunpack.c.l.b16 %v835
    %v1951 = vunpack.c.h.b16 %v835
    %v1952 = vunpack.c.l.b16 %v836
    %v1953 = vunpack.c.h.b16 %v836
    %v1954 = vunpack.c.l.b16 %v837
    %v1955 = vunpack.c.h.b16 %v837
    %v1956 = vunpack.c.l.b16 %v838
    %v1957 = vunpack.c.h.b16 %v838
    %v1958 = vunpack.c.l.b16 %v839
    %v1959 = vunpack.c.h.b16 %v839
    %v1960 = vunpack.c.l.b16 %v840
    %v1961 = vunpack.c.h.b16 %v840
    %v1962 = vunpack.c.l.b16 %v841
    %v1963 = vunpack.c.h.b16 %v841
    %v1964 = vunpack.c.l.b16 %v842
    %v1965 = vunpack.c.h.b16 %v842
    %v1966 = vunpack.c.l.b16 %v843
    %v1967 = vunpack.c.h.b16 %v843
    %v1968 = vunpack.c.l.b16 %v844
    %v1969 = vunpack.c.h.b16 %v844
    %v1970 = vunpack.c.l.b16 %v845
    %v1971 = vunpack.c.h.b16 %v845
    %v1972 = vunpack.c.l.b16 %v846
    %v1973 = vunpack.c.h.b16 %v846
    %v1974 = vunpack.c.l.b16 %v847
    %v1975 = vunpack.c.h.b16 %v847
    %v1976 = vunpack.c.l.b16 %v848
    %v1977 = vunpack.c.h.b16 %v848
    %v1978 = vunpack.c.l.b16 %v849
    %v1979 = vunpack.c.h.b16 %v849
    %v1980 = vunpack.c.l.b16 %v850
    %v1981 = vunpack.c.h.b16 %v850
    %v1982 = vunpack.c.l.b16 %v851
    %v1983 = vunpack.c.h.b16 %v851
    %v1984 = vunpack.c.l.b16 %v852
    %v1985 = vunpack.c.h.b16 %v852
    %v1986 = vunpack.c.l.b16 %v853
    %v1987 = vunpack.c.h.b16 %v853
    %v1988 = vunpack.c.l.b16 %v854
    %v1989 = vunpack.c.h.b16 %v854
    %v1990 = vunpack.c.l.b16 %v855
    %v1991 = vunpack.c.h.b16 %v855
    %v1992 = vunpack.c.l.b16 %v856
    %v1993 = vunpack.c.h.b16 %v856
    %v1994 = vunpack.c.l.b16 %v857
    %v1995 = vunpack.c.h.b16 %v857
    %v1996 = vunpack.c.l.b16 %v858
    %v1997 = vunpack.c.h.b16 %v858
    %v1998 = vunpack.c.l.b16 %v859
    %v1999 = vunpack.c.h.b16 %v859
    %v2000 = vunpack.c.l.b16 %v860
    %v2001 = vunpack.c.h.b16 %v860
    %v2002 = vunpack.c.l.b16 %v861
    %v2003 = vunpack.c.h.b16 %v861
    %v2004 = vunpack.c.l.b16 %v862
    %v2005 = vunpack.c.h.b16 %v862
    %v2006 = vunpack.c.l.b16 %v863
    %v2007 = vunpack.c.h.b16 %v863
    %v2008 = vunpack.c.l.b16 %v864
    %v2009 = vunpack.c.h.b16 %v864
    %v2010 = vunpack.c.l.b16 %v865
    %v2011 = vunpack.c.h.b16 %v865
    %v2012 = vunpack.c.l.b16 %v866
    %v2013 = vunpack.c.h.b16 %v866
    %v2014 = vunpack.c.l.b16 %v867
    %v2015 = vunpack.c.h.b16 %v867
    %v2016 = vunpack.c.l.b16 %v868
    %v2017 = vunpack.c.h.b16 %v868
    %v2018 = vunpack.c.l.b16 %v869
    %v2019 = vunpack.c.h.b16 %v869
    %v2020 = vunpack.c.l.b16 %v870
    %v2021 = vunpack.c.h.b16 %v870
    %v2022 = vunpack.c.l.b16 %v871
    %v2023 = vunpack.c.h.b16 %v871
    %v2024 = vunpack.c.l.b16 %v872
    %v2025 = vunpack.c.h.b16 %v872
    %v2026 = vunpack.c.l.b16 %v873
    %v2027 = vunpack.c.h.b16 %v873
    %v2028 = vunpack.c.l.b16 %v874
    %v2029 = vunpack.c.h.b16 %v874
    %v2030 = vunpack.c.l.b16 %v875
    %v2031 = vunpack.c.h.b16 %v875
    %v2032 = vunpack.c.l.b16 %v876
    %v2033 = vunpack.c.h.b16 %v876
    %v2034 = vunpack.c.l.b16 %v877
    %v2035 = vunpack.c.h.b16 %v877
    %v2036 = vunpack.c.l.b16 %v878
    %v2037 = vunpack.c.h.b16 %v878
    %v2038 = vunpack.c.l.b16 %v879
    %v2039 = vunpack.c.h.b16 %v879
    %v2040 = vunpack.c.l.b16 %v880
    %v2041 = vunpack.c.h.b16 %v880
    %v2042 = vunpack.c.l.b16 %v881
    %v2043 = vunpack.c.h.b16 %v881
    %v2044 = vunpack.c.l.b16 %v882
    %v2045 = vunpack.c.h.b16 %v882
    %v2046 = vunpack.c.l.b16 %v883
    %v2047 = vunpack.c.h.b16 %v883
    %v2048 = vunpack.c.l.b16 %v884
    %v2049 = vunpack.c.h.b16 %v884
    %v2050 = vunpack.c.l.b16 %v885
    %v2051 = vunpack.c.h.b16 %v885
    %v2052 = vunpack.c.l.b16 %v886
    %v2053 = vunpack.c.h.b16 %v886
    %v2054 = vunpack.c.l.b16 %v887
    %v2055 = vunpack.c.h.b16 %v887
    %v2056 = vunpack.c.l.b16 %v888
    %v2057 = vunpack.c.h.b16 %v888
    %v2058 = vunpack.c.l.b16 %v889
    %v2059 = vunpack.c.h.b16 %v889
    %v2060 = vunpack.c.l.b16 %v890
    %v2061 = vunpack.c.h.b16 %v890
    %v2062 = vunpack.c.l.b16 %v891
    %v2063 = vunpack.c.h.b16 %v891
    %v2064 = vunpack.c.l.b16 %v892
    %v2065 = vunpack.c.h.b16 %v892
    %v2066 = vunpack.c.l.b16 %v893
    %v2067 = vunpack.c.h.b16 %v893
    %v2068 = vunpack.c.l.b16 %v894
    %v2069 = vunpack.c.h.b16 %v894
    %v2070 = vunpack.c.l.b16 %v895
    %v2071 = vunpack.c.h.b16 %v895
    %v2072 = vunpack.c.l.b16 %v896
    %v2073 = vunpack.c.h.b16 %v896
    %v2074 = vunpack.c.l.b16 %v897
    %v2075 = vunpack.c.h.b16 %v897
    %v2076 = vunpack.c.l.b16 %v898
    %v2077 = vunpack.c.h.b16 %v898
    %v2078 = vunpack.c.l.b16 %v899
    %v2079 = vunpack.c.h.b16 %v899
    %v2080 = vunpack.c.l.b16 %v900
    %v2081 = vunpack.c.h.b16 %v900
    %v2082 = vunpack.c.l.b16 %v901
    %v2083 = vunpack.c.h.b16 %v901
    %v2084 = vunpack.c.l.b16 %v902
    %v2085 = vunpack.c.h.b16 %v902
    %v2086 = vunpack.c.l.b16 %v903
    %v2087 = vunpack.c.h.b16 %v903
    %v2088 = vunpack.c.l.b16 %v904
    %v2089 = vunpack.c.h.b16 %v904
    %v2090 = vunpack.c.l.b16 %v905
    %v2091 = vunpack.c.h.b16 %v905
    %v2092 = vunpack.c.l.b16 %v906
    %v2093 = vunpack.c.h.b16 %v906
    %v2094 = vunpack.c.l.b16 %v907
    %v2095 = vunpack.c.h.b16 %v907
    %v2096 = vunpack.c.l.b16 %v908
    %v2097 = vunpack.c.h.b16 %v908
    %v2098 = vunpack.c.l.b16 %v909
    %v2099 = vunpack.c.h.b16 %v909
    %v2100 = vunpack.c.l.b16 %v910
    %v2101 = vunpack.c.h.b16 %v910
    %v2102 = vunpack.c.l.b16 %v911
    %v2103 = vunpack.c.h.b16 %v911
    %v2104 = vunpack.c.l.b16 %v912
    %v2105 = vunpack.c.h.b16 %v912
    %v2106 = vunpack.c.l.b16 %v913
    %v2107 = vunpack.c.h.b16 %v913
    %v2108 = vunpack.c.l.b16 %v914
    %v2109 = vunpack.c.h.b16 %v914
    %v2110 = vunpack.c.l.b16 %v915
    %v2111 = vunpack.c.h.b16 %v915
    %v2112 = vunpack.c.l.b16 %v916
    %v2113 = vunpack.c.h.b16 %v916
    %v2114 = vunpack.c.l.b16 %v917
    %v2115 = vunpack.c.h.b16 %v917
    %v2116 = vunpack.c.l.b16 %v918
    %v2117 = vunpack.c.h.b16 %v918
    %v2118 = vunpack.c.l.b16 %v919
    %v2119 = vunpack.c.h.b16 %v919
    %v2120 = vunpack.c.l.b16 %v920
    %v2121 = vunpack.c.h.b16 %v920
    %v2122 = vunpack.c.l.b16 %v921
    %v2123 = vunpack.c.h.b16 %v921
    %v2124 = vunpack.c.l.b16 %v922
    %v2125 = vunpack.c.h.b16 %v922
    %v2126 = vunpack.c.l.b16 %v923
    %v2127 = vunpack.c.h.b16 %v923
    %v2128 = vunpack.c.l.b16 %v924
    %v2129 = vunpack.c.h.b16 %v924
    %v2130 = vunpack.c.l.b16 %v925
    %v2131 = vunpack.c.h.b16 %v925
    %v2132 = vunpack.c.l.b16 %v926
    %v2133 = vunpack.c.h.b16 %v926
    %v2134 = vunpack.c.l.b16 %v927
    %v2135 = vunpack.c.h.b16 %v927
    %v2136 = vunpack.c.l.b16 %v928
    %v2137 = vunpack.c.h.b16 %v928
    %v2138 = vunpack.c.l.b16 %v929
    %v2139 = vunpack.c.h.b16 %v929
    %v2140 = vunpack.c.l.b16 %v930
    %v2141 = vunpack.c.h.b16 %v930
    %v2142 = vunpack.c.l.b16 %v931
    %v2143 = vunpack.c.h.b16 %v931
    %v2144 = vunpack.c.l.b16 %v932
    %v2145 = vunpack.c.h.b16 %v932
    %v2146 = vunpack.c.l.b16 %v933
    %v2147 = vunpack.c.h.b16 %v933
    %v2148 = vunpack.c.l.b16 %v934
    %v2149 = vunpack.c.h.b16 %v934
    %v2150 = vunpack.c.l.b16 %v935
    %v2151 = vunpack.c.h.b16 %v935
    %v2152 = vunpack.c.l.b16 %v936
    %v2153 = vunpack.c.h.b16 %v936
    %v2154 = vunpack.c.l.b16 %v937
    %v2155 = vunpack.c.h.b16 %v937
    %v2156 = vunpack.c.l.b16 %v938
    %v2157 = vunpack.c.h.b16 %v938
    %v2158 = vunpack.c.l.b16 %v939
    %v2159 = vunpack.c.h.b16 %v939
    %v2160 = vunpack.c.l.b16 %v940
    %v2161 = vunpack.c.h.b16 %v940
    %v2162 = vunpack.c.l.b16 %v941
    %v2163 = vunpack.c.h.b16 %v941
    %v2164 = vunpack.c.l.b16 %v942
    %v2165 = vunpack.c.h.b16 %v942
    %v2166 = vunpack.c.l.b16 %v943
    %v2167 = vunpack.c.h.b16 %v943
    %v2168 = vunpack.c.l.b16 %v944
    %v2169 = vunpack.c.h.b16 %v944
    %v2170 = vunpack.c.l.b16 %v945
    %v2171 = vunpack.c.h.b16 %v945
    %v2172 = vunpack.c.l.b16 %v946
    %v2173 = vunpack.c.h.b16 %v946
    %v2174 = vunpack.c.l.b16 %v947
    %v2175 = vunpack.c.h.b16 %v947
    %v2176 = vunpack.c.l.b16 %v948
    %v2177 = vunpack.c.h.b16 %v948
    %v2178 = vunpack.c.l.b16 %v949
    %v2179 = vunpack.c.h.b16 %v949
    %v2180 = vunpack.c.l.b16 %v950
    %v2181 = vunpack.c.h.b16 %v950
    %v2182 = vunpack.c.l.b16 %v951
    %v2183 = vunpack.c.h.b16 %v951
    %v2184 = vunpack.c.l.b16 %v952
    %v2185 = vunpack.c.h.b16 %v952
    %v2186 = vunpack.c.l.b16 %v953
    %v2187 = vunpack.c.h.b16 %v953
    %v2188 = vunpack.c.l.b16 %v954
    %v2189 = vunpack.c.h.b16 %v954
    %v2190 = vunpack.c.l.b16 %v955
    %v2191 = vunpack.c.h.b16 %v955
    %v2192 = vunpack.c.l.b16 %v956
    %v2193 = vunpack.c.h.b16 %v956
    %v2194 = vunpack.c.l.b16 %v957
    %v2195 = vunpack.c.h.b16 %v957
    %v2196 = vunpack.c.l.b16 %v958
    %v2197 = vunpack.c.h.b16 %v958
    %v2198 = vunpack.c.l.b16 %v959
    %v2199 = vunpack.c.h.b16 %v959
    %v2200 = vunpack.c.l.b16 %v960
    %v2201 = vunpack.c.h.b16 %v960
    %v2202 = vunpack.c.l.b16 %v961
    %v2203 = vunpack.c.h.b16 %v961
    %v2204 = vunpack.c.l.b16 %v962
    %v2205 = vunpack.c.h.b16 %v962
    %v2206 = vunpack.c.l.b16 %v963
    %v2207 = vunpack.c.h.b16 %v963
    %v2208 = vunpack.c.l.b16 %v964
    %v2209 = vunpack.c.h.b16 %v964
    %v2210 = vunpack.c.l.b16 %v965
    %v2211 = vunpack.c.h.b16 %v965
    %v2212 = vunpack.c.l.b16 %v966
    %v2213 = vunpack.c.h.b16 %v966
    %v2214 = vunpack.c.l.b16 %v967
    %v2215 = vunpack.c.h.b16 %v967
    %v2216 = vunpack.c.l.b16 %v968
    %v2217 = vunpack.c.h.b16 %v968
    %v2218 = vunpack.c.l.b16 %v969
    %v2219 = vunpack.c.h.b16 %v969
    %v2220 = vunpack.c.l.b16 %v970
    %v2221 = vunpack.c.h.b16 %v970
    %v2222 = vunpack.c.l.b16 %v971
    %v2223 = vunpack.c.h.b16 %v971
    %v2224 = vunpack.c.l.b16 %v972
    %v2225 = vunpack.c.h.b16 %v972
    %v2226 = vunpack.c.l.b16 %v973
    %v2227 = vunpack.c.h.b16 %v973
    %v2228 = vunpack.c.l.b16 %v974
    %v2229 = vunpack.c.h.b16 %v974
    %v2230 = vunpack.c.l.b16 %v975
    %v2231 = vunpack.c.h.b16 %v975
    %v2232 = vunpack.c.l.b16 %v976
    %v2233 = vunpack.c.h.b16 %v976
    %v2234 = vunpack.c.l.b16 %v977
    %v2235 = vunpack.c.h.b16 %v977
    %v2236 = vunpack.c.l.b16 %v978
    %v2237 = vunpack.c.h.b16 %v978
    %v2238 = vunpack.c.l.b16 %v979
    %v2239 = vunpack.c.h.b16 %v979
    %v2240 = vunpack.c.l.b16 %v980
    %v2241 = vunpack.c.h.b16 %v980
    %v2242 = vunpack.c.l.b16 %v981
    %v2243 = vunpack.c.h.b16 %v981
    %v2244 = vunpack.c.l.b16 %v982
    %v2245 = vunpack.c.h.b16 %v982
    %v2246 = vunpack.c.l.b16 %v983
    %v2247 = vunpack.c.h.b16 %v983
    %v2248 = vunpack.c.l.b16 %v984
    %v2249 = vunpack.c.h.b16 %v984
    %v2250 = vunpack.c.l.b16 %v985
    %v2251 = vunpack.c.h.b16 %v985
    %v2252 = vunpack.c.l.b16 %v986
    %v2253 = vunpack.c.h.b16 %v986
    %v2254 = vunpack.c.l.b16 %v987
    %v2255 = vunpack.c.h.b16 %v987
    %v2256 = vunpack.c.l.b16 %v988
    %v2257 = vunpack.c.h.b16 %v988
    %v2258 = vunpack.c.l.b16 %v989
    %v2259 = vunpack.c.h.b16 %v989
    %v2260 = vunpack.c.l.b16 %v990
    %v2261 = vunpack.c.h.b16 %v990
    %v2262 = vunpack.c.l.b16 %v991
    %v2263 = vunpack.c.h.b16 %v991
    %v2264 = vunpack.c.l.b16 %v992
    %v2265 = vunpack.c.h.b16 %v992
    %v2266 = vunpack.c.l.b16 %v993
    %v2267 = vunpack.c.h.b16 %v993
    %v2268 = vunpack.c.l.b16 %v994
    %v2269 = vunpack.c.h.b16 %v994
    %v2270 = vunpack.c.l.b16 %v995
    %v2271 = vunpack.c.h.b16 %v995
    %v2272 = vunpack.c.l.b16 %v996
    %v2273 = vunpack.c.h.b16 %v996
    %v2274 = vunpack.c.l.b16 %v997
    %v2275 = vunpack.c.h.b16 %v997
    %v2276 = vunpack.c.l.b16 %v998
    %v2277 = vunpack.c.h.b16 %v998
    %v2278 = vunpack.c.l.b16 %v999
    %v2279 = vunpack.c.h.b16 %v999
    %v2280 = vunpack.c.l.b16 %v1000
    %v2281 = vunpack.c.h.b16 %v1000
    %v2282 = vunpack.c.l.b16 %v1001
    %v2283 = vunpack.c.h.b16 %v1001
    %v2284 = vunpack.c.l.b16 %v1002
    %v2285 = vunpack.c.h.b16 %v1002
    %v2286 = vunpack.c.l.b16 %v1003
    %v2287 = vunpack.c.h.b16 %v1003
    %v2288 = vunpack.c.l.b16 %v1004
    %v2289 = vunpack.c.h.b16 %v1004
    %v2290 = vunpack.c.l.b16 %v1005
    %v2291 = vunpack.c.h.b16 %v1005
    %v2292 = vunpack.c.l.b16 %v1006
    %v2293 = vunpack.c.h.b16 %v1006
    %v2294 = vunpack.c.l.b16 %v1007
    %v2295 = vunpack.c.h.b16 %v1007
    %v2296 = vunpack.c.l.b16 %v1008
    %v2297 = vunpack.c.h.b16 %v1008
    %v2298 = vunpack.c.l.b16 %v1009
    %v2299 = vunpack.c.h.b16 %v1009
    %v2300 = vunpack.c.l.b16 %v1010
    %v2301 = vunpack.c.h.b16 %v1010
    %v2302 = vunpack.c.l.b16 %v1011
    %v2303 = vunpack.c.h.b16 %v1011
    %v2304 = vunpack.c.l.b16 %v1012
    %v2305 = vunpack.c.h.b16 %v1012
    %v2306 = vunpack.c.l.b16 %v1013
    %v2307 = vunpack.c.h.b16 %v1013
    %v2308 = vunpack.c.l.b16 %v1014
    %v2309 = vunpack.c.h.b16 %v1014
    %v2310 = vunpack.c.l.b16 %v1015
    %v2311 = vunpack.c.h.b16 %v1015
    %v2312 = vunpack.c.l.b16 %v1016
    %v2313 = vunpack.c.h.b16 %v1016
    %v2314 = vunpack.c.l.b16 %v1017
    %v2315 = vunpack.c.h.b16 %v1017
    %v2316 = vunpack.c.l.b16 %v1018
    %v2317 = vunpack.c.h.b16 %v1018
    %v2318 = vunpack.c.l.b16 %v1019
    %v2319 = vunpack.c.h.b16 %v1019
    %v2320 = vunpack.c.l.b16 %v1020
    %v2321 = vunpack.c.h.b16 %v1020
    %v2322 = vunpack.c.l.b16 %v1021
    %v2323 = vunpack.c.h.b16 %v1021
    %v2324 = vunpack.c.l.b16 %v1022
    %v2325 = vunpack.c.h.b16 %v1022
    %v2326 = vunpack.c.l.b16 %v1023
    %v2327 = vunpack.c.h.b16 %v1023
    %v2328 = vunpack.c.l.b16 %v1024
    %v2329 = vunpack.c.h.b16 %v1024
    %v2330 = vunpack.c.l.b16 %v1025
    %v2331 = vunpack.c.h.b16 %v1025
    %v2332 = vunpack.c.l.b16 %v1026
    %v2333 = vunpack.c.h.b16 %v1026
    %v2334 = vunpack.c.l.b16 %v1027
    %v2335 = vunpack.c.h.b16 %v1027
    %v2336 = vunpack.c.l.b16 %v1028
    %v2337 = vunpack.c.h.b16 %v1028
    %v2338 = vunpack.c.l.b16 %v1029
    %v2339 = vunpack.c.h.b16 %v1029
    %v2340 = vunpack.c.l.b16 %v1030
    %v2341 = vunpack.c.h.b16 %v1030
    %v2342 = vunpack.c.l.b16 %v1031
    %v2343 = vunpack.c.h.b16 %v1031
    %v2344 = vunpack.c.l.b16 %v1032
    %v2345 = vunpack.c.h.b16 %v1032
    %v2346 = vunpack.c.l.b16 %v1033
    %v2347 = vunpack.c.h.b16 %v1033
    %v2348 = vunpack.c.l.b16 %v1034
    %v2349 = vunpack.c.h.b16 %v1034
    %v2350 = vunpack.c.l.b16 %v1035
    %v2351 = vunpack.c.h.b16 %v1035
    %v2352 = vunpack.c.l.b16 %v1036
    %v2353 = vunpack.c.h.b16 %v1036
    %v2354 = vunpack.c.l.b16 %v1037
    %v2355 = vunpack.c.h.b16 %v1037
    %v2356 = vunpack.c.l.b16 %v1038
    %v2357 = vunpack.c.h.b16 %v1038
    %v2358 = vunpack.c.l.b16 %v1039
    %v2359 = vunpack.c.h.b16 %v1039
    %v2360 = vunpack.c.l.b16 %v1040
    %v2361 = vunpack.c.h.b16 %v1040
    %v2362 = vunpack.c.l.b16 %v1041
    %v2363 = vunpack.c.h.b16 %v1041
    %v2364 = vunpack.c.l.b16 %v1042
    %v2365 = vunpack.c.h.b16 %v1042
    %v2366 = vunpack.c.l.b16 %v1043
    %v2367 = vunpack.c.h.b16 %v1043
    %v2368 = vunpack.c.l.b16 %v1044
    %v2369 = vunpack.c.h.b16 %v1044
    %v2370 = vunpack.c.l.b16 %v1045
    %v2371 = vunpack.c.h.b16 %v1045
    %v2372 = vunpack.c.l.b16 %v1046
    %v2373 = vunpack.c.h.b16 %v1046
    %v2374 = vunpack.c.l.b16 %v1047
    %v2375 = vunpack.c.h.b16 %v1047
    %v2376 = vunpack.c.l.b16 %v1048
    %v2377 = vunpack.c.h.b16 %v1048
    %v2378 = vunpack.c.l.b16 %v1049
    %v2379 = vunpack.c.h.b16 %v1049
    %v2380 = vunpack.c.l.b16 %v1050
    %v2381 = vunpack.c.h.b16 %v1050
    %v2382 = vunpack.c.l.b16 %v1051
    %v2383 = vunpack.c.h.b16 %v1051
    %v2384 = vunpack.c.l.b16 %v1052
    %v2385 = vunpack.c.h.b16 %v1052
    %v2386 = vunpack.c.l.b16 %v1053
    %v2387 = vunpack.c.h.b16 %v1053
    %v2388 = vunpack.c.l.b16 %v1054
    %v2389 = vunpack.c.h.b16 %v1054
    %v2390 = vunpack.c.l.b16 %v1055
    %v2391 = vunpack.c.h.b16 %v1055
    %v2392 = vunpack.c.l.b16 %v1056
    %v2393 = vunpack.c.h.b16 %v1056
    %v2394 = vunpack.c.l.b16 %v1057
    %v2395 = vunpack.c.h.b16 %v1057
    %v2396 = vunpack.c.l.b16 %v1058
    %v2397 = vunpack.c.h.b16 %v1058
    %v2398 = vunpack.c.l.b16 %v1059
    %v2399 = vunpack.c.h.b16 %v1059
    %v2400 = vunpack.c.l.b16 %v1060
    %v2401 = vunpack.c.h.b16 %v1060
    %v2402 = vunpack.c.l.b16 %v1061
    %v2403 = vunpack.c.h.b16 %v1061
    %v2404 = vunpack.c.l.b16 %v1062
    %v2405 = vunpack.c.h.b16 %v1062
    %v2406 = vunpack.c.l.b16 %v1063
    %v2407 = vunpack.c.h.b16 %v1063
    %v2408 = vunpack.c.l.b16 %v1064
    %v2409 = vunpack.c.h.b16 %v1064
    %v2410 = vunpack.c.l.b16 %v1065
    %v2411 = vunpack.c.h.b16 %v1065
    %v2412 = vunpack.c.l.b16 %v1066
    %v2413 = vunpack.c.h.b16 %v1066
    %v2414 = vunpack.c.l.b16 %v1067
    %v2415 = vunpack.c.h.b16 %v1067
    %v2416 = vunpack.c.l.b16 %v1068
    %v2417 = vunpack.c.h.b16 %v1068
    %v2418 = vunpack.c.l.b16 %v1069
    %v2419 = vunpack.c.h.b16 %v1069
    %v2420 = vunpack.c.l.b16 %v1070
    %v2421 = vunpack.c.h.b16 %v1070
    %v2422 = vunpack.c.l.b16 %v1071
    %v2423 = vunpack.c.h.b16 %v1071
    %v2424 = vunpack.c.l.b16 %v1072
    %v2425 = vunpack.c.h.b16 %v1072
    %v2426 = vunpack.c.l.b16 %v1073
    %v2427 = vunpack.c.h.b16 %v1073
    %v2428 = vunpack.c.l.b16 %v1074
    %v2429 = vunpack.c.h.b16 %v1074
    %v2430 = vunpack.c.l.b16 %v1075
    %v2431 = vunpack.c.h.b16 %v1075
    %v2432 = vunpack.c.l.b16 %v1076
    %v2433 = vunpack.c.h.b16 %v1076
    %v2434 = vunpack.c.l.b16 %v1077
    %v2435 = vunpack.c.h.b16 %v1077
    %v2436 = vunpack.c.l.b16 %v1078
    %v2437 = vunpack.c.h.b16 %v1078
    %v2438 = vunpack.c.l.b16 %v1079
    %v2439 = vunpack.c.h.b16 %v1079
    %v2440 = vunpack.c.l.b16 %v1080
    %v2441 = vunpack.c.h.b16 %v1080
    %v2442 = vunpack.c.l.b16 %v1081
    %v2443 = vunpack.c.h.b16 %v1081
    %v2444 = vunpack.c.l.b16 %v1082
    %v2445 = vunpack.c.h.b16 %v1082
    %v2446 = vunpack.c.l.b16 %v1083
    %v2447 = vunpack.c.h.b16 %v1083
    %v2448 = vunpack.c.l.b16 %v1084
    %v2449 = vunpack.c.h.b16 %v1084
    %v2450 = vunpack.c.l.b16 %v1085
    %v2451 = vunpack.c.h.b16 %v1085
    %v2452 = vunpack.c.l.b16 %v1086
    %v2453 = vunpack.c.h.b16 %v1086
    %v2454 = vunpack.c.l.b16 %v1087
    %v2455 = vunpack.c.h.b16 %v1087
    %v2456 = vunpack.c.l.b16 %v1088
    %v2457 = vunpack.c.h.b16 %v1088
    %v2458 = vunpack.c.l.b16 %v1089
    %v2459 = vunpack.c.h.b16 %v1089
    %v2460 = vunpack.c.l.b16 %v1090
    %v2461 = vunpack.c.h.b16 %v1090
    %v2462 = vunpack.c.l.b16 %v1091
    %v2463 = vunpack.c.h.b16 %v1091
    %v2464 = vunpack.c.l.b16 %v1092
    %v2465 = vunpack.c.h.b16 %v1092
    %v2466 = vunpack.c.l.b16 %v1093
    %v2467 = vunpack.c.h.b16 %v1093
    %v2468 = vunpack.c.l.b16 %v1094
    %v2469 = vunpack.c.h.b16 %v1094
    %v2470 = vunpack.c.l.b16 %v1095
    %v2471 = vunpack.c.h.b16 %v1095
    %v2472 = vunpack.c.l.b16 %v1096
    %v2473 = vunpack.c.h.b16 %v1096
    %v2474 = vunpack.c.l.b16 %v1097
    %v2475 = vunpack.c.h.b16 %v1097
    %v2476 = vunpack.c.l.b16 %v1098
    %v2477 = vunpack.c.h.b16 %v1098
    %v2478 = vunpack.c.l.b16 %v1099
    %v2479 = vunpack.c.h.b16 %v1099
    %v2480 = vunpack.c.l.b16 %v1100
    %v2481 = vunpack.c.h.b16 %v1100
    %v2482 = vunpack.c.l.b16 %v1101
    %v2483 = vunpack.c.h.b16 %v1101
    %v2484 = vunpack.c.l.b16 %v1102
    %v2485 = vunpack.c.h.b16 %v1102
    %v2486 = vunpack.c.l.b16 %v1103
    %v2487 = vunpack.c.h.b16 %v1103
    %v2488 = vunpack.c.l.b16 %v1104
    %v2489 = vunpack.c.h.b16 %v1104
    %v2490 = vunpack.c.l.b16 %v1105
    %v2491 = vunpack.c.h.b16 %v1105
    %v2492 = vunpack.c.l.b16 %v1106
    %v2493 = vunpack.c.h.b16 %v1106
    %v2494 = vunpack.c.l.b16 %v1107
    %v2495 = vunpack.c.h.b16 %v1107
    %v2496 = vunpack.c.l.b16 %v1108
    %v2497 = vunpack.c.h.b16 %v1108
    %v2498 = vunpack.c.l.b16 %v1109
    %v2499 = vunpack.c.h.b16 %v1109
    %v2500 = vunpack.c.l.b16 %v1110
    %v2501 = vunpack.c.h.b16 %v1110
    %v2502 = vunpack.c.l.b16 %v1111
    %v2503 = vunpack.c.h.b16 %v1111
    %v2504 = vunpack.c.l.b16 %v1112
    %v2505 = vunpack.c.h.b16 %v1112
    %v2506 = vunpack.c.l.b16 %v1113
    %v2507 = vunpack.c.h.b16 %v1113
    %v2508 = vunpack.c.l.b16 %v1114
    %v2509 = vunpack.c.h.b16 %v1114
    %v2510 = vunpack.c.l.b16 %v1115
    %v2511 = vunpack.c.h.b16 %v1115
    %v2512 = vunpack.c.l.b16 %v1116
    %v2513 = vunpack.c.h.b16 %v1116
    %v2514 = vunpack.c.l.b16 %v1117
    %v2515 = vunpack.c.h.b16 %v1117
    %v2516 = vunpack.c.l.b16 %v1118
    %v2517 = vunpack.c.h.b16 %v1118
    %v2518 = vunpack.c.l.b16 %v1119
    %v2519 = vunpack.c.h.b16 %v1119
    %v2520 = vunpack.c.l.b16 %v1120
    %v2521 = vunpack.c.h.b16 %v1120
    %v2522 = vunpack.c.l.b16 %v1121
    %v2523 = vunpack.c.h.b16 %v1121
    %v2524 = vunpack.c.l.b16 %v1122
    %v2525 = vunpack.c.h.b16 %v1122
    %v2526 = vunpack.c.l.b16 %v1123
    %v2527 = vunpack.c.h.b16 %v1123
    %v2528 = vunpack.c.l.b16 %v1124
    %v2529 = vunpack.c.h.b16 %v1124
    %v2530 = vunpack.c.l.b16 %v1125
    %v2531 = vunpack.c.h.b16 %v1125
    %v2532 = vunpack.c.l.b16 %v1126
    %v2533 = vunpack.c.h.b16 %v1126
    %v2534 = vunpack.c.l.b16 %v1127
    %v2535 = vunpack.c.h.b16 %v1127
    %v2536 = vunpack.c.l.b16 %v1128
    %v2537 = vunpack.c.h.b16 %v1128
    %v2538 = vunpack.c.l.b16 %v1129
    %v2539 = vunpack.c.h.b16 %v1129
    %v2540 = vunpack.c.l.b16 %v1130
    %v2541 = vunpack.c.h.b16 %v1130
    %v2542 = vunpack.c.l.b16 %v1131
    %v2543 = vunpack.c.h.b16 %v1131
    %v2544 = vunpack.c.l.b16 %v1132
    %v2545 = vunpack.c.h.b16 %v1132
    %v2546 = vunpack.c.l.b16 %v1133
    %v2547 = vunpack.c.h.b16 %v1133
    %v2548 = vunpack.c.l.b16 %v1134
    %v2549 = vunpack.c.h.b16 %v1134
    %v2550 = vunpack.c.l.b16 %v1135
    %v2551 = vunpack.c.h.b16 %v1135
    %v2552 = vunpack.c.l.b16 %v1136
    %v2553 = vunpack.c.h.b16 %v1136
    %v2554 = vunpack.c.l.b16 %v1137
    %v2555 = vunpack.c.h.b16 %v1137
    %v2556 = vunpack.c.l.b16 %v1138
    %v2557 = vunpack.c.h.b16 %v1138
    %v2558 = vunpack.c.l.b16 %v1139
    %v2559 = vunpack.c.h.b16 %v1139
    %v2560 = vunpack.c.l.b16 %v1140
    %v2561 = vunpack.c.h.b16 %v1140
    %v2562 = vunpack.c.l.b16 %v1141
    %v2563 = vunpack.c.h.b16 %v1141
    %v2564 = vunpack.c.l.b16 %v1142
    %v2565 = vunpack.c.h.b16 %v1142
    %v2566 = vunpack.c.l.b16 %v1143
    %v2567 = vunpack.c.h.b16 %v1143
    %v2568 = vunpack.c.l.b16 %v1144
    %v2569 = vunpack.c.h.b16 %v1144
    %v2570 = vunpack.c.l.b16 %v1145
    %v2571 = vunpack.c.h.b16 %v1145
    %v2572 = vunpack.c.l.b16 %v1146
    %v2573 = vunpack.c.h.b16 %v1146
    %v2574 = vunpack.c.l.b16 %v1147
    %v2575 = vunpack.c.h.b16 %v1147
    %v2576 = vunpack.c.l.b16 %v1148
    %v2577 = vunpack.c.h.b16 %v1148
    %v2578 = vunpack.c.l.b16 %v1149
    %v2579 = vunpack.c.h.b16 %v1149
    %v2580 = vunpack.c.l.b16 %v1150
    %v2581 = vunpack.c.h.b16 %v1150
    %v2582 = vunpack.c.l.b16 %v1151
    %v2583 = vunpack.c.h.b16 %v1151
    %v2584 = vunpack.c.l.b16 %v1152
    %v2585 = vunpack.c.h.b16 %v1152
    %v2586 = vunpack.c.l.b16 %v1153
    %v2587 = vunpack.c.h.b16 %v1153
    %v2588 = vunpack.c.l.b16 %v1154
    %v2589 = vunpack.c.h.b16 %v1154
    %v2590 = vunpack.c.l.b16 %v1155
    %v2591 = vunpack.c.h.b16 %v1155
    %v2592 = vunpack.c.l.b16 %v1156
    %v2593 = vunpack.c.h.b16 %v1156
    %v2594 = vunpack.c.l.b16 %v1157
    %v2595 = vunpack.c.h.b16 %v1157
    %v2596 = vunpack.c.l.b16 %v1158
    %v2597 = vunpack.c.h.b16 %v1158
    %v2598 = vunpack.c.l.b16 %v1159
    %v2599 = vunpack.c.h.b16 %v1159
    %v2600 = vunpack.c.l.b16 %v1160
    %v2601 = vunpack.c.h.b16 %v1160
    %v2602 = vunpack.c.l.b16 %v1161
    %v2603 = vunpack.c.h.b16 %v1161
    %v2604 = vunpack.c.l.b16 %v1162
    %v2605 = vunpack.c.h.b16 %v1162
    %v2606 = vunpack.c.l.b16 %v1163
    %v2607 = vunpack.c.h.b16 %v1163
    %v2608 = vunpack.c.l.b16 %v1164
    %v2609 = vunpack.c.h.b16 %v1164
    %v2610 = vunpack.c.l.b16 %v1165
    %v2611 = vunpack.c.h.b16 %v1165
    %v2612 = vunpack.c.l.b16 %v1166
    %v2613 = vunpack.c.h.b16 %v1166
    %v2614 = vunpack.c.l.b16 %v1167
    %v2615 = vunpack.c.h.b16 %v1167
    %v2616 = vunpack.c.l.b16 %v1168
    %v2617 = vunpack.c.h.b16 %v1168
    %v2618 = vunpack.c.l.b16 %v1169
    %v2619 = vunpack.c.h.b16 %v1169
    %v2620 = vunpack.c.l.b16 %v1170
    %v2621 = vunpack.c.h.b16 %v1170
    %v2622 = vunpack.c.l.b16 %v1171
    %v2623 = vunpack.c.h.b16 %v1171
    %v2624 = vunpack.c.l.b16 %v1172
    %v2625 = vunpack.c.h.b16 %v1172
    %v2626 = vunpack.c.l.b16 %v1173
    %v2627 = vunpack.c.h.b16 %v1173
    %v2628 = vunpack.c.l.b16 %v1174
    %v2629 = vunpack.c.h.b16 %v1174
    %v2630 = vunpack.c.l.b16 %v1175
    %v2631 = vunpack.c.h.b16 %v1175
    %v2632 = vunpack.c.l.b16 %v1176
    %v2633 = vunpack.c.h.b16 %v1176
    %v2634 = vunpack.c.l.b16 %v1177
    %v2635 = vunpack.c.h.b16 %v1177
    %v2636 = vunpack.c.l.b16 %v1178
    %v2637 = vunpack.c.h.b16 %v1178
    %v2638 = vunpack.c.l.b16 %v1179
    %v2639 = vunpack.c.h.b16 %v1179
    %v2640 = vunpack.c.l.b16 %v1180
    %v2641 = vunpack.c.h.b16 %v1180
    %v2642 = vunpack.c.l.b16 %v1181
    %v2643 = vunpack.c.h.b16 %v1181
    %v2644 = vunpack.c.l.b16 %v1182
    %v2645 = vunpack.c.h.b16 %v1182
    %v2646 = vunpack.c.l.b16 %v1183
    %v2647 = vunpack.c.h.b16 %v1183
    %v2648 = vunpack.c.l.b16 %v1184
    %v2649 = vunpack.c.h.b16 %v1184
    %v2650 = vunpack.c.l.b16 %v1185
    %v2651 = vunpack.c.h.b16 %v1185
    %v2652 = vunpack.c.l.b16 %v1186
    %v2653 = vunpack.c.h.b16 %v1186
    %v2654 = vunpack.c.l.b16 %v1187
    %v2655 = vunpack.c.h.b16 %v1187
    %v2656 = vunpack.c.l.b16 %v1188
    %v2657 = vunpack.c.h.b16 %v1188
    %v2658 = vunpack.c.l.b16 %v1189
    %v2659 = vunpack.c.h.b16 %v1189
    %v2660 = vunpack.c.l.b16 %v1190
    %v2661 = vunpack.c.h.b16 %v1190
    %v2662 = vunpack.c.l.b16 %v1191
    %v2663 = vunpack.c.h.b16 %v1191
    %v2664 = vunpack.c.l.b16 %v1192
    %v2665 = vunpack.c.h.b16 %v1192
    %v2666 = vunpack.c.l.b16 %v1193
    %v2667 = vunpack.c.h.b16 %v1193
    %v2668 = vunpack.c.l.b16 %v1194
    %v2669 = vunpack.c.h.b16 %v1194
    %v2670 = vunpack.c.l.b16 %v1195
    %v2671 = vunpack.c.h.b16 %v1195
    %v2672 = vunpack.c.l.b16 %v1196
    %v2673 = vunpack.c.h.b16 %v1196
    %v2674 = vunpack.c.l.b16 %v1197
    %v2675 = vunpack.c.h.b16 %v1197
    %v2676 = vunpack.c.l.b16 %v1198
    %v2677 = vunpack.c.h.b16 %v1198
    %v2678 = vunpack.c.l.b16 %v1199
    %v2679 = vunpack.c.h.b16 %v1199
    %v2680 = vunpack.c.l.b16 %v1200
    %v2681 = vunpack.c.h.b16 %v1200
    %v2682 = vunpack.c.l.b16 %v1201
    %v2683 = vunpack.c.h.b16 %v1201
    %v2684 = vunpack.c.l.b16 %v1202
    %v2685 = vunpack.c.h.b16 %v1202
    %v2686 = vunpack.c.l.b16 %v1203
    %v2687 = vunpack.c.h.b16 %v1203
    %v2688 = vunpack.c.l.b16 %v1204
    %v2689 = vunpack.c.h.b16 %v1204
    %v2690 = vunpack.c.l.b16 %v1205
    %v2691 = vunpack.c.h.b16 %v1205
    %v2692 = vunpack.c.l.b16 %v1206
    %v2693 = vunpack.c.h.b16 %v1206
    %v2694 = vunpack.c.l.b16 %v1207
    %v2695 = vunpack.c.h.b16 %v1207
    %v2696 = vunpack.c.l.b16 %v1208
    %v2697 = vunpack.c.h.b16 %v1208
    %v2698 = vunpack.c.l.b16 %v1209
    %v2699 = vunpack.c.h.b16 %v1209
    %v2700 = vunpack.c.l.b16 %v1210
    %v2701 = vunpack.c.h.b16 %v1210
    %v2702 = vunpack.c.l.b16 %v1211
    %v2703 = vunpack.c.h.b16 %v1211
    %v2704 = vunpack.c.l.b16 %v1212
    %v2705 = vunpack.c.h.b16 %v1212
    %v2706 = vunpack.c.l.b16 %v1213
    %v2707 = vunpack.c.h.b16 %v1213
    %v2708 = vunpack.c.l.b16 %v1214
    %v2709 = vunpack.c.h.b16 %v1214
    %v2710 = vunpack.c.l.b16 %v1215
    %v2711 = vunpack.c.h.b16 %v1215
    %v2712 = vunpack.c.l.b16 %v1216
    %v2713 = vunpack.c.h.b16 %v1216
    %v2714 = vunpack.c.l.b16 %v1217
    %v2715 = vunpack.c.h.b16 %v1217
    %v2716 = vunpack.c.l.b16 %v1218
    %v2717 = vunpack.c.h.b16 %v1218
    %v2718 = vunpack.c.l.b16 %v1219
    %v2719 = vunpack.c.h.b16 %v1219
    %v2720 = vunpack.c.l.b16 %v1220
    %v2721 = vunpack.c.h.b16 %v1220
    %v2722 = vunpack.c.l.b16 %v1221
    %v2723 = vunpack.c.h.b16 %v1221
    %v2724 = vunpack.c.l.b16 %v1222
    %v2725 = vunpack.c.h.b16 %v1222
    %v2726 = vunpack.c.l.b16 %v1223
    %v2727 = vunpack.c.h.b16 %v1223
    %v2728 = vunpack.c.l.b16 %v1224
    %v2729 = vunpack.c.h.b16 %v1224
    %v2730 = vunpack.c.l.b16 %v1225
    %v2731 = vunpack.c.h.b16 %v1225
    %v2732 = vunpack.c.l.b16 %v1226
    %v2733 = vunpack.c.h.b16 %v1226
    %v2734 = vunpack.c.l.b16 %v1227
    %v2735 = vunpack.c.h.b16 %v1227
    %v2736 = vunpack.c.l.b16 %v1228
    %v2737 = vunpack.c.h.b16 %v1228
    %v2738 = vunpack.c.l.b16 %v1229
    %v2739 = vunpack.c.h.b16 %v1229
    %v2740 = vunpack.c.l.b16 %v1230
    %v2741 = vunpack.c.h.b16 %v1230
    %v2742 = vunpack.c.l.b16 %v1231
    %v2743 = vunpack.c.h.b16 %v1231
    %v2744 = vunpack.c.l.b16 %v1232
    %v2745 = vunpack.c.h.b16 %v1232
    %v2746 = vunpack.c.l.b16 %v1233
    %v2747 = vunpack.c.h.b16 %v1233
    %v2748 = vunpack.c.l.b16 %v1234
    %v2749 = vunpack.c.h.b16 %v1234
    %v2750 = vunpack.c.l.b16 %v1235
    %v2751 = vunpack.c.h.b16 %v1235
    %v2752 = vunpack.c.l.b16 %v1236
    %v2753 = vunpack.c.h.b16 %v1236
    %v2754 = vunpack.c.l.b16 %v1237
    %v2755 = vunpack.c.h.b16 %v1237
    %v2756 = vunpack.c.l.b16 %v1238
    %v2757 = vunpack.c.h.b16 %v1238
    %v2758 = vunpack.c.l.b16 %v1239
    %v2759 = vunpack.c.h.b16 %v1239
    %v2760 = vunpack.c.l.b16 %v1240
    %v2761 = vunpack.c.h.b16 %v1240
    %v2762 = vunpack.c.l.b16 %v1241
    %v2763 = vunpack.c.h.b16 %v1241
    %v2764 = vunpack.c.l.b16 %v1242
    %v2765 = vunpack.c.h.b16 %v1242
    %v2766 = vunpack.c.l.b16 %v1243
    %v2767 = vunpack.c.h.b16 %v1243
    %v2768 = vunpack.c.l.b16 %v1244
    %v2769 = vunpack.c.h.b16 %v1244
    %v2770 = vunpack.c.l.b16 %v1245
    %v2771 = vunpack.c.h.b16 %v1245
    %v2772 = vunpack.c.l.b16 %v1246
    %v2773 = vunpack.c.h.b16 %v1246
    %v2774 = vunpack.c.l.b16 %v1247
    %v2775 = vunpack.c.h.b16 %v1247
    %v2776 = vunpack.c.l.b16 %v1248
    %v2777 = vunpack.c.h.b16 %v1248
    %v2778 = vunpack.c.l.b16 %v1249
    %v2779 = vunpack.c.h.b16 %v1249
    %v2780 = vunpack.c.l.b16 %v1250
    %v2781 = vunpack.c.h.b16 %v1250
    %v2782 = vunpack.c.l.b16 %v1251
    %v2783 = vunpack.c.h.b16 %v1251
    %v2784 = vunpack.c.l.b16 %v1252
    %v2785 = vunpack.c.h.b16 %v1252
    %v2786 = vunpack.c.l.b16 %v1253
    %v2787 = vunpack.c.h.b16 %v1253
    %v2788 = vunpack.c.l.b16 %v1254
    %v2789 = vunpack.c.h.b16 %v1254
    %v2790 = vunpack.c.l.b16 %v1255
    %v2791 = vunpack.c.h.b16 %v1255
    %v2792 = vunpack.c.l.b16 %v1256
    %v2793 = vunpack.c.h.b16 %v1256
    %v2794 = vunpack.c.l.b16 %v1257
    %v2795 = vunpack.c.h.b16 %v1257
    %v2796 = vunpack.c.l.b16 %v1258
    %v2797 = vunpack.c.h.b16 %v1258
    %v2798 = vunpack.c.l.b16 %v1259
    %v2799 = vunpack.c.h.b16 %v1259
    %v2800 = vunpack.c.l.b16 %v1260
    %v2801 = vunpack.c.h.b16 %v1260
    %v2802 = vunpack.c.l.b16 %v1261
    %v2803 = vunpack.c.h.b16 %v1261
    %v2804 = vunpack.c.l.b16 %v1262
    %v2805 = vunpack.c.h.b16 %v1262
    %v2806 = vunpack.c.l.b16 %v1263
    %v2807 = vunpack.c.h.b16 %v1263
    %v2808 = vunpack.c.l.b16 %v1264
    %v2809 = vunpack.c.h.b16 %v1264
    %v2810 = vunpack.c.l.b16 %v1265
    %v2811 = vunpack.c.h.b16 %v1265
    %v2812 = vunpack.c.l.b16 %v1266
    %v2813 = vunpack.c.h.b16 %v1266
    %v2814 = vunpack.c.l.b16 %v1267
    %v2815 = vunpack.c.h.b16 %v1267
    %v2816 = vunpack.c.l.b16 %v1268
    %v2817 = vunpack.c.h.b16 %v1268
    %v2818 = vunpack.c.l.b16 %v1269
    %v2819 = vunpack.c.h.b16 %v1269
    %v2820 = vunpack.c.l.b16 %v1270
    %v2821 = vunpack.c.h.b16 %v1270
    %v2822 = vunpack.c.l.b16 %v1271
    %v2823 = vunpack.c.h.b16 %v1271
    %v2824 = vunpack.c.l.b16 %v1272
    %v2825 = vunpack.c.h.b16 %v1272
    %v2826 = vunpack.c.l.b16 %v1273
    %v2827 = vunpack.c.h.b16 %v1273
    %v2828 = vunpack.c.l.b16 %v1274
    %v2829 = vunpack.c.h.b16 %v1274
    %v2830 = vunpack.c.l.b16 %v1275
    %v2831 = vunpack.c.h.b16 %v1275
    %v2832 = vunpack.c.l.b16 %v1276
    %v2833 = vunpack.c.h.b16 %v1276
    %v2834 = vunpack.c.l.b16 %v1277
    %v2835 = vunpack.c.h.b16 %v1277
    %v2836 = vunpack.c.l.b16 %v1278
    %v2837 = vunpack.c.h.b16 %v1278
    %v2838 = vunpack.c.l.b16 %v1279
    %v2839 = vunpack.c.h.b16 %v1279
    %v2840 = vunpack.c.l.b16 %v1280
    %v2841 = vunpack.c.h.b16 %v1280
    %v2842 = vunpack.c.l.b16 %v1281
    %v2843 = vunpack.c.h.b16 %v1281
    %v2844 = vunpack.c.l.b16 %v1282
    %v2845 = vunpack.c.h.b16 %v1282
    %v2846 = vunpack.c.l.b16 %v1283
    %v2847 = vunpack.c.h.b16 %v1283
    %v2848 = vunpack.c.l.b16 %v1284
    %v2849 = vunpack.c.h.b16 %v1284
    %v2850 = vunpack.c.l.b16 %v1285
    %v2851 = vunpack.c.h.b16 %v1285
    %v2852 = vunpack.c.l.b16 %v1286
    %v2853 = vunpack.c.h.b16 %v1286
    %v2854 = vunpack.c.l.b16 %v1287
    %v2855 = vunpack.c.h.b16 %v1287
    %v2856 = vunpack.c.l.b16 %v1288
    %v2857 = vunpack.c.h.b16 %v1288
    %v2858 = vunpack.c.l.b16 %v1289
    %v2859 = vunpack.c.h.b16 %v1289
    %v2860 = vunpack.c.l.b16 %v1290
    %v2861 = vunpack.c.h.b16 %v1290
    %v2862 = vunpack.c.l.b16 %v1291
    %v2863 = vunpack.c.h.b16 %v1291
    %v2864 = vunpack.c.l.b16 %v1292
    %v2865 = vunpack.c.h.b16 %v1292
    %v2866 = vunpack.c.l.b16 %v1293
    %v2867 = vunpack.c.h.b16 %v1293
    %v2868 = vunpack.c.l.b16 %v1294
    %v2869 = vunpack.c.h.b16 %v1294
    %v2870 = vunpack.c.l.b16 %v1295
    %v2871 = vunpack.c.h.b16 %v1295
    %v2872 = vunpack.c.l.b16 %v1296
    %v2873 = vunpack.c.h.b16 %v1296
    %v2874 = vunpack.c.l.b16 %v1297
    %v2875 = vunpack.c.h.b16 %v1297
    %v2876 = vpack.c.b16 %v1860, %v1852
    %v2877 = vpack.c.b16 %v1861, %v1853
    %v2878 = vpack.c.b16 %v1862, %v1854
    %v2879 = vpack.c.b16 %v1863, %v1855
    %v2880 = vpack.c.b16 %v1864, %v1856
    %v2881 = vpack.c.b16 %v1865, %v1857
    %v2882 = vpack.c.b16 %v1866, %v1858
    %v2883 = vpack.c.b16 %v1867, %v1859
    %v2884 = vpack.c.b16 %v1876, %v1868
    %v2885 = vpack.c.b16 %v1877, %v1869
    %v2886 = vpack.c.b16 %v1878, %v1870
    %v2887 = vpack.c.b16 %v1879, %v1871
    %v2888 = vpack.c.b16 %v1880, %v1872
    %v2889 = vpack.c.b16 %v1881, %v1873
    %v2890 = vpack.c.b16 %v1882, %v1874
    %v2891 = vpack.c.b16 %v1883, %v1875
    %v2892 = vpack.c.b16 %v1892, %v1884
    %v2893 = vpack.c.b16 %v1893, %v1885
    %v2894 = vpack.c.b16 %v1894, %v1886
    %v2895 = vpack.c.b16 %v1895, %v1887
    %v2896 = vpack.c.b16 %v1896, %v1888
    %v2897 = vpack.c.b16 %v1897, %v1889
    %v2898 = vpack.c.b16 %v1898, %v1890
    %v2899 = vpack.c.b16 %v1899, %v1891
    %v2900 = vpack.c.b16 %v1908, %v1900
    %v2901 = vpack.c.b16 %v1909, %v1901
    %v2902 = vpack.c.b16 %v1910, %v1902
    %v2903 = vpack.c.b16 %v1911, %v1903
    %v2904 = vpack.c.b16 %v1912, %v1904
    %v2905 = vpack.c.b16 %v1913, %v1905
    %v2906 = vpack.c.b16 %v1914, %v1906
    %v2907 = vpack.c.b16 %v1915, %v1907
    %v2908 = vpack.c.b16 %v1924, %v1916
    %v2909 = vpack.c.b16 %v1925, %v1917
    %v2910 = vpack.c.b16 %v1926, %v1918
    %v2911 = vpack.c.b16 %v1927, %v1919
    %v2912 = vpack.c.b16 %v1928, %v1920
    %v2913 = vpack.c.b16 %v1929, %v1921
    %v2914 = vpack.c.b16 %v1930, %v1922
    %v2915 = vpack.c.b16 %v1931, %v1923
    %v2916 = vpack.c.b16 %v1940, %v1932
    %v2917 = vpack.c.b16 %v1941, %v1933
    %v2918 = vpack.c.b16 %v1942, %v1934
    %v2919 = vpack.c.b16 %v1943, %v1935
    %v2920 = vpack.c.b16 %v1944, %v1936
    %v2921 = vpack.c.b16 %v1945, %v1937
    %v2922 = vpack.c.b16 %v1946, %v1938
    %v2923 = vpack.c.b16 %v1947, %v1939
    %v2924 = vpack.c.b16 %v1956, %v1948
    %v2925 = vpack.c.b16 %v1957, %v1949
    %v2926 = vpack.c.b16 %v1958, %v1950
    %v2927 = vpack.c.b16 %v1959, %v1951
    %v2928 = vpack.c.b16 %v1960, %v1952
    %v2929 = vpack.c.b16 %v1961, %v1953
    %v2930 = vpack.c.b16 %v1962, %v1954
    %v2931 = vpack.c.b16 %v1963, %v1955
    %v2932 = vpack.c.b16 %v1972, %v1964
    %v2933 = vpack.c.b16 %v1973, %v1965
    %v2934 = vpack.c.b16 %v1974, %v1966
    %v2935 = vpack.c.b16 %v1975, %v1967
    %v2936 = vpack.c.b16 %v1976, %v1968
    %v2937 = vpack.c.b16 %v1977, %v1969
    %v2938 = vpack.c.b16 %v1978, %v1970
    %v2939 = vpack.c.b16 %v1979, %v1971
    %v2940 = vpack.c.b16 %v1988, %v1980
    %v2941 = vpack.c.b16 %v1989, %v1981
    %v2942 = vpack.c.b16 %v1990, %v1982
    %v2943 = vpack.c.b16 %v1991, %v1983
    %v2944 = vpack.c.b16 %v1992, %v1984
    %v2945 = vpack.c.b16 %v1993, %v1985
    %v2946 = vpack.c.b16 %v1994, %v1986
    %v2947 = vpack.c.b16 %v1995, %v1987
    %v2948 = vpack.c.b16 %v2004, %v1996
    %v2949 = vpack.c.b16 %v2005, %v1997
    %v2950 = vpack.c.b16 %v2006, %v1998
    %v2951 = vpack.c.b16 %v2007, %v1999
    %v2952 = vpack.c.b16 %v2008, %v2000
    %v2953 = vpack.c.b16 %v2009, %v2001
    %v2954 = vpack.c.b16 %v2010, %v2002
    %v2955 = vpack.c.b16 %v2011, %v2003
    %v2956 = vpack.c.b16 %v2020, %v2012
    %v2957 = vpack.c.b16 %v2021, %v2013
    %v2958 = vpack.c.b16 %v2022, %v2014
    %v2959 = vpack.c.b16 %v2023, %v2015
    %v2960 = vpack.c.b16 %v2024, %v2016
    %v2961 = vpack.c.b16 %v2025, %v2017
    %v2962 = vpack.c.b16 %v2026, %v2018
    %v2963 = vpack.c.b16 %v2027, %v2019
    %v2964 = vpack.c.b16 %v2036, %v2028
    %v2965 = vpack.c.b16 %v2037, %v2029
    %v2966 = vpack.c.b16 %v2038, %v2030
    %v2967 = vpack.c.b16 %v2039, %v2031
    %v2968 = vpack.c.b16 %v2040, %v2032
    %v2969 = vpack.c.b16 %v2041, %v2033
    %v2970 = vpack.c.b16 %v2042, %v2034
    %v2971 = vpack.c.b16 %v2043, %v2035
    %v2972 = vpack.c.b16 %v2052, %v2044
    %v2973 = vpack.c.b16 %v2053, %v2045
    %v2974 = vpack.c.b16 %v2054, %v2046
    %v2975 = vpack.c.b16 %v2055, %v2047
    %v2976 = vpack.c.b16 %v2056, %v2048
    %v2977 = vpack.c.b16 %v2057, %v2049
    %v2978 = vpack.c.b16 %v2058, %v2050
    %v2979 = vpack.c.b16 %v2059, %v2051
    %v2980 = vpack.c.b16 %v2068, %v2060
    %v2981 = vpack.c.b16 %v2069, %v2061
    %v2982 = vpack.c.b16 %v2070, %v2062
    %v2983 = vpack.c.b16 %v2071, %v2063
    %v2984 = vpack.c.b16 %v2072, %v2064
    %v2985 = vpack.c.b16 %v2073, %v2065
    %v2986 = vpack.c.b16 %v2074, %v2066
    %v2987 = vpack.c.b16 %v2075, %v2067
    %v2988 = vpack.c.b16 %v2084, %v2076
    %v2989 = vpack.c.b16 %v2085, %v2077
    %v2990 = vpack.c.b16 %v2086, %v2078
    %v2991 = vpack.c.b16 %v2087, %v2079
    %v2992 = vpack.c.b16 %v2088, %v2080
    %v2993 = vpack.c.b16 %v2089, %v2081
    %v2994 = vpack.c.b16 %v2090, %v2082
    %v2995 = vpack.c.b16 %v2091, %v2083
    %v2996 = vpack.c.b16 %v2100, %v2092
    %v2997 = vpack.c.b16 %v2101, %v2093
    %v2998 = vpack.c.b16 %v2102, %v2094
    %v2999 = vpack.c.b16 %v2103, %v2095
    %v3000 = vpack.c.b16 %v2104, %v2096
    %v3001 = vpack.c.b16 %v2105, %v2097
    %v3002 = vpack.c.b16 %v2106, %v2098
    %v3003 = vpack.c.b16 %v2107, %v2099
    %v3004 = vpack.c.b16 %v2116, %v2108
    %v3005 = vpack.c.b16 %v2117, %v2109
    %v3006 = vpack.c.b16 %v2118, %v2110
    %v3007 = vpack.c.b16 %v2119, %v2111
    %v3008 = vpack.c.b16 %v2120, %v2112
    %v3009 = vpack.c.b16 %v2121, %v2113
    %v3010 = vpack.c.b16 %v2122, %v2114
    %v3011 = vpack.c.b16 %v2123, %v2115
    %v3012 = vpack.c.b16 %v2132, %v2124
    %v3013 = vpack.c.b16 %v2133, %v2125
    %v3014 = vpack.c.b16 %v2134, %v2126
    %v3015 = vpack.c.b16 %v2135, %v2127
    %v3016 = vpack.c.b16 %v2136, %v2128
    %v3017 = vpack.c.b16 %v2137, %v2129
    %v3018 = vpack.c.b16 %v2138, %v2130
    %v3019 = vpack.c.b16 %v2139, %v2131
    %v3020 = vpack.c.b16 %v2148, %v2140
    %v3021 = vpack.c.b16 %v2149, %v2141
    %v3022 = vpack.c.b16 %v2150, %v2142
    %v3023 = vpack.c.b16 %v2151, %v2143
    %v3024 = vpack.c.b16 %v2152, %v2144
    %v3025 = vpack.c.b16 %v2153, %v2145
    %v3026 = vpack.c.b16 %v2154, %v2146
    %v3027 = vpack.c.b16 %v2155, %v2147
    %v3028 = vpack.c.b16 %v2164, %v2156
    %v3029 = vpack.c.b16 %v2165, %v2157
    %v3030 = vpack.c.b16 %v2166, %v2158
    %v3031 = vpack.c.b16 %v2167, %v2159
    %v3032 = vpack.c.b16 %v2168, %v2160
    %v3033 = vpack.c.b16 %v2169, %v2161
    %v3034 = vpack.c.b16 %v2170, %v2162
    %v3035 = vpack.c.b16 %v2171, %v2163
    %v3036 = vpack.c.b16 %v2180, %v2172
    %v3037 = vpack.c.b16 %v2181, %v2173
    %v3038 = vpack.c.b16 %v2182, %v2174
    %v3039 = vpack.c.b16 %v2183, %v2175
    %v3040 = vpack.c.b16 %v2184, %v2176
    %v3041 = vpack.c.b16 %v2185, %v2177
    %v3042 = vpack.c.b16 %v2186, %v2178
    %v3043 = vpack.c.b16 %v2187, %v2179
    %v3044 = vpack.c.b16 %v2196, %v2188
    %v3045 = vpack.c.b16 %v2197, %v2189
    %v3046 = vpack.c.b16 %v2198, %v2190
    %v3047 = vpack.c.b16 %v2199, %v2191
    %v3048 = vpack.c.b16 %v2200, %v2192
    %v3049 = vpack.c.b16 %v2201, %v2193
    %v3050 = vpack.c.b16 %v2202, %v2194
    %v3051 = vpack.c.b16 %v2203, %v2195
    %v3052 = vpack.c.b16 %v2212, %v2204
    %v3053 = vpack.c.b16 %v2213, %v2205
    %v3054 = vpack.c.b16 %v2214, %v2206
    %v3055 = vpack.c.b16 %v2215, %v2207
    %v3056 = vpack.c.b16 %v2216, %v2208
    %v3057 = vpack.c.b16 %v2217, %v2209
    %v3058 = vpack.c.b16 %v2218, %v2210
    %v3059 = vpack.c.b16 %v2219, %v2211
    %v3060 = vpack.c.b16 %v2228, %v2220
    %v3061 = vpack.c.b16 %v2229, %v2221
    %v3062 = vpack.c.b16 %v2230, %v2222
    %v3063 = vpack.c.b16 %v2231, %v2223
    %v3064 = vpack.c.b16 %v2232, %v2224
    %v3065 = vpack.c.b16 %v2233, %v2225
    %v3066 = vpack.c.b16 %v2234, %v2226
    %v3067 = vpack.c.b16 %v2235, %v2227
    %v3068 = vpack.c.b16 %v2244, %v2236
    %v3069 = vpack.c.b16 %v2245, %v2237
    %v3070 = vpack.c.b16 %v2246, %v2238
    %v3071 = vpack.c.b16 %v2247, %v2239
    %v3072 = vpack.c.b16 %v2248, %v2240
    %v3073 = vpack.c.b16 %v2249, %v2241
    %v3074 = vpack.c.b16 %v2250, %v2242
    %v3075 = vpack.c.b16 %v2251, %v2243
    %v3076 = vpack.c.b16 %v2260, %v2252
    %v3077 = vpack.c.b16 %v2261, %v2253
    %v3078 = vpack.c.b16 %v2262, %v2254
    %v3079 = vpack.c.b16 %v2263, %v2255
    %v3080 = vpack.c.b16 %v2264, %v2256
    %v3081 = vpack.c.b16 %v2265, %v2257
    %v3082 = vpack.c.b16 %v2266, %v2258
    %v3083 = vpack.c.b16 %v2267, %v2259
    %v3084 = vpack.c.b16 %v2276, %v2268
    %v3085 = vpack.c.b16 %v2277, %v2269
    %v3086 = vpack.c.b16 %v2278, %v2270
    %v3087 = vpack.c.b16 %v2279, %v2271
    %v3088 = vpack.c.b16 %v2280, %v2272
    %v3089 = vpack.c.b16 %v2281, %v2273
    %v3090 = vpack.c.b16 %v2282, %v2274
    %v3091 = vpack.c.b16 %v2283, %v2275
    %v3092 = vpack.c.b16 %v2292, %v2284
    %v3093 = vpack.c.b16 %v2293, %v2285
    %v3094 = vpack.c.b16 %v2294, %v2286
    %v3095 = vpack.c.b16 %v2295, %v2287
    %v3096 = vpack.c.b16 %v2296, %v2288
    %v3097 = vpack.c.b16 %v2297, %v2289
    %v3098 = vpack.c.b16 %v2298, %v2290
    %v3099 = vpack.c.b16 %v2299, %v2291
    %v3100 = vpack.c.b16 %v2308, %v2300
    %v3101 = vpack.c.b16 %v2309, %v2301
    %v3102 = vpack.c.b16 %v2310, %v2302
    %v3103 = vpack.c.b16 %v2311, %v2303
    %v3104 = vpack.c.b16 %v2312, %v2304
    %v3105 = vpack.c.b16 %v2313, %v2305
    %v3106 = vpack.c.b16 %v2314, %v2306
    %v3107 = vpack.c.b16 %v2315, %v2307
    %v3108 = vpack.c.b16 %v2324, %v2316
    %v3109 = vpack.c.b16 %v2325, %v2317
    %v3110 = vpack.c.b16 %v2326, %v2318
    %v3111 = vpack.c.b16 %v2327, %v2319
    %v3112 = vpack.c.b16 %v2328, %v2320
    %v3113 = vpack.c.b16 %v2329, %v2321
    %v3114 = vpack.c.b16 %v2330, %v2322
    %v3115 = vpack.c.b16 %v2331, %v2323
    %v3116 = vpack.c.b16 %v2340, %v2332
    %v3117 = vpack.c.b16 %v2341, %v2333
    %v3118 = vpack.c.b16 %v2342, %v2334
    %v3119 = vpack.c.b16 %v2343, %v2335
    %v3120 = vpack.c.b16 %v2344, %v2336
    %v3121 = vpack.c.b16 %v2345, %v2337
    %v3122 = vpack.c.b16 %v2346, %v2338
    %v3123 = vpack.c.b16 %v2347, %v2339
    %v3124 = vpack.c.b16 %v2356, %v2348
    %v3125 = vpack.c.b16 %v2357, %v2349
    %v3126 = vpack.c.b16 %v2358, %v2350
    %v3127 = vpack.c.b16 %v2359, %v2351
    %v3128 = vpack.c.b16 %v2360, %v2352
    %v3129 = vpack.c.b16 %v2361, %v2353
    %v3130 = vpack.c.b16 %v2362, %v2354
    %v3131 = vpack.c.b16 %v2363, %v2355
    %v3132 = vpack.c.b16 %v2372, %v2364
    %v3133 = vpack.c.b16 %v2373, %v2365
    %v3134 = vpack.c.b16 %v2374, %v2366
    %v3135 = vpack.c.b16 %v2375, %v2367
    %v3136 = vpack.c.b16 %v2376, %v2368
    %v3137 = vpack.c.b16 %v2377, %v2369
    %v3138 = vpack.c.b16 %v2378, %v2370
    %v3139 = vpack.c.b16 %v2379, %v2371
    %v3140 = vpack.c.b16 %v2388, %v2380
    %v3141 = vpack.c.b16 %v2389, %v2381
    %v3142 = vpack.c.b16 %v2390, %v2382
    %v3143 = vpack.c.b16 %v2391, %v2383
    %v3144 = vpack.c.b16 %v2392, %v2384
    %v3145 = vpack.c.b16 %v2393, %v2385
    %v3146 = vpack.c.b16 %v2394, %v2386
    %v3147 = vpack.c.b16 %v2395, %v2387
    %v3148 = vpack.c.b16 %v2404, %v2396
    %v3149 = vpack.c.b16 %v2405, %v2397
    %v3150 = vpack.c.b16 %v2406, %v2398
    %v3151 = vpack.c.b16 %v2407, %v2399
    %v3152 = vpack.c.b16 %v2408, %v2400
    %v3153 = vpack.c.b16 %v2409, %v2401
    %v3154 = vpack.c.b16 %v2410, %v2402
    %v3155 = vpack.c.b16 %v2411, %v2403
    %v3156 = vpack.c.b16 %v2420, %v2412
    %v3157 = vpack.c.b16 %v2421, %v2413
    %v3158 = vpack.c.b16 %v2422, %v2414
    %v3159 = vpack.c.b16 %v2423, %v2415
    %v3160 = vpack.c.b16 %v2424, %v2416
    %v3161 = vpack.c.b16 %v2425, %v2417
    %v3162 = vpack.c.b16 %v2426, %v2418
    %v3163 = vpack.c.b16 %v2427, %v2419
    %v3164 = vpack.c.b16 %v2436, %v2428
    %v3165 = vpack.c.b16 %v2437, %v2429
    %v3166 = vpack.c.b16 %v2438, %v2430
    %v3167 = vpack.c.b16 %v2439, %v2431
    %v3168 = vpack.c.b16 %v2440, %v2432
    %v3169 = vpack.c.b16 %v2441, %v2433
    %v3170 = vpack.c.b16 %v2442, %v2434
    %v3171 = vpack.c.b16 %v2443, %v2435
    %v3172 = vpack.c.b16 %v2452, %v2444
    %v3173 = vpack.c.b16 %v2453, %v2445
    %v3174 = vpack.c.b16 %v2454, %v2446
    %v3175 = vpack.c.b16 %v2455, %v2447
    %v3176 = vpack.c.b16 %v2456, %v2448
    %v3177 = vpack.c.b16 %v2457, %v2449
    %v3178 = vpack.c.b16 %v2458, %v2450
    %v3179 = vpack.c.b16 %v2459, %v2451
    %v3180 = vpack.c.b16 %v2468, %v2460
    %v3181 = vpack.c.b16 %v2469, %v2461
    %v3182 = vpack.c.b16 %v2470, %v2462
    %v3183 = vpack.c.b16 %v2471, %v2463
    %v3184 = vpack.c.b16 %v2472, %v2464
    %v3185 = vpack.c.b16 %v2473, %v2465
    %v3186 = vpack.c.b16 %v2474, %v2466
    %v3187 = vpack.c.b16 %v2475, %v2467
    %v3188 = vpack.c.b16 %v2484, %v2476
    %v3189 = vpack.c.b16 %v2485, %v2477
    %v3190 = vpack.c.b16 %v2486, %v2478
    %v3191 = vpack.c.b16 %v2487, %v2479
    %v3192 = vpack.c.b16 %v2488, %v2480
    %v3193 = vpack.c.b16 %v2489, %v2481
    %v3194 = vpack.c.b16 %v2490, %v2482
    %v3195 = vpack.c.b16 %v2491, %v2483
    %v3196 = vpack.c.b16 %v2500, %v2492
    %v3197 = vpack.c.b16 %v2501, %v2493
    %v3198 = vpack.c.b16 %v2502, %v2494
    %v3199 = vpack.c.b16 %v2503, %v2495
    %v3200 = vpack.c.b16 %v2504, %v2496
    %v3201 = vpack.c.b16 %v2505, %v2497
    %v3202 = vpack.c.b16 %v2506, %v2498
    %v3203 = vpack.c.b16 %v2507, %v2499
    %v3204 = vpack.c.b16 %v2516, %v2508
    %v3205 = vpack.c.b16 %v2517, %v2509
    %v3206 = vpack.c.b16 %v2518, %v2510
    %v3207 = vpack.c.b16 %v2519, %v2511
    %v3208 = vpack.c.b16 %v2520, %v2512
    %v3209 = vpack.c.b16 %v2521, %v2513
    %v3210 = vpack.c.b16 %v2522, %v2514
    %v3211 = vpack.c.b16 %v2523, %v2515
    %v3212 = vpack.c.b16 %v2532, %v2524
    %v3213 = vpack.c.b16 %v2533, %v2525
    %v3214 = vpack.c.b16 %v2534, %v2526
    %v3215 = vpack.c.b16 %v2535, %v2527
    %v3216 = vpack.c.b16 %v2536, %v2528
    %v3217 = vpack.c.b16 %v2537, %v2529
    %v3218 = vpack.c.b16 %v2538, %v2530
    %v3219 = vpack.c.b16 %v2539, %v2531
    %v3220 = vpack.c.b16 %v2548, %v2540
    %v3221 = vpack.c.b16 %v2549, %v2541
    %v3222 = vpack.c.b16 %v2550, %v2542
    %v3223 = vpack.c.b16 %v2551, %v2543
    %v3224 = vpack.c.b16 %v2552, %v2544
    %v3225 = vpack.c.b16 %v2553, %v2545
    %v3226 = vpack.c.b16 %v2554, %v2546
    %v3227 = vpack.c.b16 %v2555, %v2547
    %v3228 = vpack.c.b16 %v2564, %v2556
    %v3229 = vpack.c.b16 %v2565, %v2557
    %v3230 = vpack.c.b16 %v2566, %v2558
    %v3231 = vpack.c.b16 %v2567, %v2559
    %v3232 = vpack.c.b16 %v2568, %v2560
    %v3233 = vpack.c.b16 %v2569, %v2561
    %v3234 = vpack.c.b16 %v2570, %v2562
    %v3235 = vpack.c.b16 %v2571, %v2563
    %v3236 = vpack.c.b16 %v2580, %v2572
    %v3237 = vpack.c.b16 %v2581, %v2573
    %v3238 = vpack.c.b16 %v2582, %v2574
    %v3239 = vpack.c.b16 %v2583, %v2575
    %v3240 = vpack.c.b16 %v2584, %v2576
    %v3241 = vpack.c.b16 %v2585, %v2577
    %v3242 = vpack.c.b16 %v2586, %v2578
    %v3243 = vpack.c.b16 %v2587, %v2579
    %v3244 = vpack.c.b16 %v2596, %v2588
    %v3245 = vpack.c.b16 %v2597, %v2589
    %v3246 = vpack.c.b16 %v2598, %v2590
    %v3247 = vpack.c.b16 %v2599, %v2591
    %v3248 = vpack.c.b16 %v2600, %v2592
    %v3249 = vpack.c.b16 %v2601, %v2593
    %v3250 = vpack.c.b16 %v2602, %v2594
    %v3251 = vpack.c.b16 %v2603, %v2595
    %v3252 = vpack.c.b16 %v2612, %v2604
    %v3253 = vpack.c.b16 %v2613, %v2605
    %v3254 = vpack.c.b16 %v2614, %v2606
    %v3255 = vpack.c.b16 %v2615, %v2607
    %v3256 = vpack.c.b16 %v2616, %v2608
    %v3257 = vpack.c.b16 %v2617, %v2609
    %v3258 = vpack.c.b16 %v2618, %v2610
    %v3259 = vpack.c.b16 %v2619, %v2611
    %v3260 = vpack.c.b16 %v2628, %v2620
    %v3261 = vpack.c.b16 %v2629, %v2621
    %v3262 = vpack.c.b16 %v2630, %v2622
    %v3263 = vpack.c.b16 %v2631, %v2623
    %v3264 = vpack.c.b16 %v2632, %v2624
    %v3265 = vpack.c.b16 %v2633, %v2625
    %v3266 = vpack.c.b16 %v2634, %v2626
    %v3267 = vpack.c.b16 %v2635, %v2627
    %v3268 = vpack.c.b16 %v2644, %v2636
    %v3269 = vpack.c.b16 %v2645, %v2637
    %v3270 = vpack.c.b16 %v2646, %v2638
    %v3271 = vpack.c.b16 %v2647, %v2639
    %v3272 = vpack.c.b16 %v2648, %v2640
    %v3273 = vpack.c.b16 %v2649, %v2641
    %v3274 = vpack.c.b16 %v2650, %v2642
    %v3275 = vpack.c.b16 %v2651, %v2643
    %v3276 = vpack.c.b16 %v2660, %v2652
    %v3277 = vpack.c.b16 %v2661, %v2653
    %v3278 = vpack.c.b16 %v2662, %v2654
    %v3279 = vpack.c.b16 %v2663, %v2655
    %v3280 = vpack.c.b16 %v2664, %v2656
    %v3281 = vpack.c.b16 %v2665, %v2657
    %v3282 = vpack.c.b16 %v2666, %v2658
    %v3283 = vpack.c.b16 %v2667, %v2659
    %v3284 = vpack.c.b16 %v2676, %v2668
    %v3285 = vpack.c.b16 %v2677, %v2669
    %v3286 = vpack.c.b16 %v2678, %v2670
    %v3287 = vpack.c.b16 %v2679, %v2671
    %v3288 = vpack.c.b16 %v2680, %v2672
    %v3289 = vpack.c.b16 %v2681, %v2673
    %v3290 = vpack.c.b16 %v2682, %v2674
    %v3291 = vpack.c.b16 %v2683, %v2675
    %v3292 = vpack.c.b16 %v2692, %v2684
    %v3293 = vpack.c.b16 %v2693, %v2685
    %v3294 = vpack.c.b16 %v2694, %v2686
    %v3295 = vpack.c.b16 %v2695, %v2687
    %v3296 = vpack.c.b16 %v2696, %v2688
    %v3297 = vpack.c.b16 %v2697, %v2689
    %v3298 = vpack.c.b16 %v2698, %v2690
    %v3299 = vpack.c.b16 %v2699, %v2691
    %v3300 = vpack.c.b16 %v2708, %v2700
    %v3301 = vpack.c.b16 %v2709, %v2701
    %v3302 = vpack.c.b16 %v2710, %v2702
    %v3303 = vpack.c.b16 %v2711, %v2703
    %v3304 = vpack.c.b16 %v2712, %v2704
    %v3305 = vpack.c.b16 %v2713, %v2705
    %v3306 = vpack.c.b16 %v2714, %v2706
    %v3307 = vpack.c.b16 %v2715, %v2707
    %v3308 = vpack.c.b16 %v2724, %v2716
    %v3309 = vpack.c.b16 %v2725, %v2717
    %v3310 = vpack.c.b16 %v2726, %v2718
    %v3311 = vpack.c.b16 %v2727, %v2719
    %v3312 = vpack.c.b16 %v2728, %v2720
    %v3313 = vpack.c.b16 %v2729, %v2721
    %v3314 = vpack.c.b16 %v2730, %v2722
    %v3315 = vpack.c.b16 %v2731, %v2723
    %v3316 = vpack.c.b16 %v2740, %v2732
    %v3317 = vpack.c.b16 %v2741, %v2733
    %v3318 = vpack.c.b16 %v2742, %v2734
    %v3319 = vpack.c.b16 %v2743, %v2735
    %v3320 = vpack.c.b16 %v2744, %v2736
    %v3321 = vpack.c.b16 %v2745, %v2737
    %v3322 = vpack.c.b16 %v2746, %v2738
    %v3323 = vpack.c.b16 %v2747, %v2739
    %v3324 = vpack.c.b16 %v2756, %v2748
    %v3325 = vpack.c.b16 %v2757, %v2749
    %v3326 = vpack.c.b16 %v2758, %v2750
    %v3327 = vpack.c.b16 %v2759, %v2751
    %v3328 = vpack.c.b16 %v2760, %v2752
    %v3329 = vpack.c.b16 %v2761, %v2753
    %v3330 = vpack.c.b16 %v2762, %v2754
    %v3331 = vpack.c.b16 %v2763, %v2755
    %v3332 = vpack.c.b16 %v2772, %v2764
    %v3333 = vpack.c.b16 %v2773, %v2765
    %v3334 = vpack.c.b16 %v2774, %v2766
    %v3335 = vpack.c.b16 %v2775, %v2767
    %v3336 = vpack.c.b16 %v2776, %v2768
    %v3337 = vpack.c.b16 %v2777, %v2769
    %v3338 = vpack.c.b16 %v2778, %v2770
    %v3339 = vpack.c.b16 %v2779, %v2771
    %v3340 = vpack.c.b16 %v2788, %v2780
    %v3341 = vpack.c.b16 %v2789, %v2781
    %v3342 = vpack.c.b16 %v2790, %v2782
    %v3343 = vpack.c.b16 %v2791, %v2783
    %v3344 = vpack.c.b16 %v2792, %v2784
    %v3345 = vpack.c.b16 %v2793, %v2785
    %v3346 = vpack.c.b16 %v2794, %v2786
    %v3347 = vpack.c.b16 %v2795, %v2787
    %v3348 = vpack.c.b16 %v2804, %v2796
    %v3349 = vpack.c.b16 %v2805, %v2797
    %v3350 = vpack.c.b16 %v2806, %v2798
    %v3351 = vpack.c.b16 %v2807, %v2799
    %v3352 = vpack.c.b16 %v2808, %v2800
    %v3353 = vpack.c.b16 %v2809, %v2801
    %v3354 = vpack.c.b16 %v2810, %v2802
    %v3355 = vpack.c.b16 %v2811, %v2803
    %v3356 = vpack.c.b16 %v2820, %v2812
    %v3357 = vpack.c.b16 %v2821, %v2813
    %v3358 = vpack.c.b16 %v2822, %v2814
    %v3359 = vpack.c.b16 %v2823, %v2815
    %v3360 = vpack.c.b16 %v2824, %v2816
    %v3361 = vpack.c.b16 %v2825, %v2817
    %v3362 = vpack.c.b16 %v2826, %v2818
    %v3363 = vpack.c.b16 %v2827, %v2819
    %v3364 = vpack.c.b16 %v2836, %v2828
    %v3365 = vpack.c.b16 %v2837, %v2829
    %v3366 = vpack.c.b16 %v2838, %v2830
    %v3367 = vpack.c.b16 %v2839, %v2831
    %v3368 = vpack.c.b16 %v2840, %v2832
    %v3369 = vpack.c.b16 %v2841, %v2833
    %v3370 = vpack.c.b16 %v2842, %v2834
    %v3371 = vpack.c.b16 %v2843, %v2835
    %v3372 = vpack.c.b16 %v2852, %v2844
    %v3373 = vpack.c.b16 %v2853, %v2845
    %v3374 = vpack.c.b16 %v2854, %v2846
    %v3375 = vpack.c.b16 %v2855, %v2847
    %v3376 = vpack.c.b16 %v2856, %v2848
    %v3377 = vpack.c.b16 %v2857, %v2849
    %v3378 = vpack.c.b16 %v2858, %v2850
    %v3379 = vpack.c.b16 %v2859, %v2851
    %v3380 = vpack.c.b16 %v2868, %v2860
    %v3381 = vpack.c.b16 %v2869, %v2861
    %v3382 = vpack.c.b16 %v2870, %v2862
    %v3383 = vpack.c.b16 %v2871, %v2863
    %v3384 = vpack.c.b16 %v2872, %v2864
    %v3385 = vpack.c.b16 %v2873, %v2865
    %v3386 = vpack.c.b16 %v2874, %v2866
    %v3387 = vpack.c.b16 %v2875, %v2867
    %3900 = vmatprep.subr.bf16.mxu0 %v2877
    %3901 = vmatpush1.bf16.msra.mxu0 %v2876
    %3902 = vmatprep.subr.bf16.mxu0 %v2885
    %3903 = vmatpush1.bf16.msra.mxu0 %v2884
    %3904 = vmatprep.subr.bf16.mxu0 %v2893
    %3905 = vmatpush1.bf16.msra.mxu0 %v2892
    %3906 = vmatprep.subr.bf16.mxu0 %v2901
    %3907 = vmatpush1.bf16.msra.mxu0 %v2900
    %3908 = vmatprep.subr.bf16.mxu0 %v2909
    %3909 = vmatpush1.bf16.msra.mxu0 %v2908
    %3910 = vmatprep.subr.bf16.mxu0 %v2917
    %3911 = vmatpush1.bf16.msra.mxu0 %v2916
    %3912 = vmatprep.subr.bf16.mxu0 %v2925
    %3913 = vmatpush1.bf16.msra.mxu0 %v2924
    %3914 = vmatprep.subr.bf16.mxu0 %v2933
    %3915 = vmatpush1.bf16.msra.mxu0 %v2932
    %3916 = vmatprep.subr.bf16.mxu0 %v2941
    %3917 = vmatpush1.bf16.msra.mxu0 %v2940
    %3918 = vmatprep.subr.bf16.mxu0 %v2949
    %3919 = vmatpush1.bf16.msra.mxu0 %v2948
    %3920 = vmatprep.subr.bf16.mxu0 %v2957
    %3921 = vmatpush1.bf16.msra.mxu0 %v2956
    %3922 = vmatprep.subr.bf16.mxu0 %v2965
    %3923 = vmatpush1.bf16.msra.mxu0 %v2964
    %3924 = vmatprep.subr.bf16.mxu0 %v2973
    %3925 = vmatpush1.bf16.msra.mxu0 %v2972
    %3926 = vmatprep.subr.bf16.mxu0 %v2981
    %3927 = vmatpush1.bf16.msra.mxu0 %v2980
    %3928 = vmatprep.subr.bf16.mxu0 %v2989
    %3929 = vmatpush1.bf16.msra.mxu0 %v2988
    %3930 = vmatprep.subr.bf16.mxu0 %v2997
    %3931 = vmatpush1.bf16.msra.mxu0 %v2996
    %3932 = vmatprep.mubr.bf16.mxu0 %v779
    %3933 = vmatmul.mubr.bf16.gmra.mrb[0].mxu0 %v778
    %v3934 = vpop.f32.mrb[0].mxu0
    %v3935 = vadd.f32 %v1303, %v3934
    %v3936 = vpop.f32.mrb[0].mxu0
    %v3937 = vadd.f32 %v1307, %v3936
    %v3938 = vpop.f32.mrb[0].mxu0
    %v3939 = vpop.f32.mrb[0].mxu0
    %3940 = vdwg.mxu0
    %3941 = vmatprep.subr.bf16.mxu0 %v3005
    %3942 = vmatpush1.bf16.msra.mxu0 %v3004
    %3943 = vmatprep.subr.bf16.mxu0 %v3013
    %3944 = vmatpush1.bf16.msra.mxu0 %v3012
    %3945 = vmatprep.subr.bf16.mxu0 %v3021
    %3946 = vmatpush1.bf16.msra.mxu0 %v3020
    %3947 = vmatprep.subr.bf16.mxu0 %v3029
    %3948 = vmatpush1.bf16.msra.mxu0 %v3028
    %3949 = vmatprep.subr.bf16.mxu0 %v3037
    %3950 = vmatpush1.bf16.msra.mxu0 %v3036
    %3951 = vmatprep.subr.bf16.mxu0 %v3045
    %3952 = vmatpush1.bf16.msra.mxu0 %v3044
    %3953 = vmatprep.subr.bf16.mxu0 %v3053
    %3954 = vmatpush1.bf16.msra.mxu0 %v3052
    %3955 = vmatprep.subr.bf16.mxu0 %v3061
    %3956 = vmatpush1.bf16.msra.mxu0 %v3060
    %3957 = vmatprep.subr.bf16.mxu0 %v3069
    %3958 = vmatpush1.bf16.msra.mxu0 %v3068
    %3959 = vmatprep.subr.bf16.mxu0 %v3077
    %3960 = vmatpush1.bf16.msra.mxu0 %v3076
    %3961 = vmatprep.subr.bf16.mxu0 %v3085
    %3962 = vmatpush1.bf16.msra.mxu0 %v3084
    %3963 = vmatprep.subr.bf16.mxu0 %v3093
    %3964 = vmatpush1.bf16.msra.mxu0 %v3092
    %3965 = vmatprep.subr.bf16.mxu0 %v3101
    %3966 = vmatpush1.bf16.msra.mxu0 %v3100
    %3967 = vmatprep.subr.bf16.mxu0 %v3109
    %3968 = vmatpush1.bf16.msra.mxu0 %v3108
    %3969 = vmatprep.subr.bf16.mxu0 %v3117
    %3970 = vmatpush1.bf16.msra.mxu0 %v3116
    %3971 = vmatprep.subr.bf16.mxu0 %v3125
    %3972 = vmatpush1.bf16.msra.mxu0 %v3124
    %3973 = vmatprep.mubr.bf16.mxu0 %v781
    %3974 = vmatmul.mubr.bf16.gmra.mrb[0].mxu0 %v780
    %v3975 = vpop.f32.mrb[0].mxu0
    %v3976 = vadd.f32 %v3935, %v3975
    %v3977 = vpop.f32.mrb[0].mxu0
    %v3978 = vadd.f32 %v3937, %v3977
    %v3979 = vpop.f32.mrb[0].mxu0
    %v3980 = vpop.f32.mrb[0].mxu0
    %3981 = vdwg.mxu0
    %3982 = vmatprep.subr.bf16.mxu0 %v3133
    %3983 = vmatpush1.bf16.msra.mxu0 %v3132
    %3984 = vmatprep.subr.bf16.mxu0 %v3141
    %3985 = vmatpush1.bf16.msra.mxu0 %v3140
    %3986 = vmatprep.subr.bf16.mxu0 %v3149
    %3987 = vmatpush1.bf16.msra.mxu0 %v3148
    %3988 = vmatprep.subr.bf16.mxu0 %v3157
    %3989 = vmatpush1.bf16.msra.mxu0 %v3156
    %3990 = vmatprep.subr.bf16.mxu0 %v3165
    %3991 = vmatpush1.bf16.msra.mxu0 %v3164
    %3992 = vmatprep.subr.bf16.mxu0 %v3173
    %3993 = vmatpush1.bf16.msra.mxu0 %v3172
    %3994 = vmatprep.subr.bf16.mxu0 %v3181
    %3995 = vmatpush1.bf16.msra.mxu0 %v3180
    %3996 = vmatprep.subr.bf16.mxu0 %v3189
    %3997 = vmatpush1.bf16.msra.mxu0 %v3188
    %3998 = vmatprep.subr.bf16.mxu0 %v3197
    %3999 = vmatpush1.bf16.msra.mxu0 %v3196
    %4000 = vmatprep.subr.bf16.mxu0 %v3205
    %4001 = vmatpush1.bf16.msra.mxu0 %v3204
    %4002 = vmatprep.subr.bf16.mxu0 %v3213
    %4003 = vmatpush1.bf16.msra.mxu0 %v3212
    %4004 = vmatprep.subr.bf16.mxu0 %v3221
    %4005 = vmatpush1.bf16.msra.mxu0 %v3220
    %4006 = vmatprep.subr.bf16.mxu0 %v3229
    %4007 = vmatpush1.bf16.msra.mxu0 %v3228
    %4008 = vmatprep.subr.bf16.mxu0 %v3237
    %4009 = vmatpush1.bf16.msra.mxu0 %v3236
    %4010 = vmatprep.subr.bf16.mxu0 %v3245
    %4011 = vmatpush1.bf16.msra.mxu0 %v3244
    %4012 = vmatprep.subr.bf16.mxu0 %v3253
    %4013 = vmatpush1.bf16.msra.mxu0 %v3252
    %4014 = vmatprep.mubr.bf16.mxu0 %v783
    %4015 = vmatmul.mubr.bf16.gmra.mrb[0].mxu0 %v782
    %v4016 = vpop.f32.mrb[0].mxu0
    %v4017 = vadd.f32 %v3976, %v4016
    %v4018 = vpop.f32.mrb[0].mxu0
    %v4019 = vadd.f32 %v3978, %v4018
    %v4020 = vpop.f32.mrb[0].mxu0
    %v4021 = vpop.f32.mrb[0].mxu0
    %4022 = vdwg.mxu0
    %4023 = vmatprep.subr.bf16.mxu0 %v3261
    %4024 = vmatpush1.bf16.msra.mxu0 %v3260
    %4025 = vmatprep.subr.bf16.mxu0 %v3269
    %4026 = vmatpush1.bf16.msra.mxu0 %v3268
    %4027 = vmatprep.subr.bf16.mxu0 %v3277
    %4028 = vmatpush1.bf16.msra.mxu0 %v3276
    %4029 = vmatprep.subr.bf16.mxu0 %v3285
    %4030 = vmatpush1.bf16.msra.mxu0 %v3284
    %4031 = vmatprep.subr.bf16.mxu0 %v3293
    %4032 = vmatpush1.bf16.msra.mxu0 %v3292
    %4033 = vmatprep.subr.bf16.mxu0 %v3301
    %4034 = vmatpush1.bf16.msra.mxu0 %v3300
    %4035 = vmatprep.subr.bf16.mxu0 %v3309
    %4036 = vmatpush1.bf16.msra.mxu0 %v3308
    %4037 = vmatprep.subr.bf16.mxu0 %v3317
    %4038 = vmatpush1.bf16.msra.mxu0 %v3316
    %4039 = vmatprep.subr.bf16.mxu0 %v3325
    %4040 = vmatpush1.bf16.msra.mxu0 %v3324
    %4041 = vmatprep.subr.bf16.mxu0 %v3333
    %4042 = vmatpush1.bf16.msra.mxu0 %v3332
    %4043 = vmatprep.subr.bf16.mxu0 %v3341
    %4044 = vmatpush1.bf16.msra.mxu0 %v3340
    %4045 = vmatprep.subr.bf16.mxu0 %v3349
    %4046 = vmatpush1.bf16.msra.mxu0 %v3348
    %4047 = vmatprep.subr.bf16.mxu0 %v3357
    %4048 = vmatpush1.bf16.msra.mxu0 %v3356
    %4049 = vmatprep.subr.bf16.mxu0 %v3365
    %4050 = vmatpush1.bf16.msra.mxu0 %v3364
    %4051 = vmatprep.subr.bf16.mxu0 %v3373
    %4052 = vmatpush1.bf16.msra.mxu0 %v3372
    %4053 = vmatprep.subr.bf16.mxu0 %v3381
    %4054 = vmatpush1.bf16.msra.mxu0 %v3380
    %4055 = vmatprep.mubr.bf16.mxu0 %v785
    %4056 = vmatmul.mubr.bf16.gmra.mrb[0].mxu0 %v784
    %v4057 = vpop.f32.mrb[0].mxu0
    %v4058 = vadd.f32 %v4017, %v4057
    %v4059 = vpop.f32.mrb[0].mxu0
    %v4060 = vadd.f32 %v4019, %v4059
    %v4061 = vpop.f32.mrb[0].mxu0
    %v4062 = vpop.f32.mrb[0].mxu0
    %4063 = vdwg.mxu0
    %4064 = vmatprep.subr.bf16.mxu0 %v2879
    %4065 = vmatpush1.bf16.msra.mxu0 %v2878
    %4066 = vmatprep.subr.bf16.mxu0 %v2887
    %4067 = vmatpush1.bf16.msra.mxu0 %v2886
    %4068 = vmatprep.subr.bf16.mxu0 %v2895
    %4069 = vmatpush1.bf16.msra.mxu0 %v2894
    %4070 = vmatprep.subr.bf16.mxu0 %v2903
    %4071 = vmatpush1.bf16.msra.mxu0 %v2902
    %4072 = vmatprep.subr.bf16.mxu0 %v2911
    %4073 = vmatpush1.bf16.msra.mxu0 %v2910
    %4074 = vmatprep.subr.bf16.mxu0 %v2919
    %4075 = vmatpush1.bf16.msra.mxu0 %v2918
    %4076 = vmatprep.subr.bf16.mxu0 %v2927
    %4077 = vmatpush1.bf16.msra.mxu0 %v2926
    %4078 = vmatprep.subr.bf16.mxu0 %v2935
    %4079 = vmatpush1.bf16.msra.mxu0 %v2934
    %4080 = vmatprep.subr.bf16.mxu0 %v2943
    %4081 = vmatpush1.bf16.msra.mxu0 %v2942
    %4082 = vmatprep.subr.bf16.mxu0 %v2951
    %4083 = vmatpush1.bf16.msra.mxu0 %v2950
    %4084 = vmatprep.subr.bf16.mxu0 %v2959
    %4085 = vmatpush1.bf16.msra.mxu0 %v2958
    %4086 = vmatprep.subr.bf16.mxu0 %v2967
    %4087 = vmatpush1.bf16.msra.mxu0 %v2966
    %4088 = vmatprep.subr.bf16.mxu0 %v2975
    %4089 = vmatpush1.bf16.msra.mxu0 %v2974
    %4090 = vmatprep.subr.bf16.mxu0 %v2983
    %4091 = vmatpush1.bf16.msra.mxu0 %v2982
    %4092 = vmatprep.subr.bf16.mxu0 %v2991
    %4093 = vmatpush1.bf16.msra.mxu0 %v2990
    %4094 = vmatprep.subr.bf16.mxu0 %v2999
    %4095 = vmatpush1.bf16.msra.mxu0 %v2998
    %4096 = vmatprep.mubr.bf16.mxu0 %v779
    %4097 = vmatmul.mubr.bf16.gmra.mrb[0].mxu0 %v778
    %v4098 = vpop.f32.mrb[0].mxu0
    %v4099 = vadd.f32 %v1311, %v4098
    %v4100 = vpop.f32.mrb[0].mxu0
    %v4101 = vadd.f32 %v1315, %v4100
    %v4102 = vpop.f32.mrb[0].mxu0
    %v4103 = vpop.f32.mrb[0].mxu0
    %4104 = vdwg.mxu0
    %4105 = vmatprep.subr.bf16.mxu0 %v3007
    %4106 = vmatpush1.bf16.msra.mxu0 %v3006
    %4107 = vmatprep.subr.bf16.mxu0 %v3015
    %4108 = vmatpush1.bf16.msra.mxu0 %v3014
    %4109 = vmatprep.subr.bf16.mxu0 %v3023
    %4110 = vmatpush1.bf16.msra.mxu0 %v3022
    %4111 = vmatprep.subr.bf16.mxu0 %v3031
    %4112 = vmatpush1.bf16.msra.mxu0 %v3030
    %4113 = vmatprep.subr.bf16.mxu0 %v3039
    %4114 = vmatpush1.bf16.msra.mxu0 %v3038
    %4115 = vmatprep.subr.bf16.mxu0 %v3047
    %4116 = vmatpush1.bf16.msra.mxu0 %v3046
    %4117 = vmatprep.subr.bf16.mxu0 %v3055
    %4118 = vmatpush1.bf16.msra.mxu0 %v3054
    %4119 = vmatprep.subr.bf16.mxu0 %v3063
    %4120 = vmatpush1.bf16.msra.mxu0 %v3062
    %4121 = vmatprep.subr.bf16.mxu0 %v3071
    %4122 = vmatpush1.bf16.msra.mxu0 %v3070
    %4123 = vmatprep.subr.bf16.mxu0 %v3079
    %4124 = vmatpush1.bf16.msra.mxu0 %v3078
    %4125 = vmatprep.subr.bf16.mxu0 %v3087
    %4126 = vmatpush1.bf16.msra.mxu0 %v3086
    %4127 = vmatprep.subr.bf16.mxu0 %v3095
    %4128 = vmatpush1.bf16.msra.mxu0 %v3094
    %4129 = vmatprep.subr.bf16.mxu0 %v3103
    %4130 = vmatpush1.bf16.msra.mxu0 %v3102
    %4131 = vmatprep.subr.bf16.mxu0 %v3111
    %4132 = vmatpush1.bf16.msra.mxu0 %v3110
    %4133 = vmatprep.subr.bf16.mxu0 %v3119
    %4134 = vmatpush1.bf16.msra.mxu0 %v3118
    %4135 = vmatprep.subr.bf16.mxu0 %v3127
    %4136 = vmatpush1.bf16.msra.mxu0 %v3126
    %4137 = vmatprep.mubr.bf16.mxu0 %v781
    %4138 = vmatmul.mubr.bf16.gmra.mrb[0].mxu0 %v780
    %v4139 = vpop.f32.mrb[0].mxu0
    %v4140 = vadd.f32 %v4099, %v4139
    %v4141 = vpop.f32.mrb[0].mxu0
    %v4142 = vadd.f32 %v4101, %v4141
    %v4143 = vpop.f32.mrb[0].mxu0
    %v4144 = vpop.f32.mrb[0].mxu0
    %4145 = vdwg.mxu0
    %4146 = vmatprep.subr.bf16.mxu0 %v3135
    %4147 = vmatpush1.bf16.msra.mxu0 %v3134
    %4148 = vmatprep.subr.bf16.mxu0 %v3143
    %4149 = vmatpush1.bf16.msra.mxu0 %v3142
    %4150 = vmatprep.subr.bf16.mxu0 %v3151
    %4151 = vmatpush1.bf16.msra.mxu0 %v3150
    %4152 = vmatprep.subr.bf16.mxu0 %v3159
    %4153 = vmatpush1.bf16.msra.mxu0 %v3158
    %4154 = vmatprep.subr.bf16.mxu0 %v3167
    %4155 = vmatpush1.bf16.msra.mxu0 %v3166
    %4156 = vmatprep.subr.bf16.mxu0 %v3175
    %4157 = vmatpush1.bf16.msra.mxu0 %v3174
    %4158 = vmatprep.subr.bf16.mxu0 %v3183
    %4159 = vmatpush1.bf16.msra.mxu0 %v3182
    %4160 = vmatprep.subr.bf16.mxu0 %v3191
    %4161 = vmatpush1.bf16.msra.mxu0 %v3190
    %4162 = vmatprep.subr.bf16.mxu0 %v3199
    %4163 = vmatpush1.bf16.msra.mxu0 %v3198
    %4164 = vmatprep.subr.bf16.mxu0 %v3207
    %4165 = vmatpush1.bf16.msra.mxu0 %v3206
    %4166 = vmatprep.subr.bf16.mxu0 %v3215
    %4167 = vmatpush1.bf16.msra.mxu0 %v3214
    %4168 = vmatprep.subr.bf16.mxu0 %v3223
    %4169 = vmatpush1.bf16.msra.mxu0 %v3222
    %4170 = vmatprep.subr.bf16.mxu0 %v3231
    %4171 = vmatpush1.bf16.msra.mxu0 %v3230
    %4172 = vmatprep.subr.bf16.mxu0 %v3239
    %4173 = vmatpush1.bf16.msra.mxu0 %v3238
    %4174 = vmatprep.subr.bf16.mxu0 %v3247
    %4175 = vmatpush1.bf16.msra.mxu0 %v3246
    %4176 = vmatprep.subr.bf16.mxu0 %v3255
    %4177 = vmatpush1.bf16.msra.mxu0 %v3254
    %4178 = vmatprep.mubr.bf16.mxu0 %v783
    %4179 = vmatmul.mubr.bf16.gmra.mrb[0].mxu0 %v782
    %v4180 = vpop.f32.mrb[0].mxu0
    %v4181 = vadd.f32 %v4140, %v4180
    %v4182 = vpop.f32.mrb[0].mxu0
    %v4183 = vadd.f32 %v4142, %v4182
    %v4184 = vpop.f32.mrb[0].mxu0
    %v4185 = vpop.f32.mrb[0].mxu0
    %4186 = vdwg.mxu0
    %4187 = vmatprep.subr.bf16.mxu0 %v3263
    %4188 = vmatpush1.bf16.msra.mxu0 %v3262
    %4189 = vmatprep.subr.bf16.mxu0 %v3271
    %4190 = vmatpush1.bf16.msra.mxu0 %v3270
    %4191 = vmatprep.subr.bf16.mxu0 %v3279
    %4192 = vmatpush1.bf16.msra.mxu0 %v3278
    %4193 = vmatprep.subr.bf16.mxu0 %v3287
    %4194 = vmatpush1.bf16.msra.mxu0 %v3286
    %4195 = vmatprep.subr.bf16.mxu0 %v3295
    %4196 = vmatpush1.bf16.msra.mxu0 %v3294
    %4197 = vmatprep.subr.bf16.mxu0 %v3303
    %4198 = vmatpush1.bf16.msra.mxu0 %v3302
    %4199 = vmatprep.subr.bf16.mxu0 %v3311
    %4200 = vmatpush1.bf16.msra.mxu0 %v3310
    %4201 = vmatprep.subr.bf16.mxu0 %v3319
    %4202 = vmatpush1.bf16.msra.mxu0 %v3318
    %4203 = vmatprep.subr.bf16.mxu0 %v3327
    %4204 = vmatpush1.bf16.msra.mxu0 %v3326
    %4205 = vmatprep.subr.bf16.mxu0 %v3335
    %4206 = vmatpush1.bf16.msra.mxu0 %v3334
    %4207 = vmatprep.subr.bf16.mxu0 %v3343
    %4208 = vmatpush1.bf16.msra.mxu0 %v3342
    %4209 = vmatprep.subr.bf16.mxu0 %v3351
    %4210 = vmatpush1.bf16.msra.mxu0 %v3350
    %4211 = vmatprep.subr.bf16.mxu0 %v3359
    %4212 = vmatpush1.bf16.msra.mxu0 %v3358
    %4213 = vmatprep.subr.bf16.mxu0 %v3367
    %4214 = vmatpush1.bf16.msra.mxu0 %v3366
    %4215 = vmatprep.subr.bf16.mxu0 %v3375
    %4216 = vmatpush1.bf16.msra.mxu0 %v3374
    %4217 = vmatprep.subr.bf16.mxu0 %v3383
    %4218 = vmatpush1.bf16.msra.mxu0 %v3382
    %4219 = vmatprep.mubr.bf16.mxu0 %v785
    %4220 = vmatmul.mubr.bf16.gmra.mrb[0].mxu0 %v784
    %v4221 = vpop.f32.mrb[0].mxu0
    %v4222 = vadd.f32 %v4181, %v4221
    %v4223 = vpop.f32.mrb[0].mxu0
    %v4224 = vadd.f32 %v4183, %v4223
    %v4225 = vpop.f32.mrb[0].mxu0
    %v4226 = vpop.f32.mrb[0].mxu0
    %4227 = vdwg.mxu0
    %4228 = vmatprep.subr.bf16.mxu0 %v2881
    %4229 = vmatpush1.bf16.msra.mxu0 %v2880
    %4230 = vmatprep.subr.bf16.mxu0 %v2889
    %4231 = vmatpush1.bf16.msra.mxu0 %v2888
    %4232 = vmatprep.subr.bf16.mxu0 %v2897
    %4233 = vmatpush1.bf16.msra.mxu0 %v2896
    %4234 = vmatprep.subr.bf16.mxu0 %v2905
    %4235 = vmatpush1.bf16.msra.mxu0 %v2904
    %4236 = vmatprep.subr.bf16.mxu0 %v2913
    %4237 = vmatpush1.bf16.msra.mxu0 %v2912
    %4238 = vmatprep.subr.bf16.mxu0 %v2921
    %4239 = vmatpush1.bf16.msra.mxu0 %v2920
    %4240 = vmatprep.subr.bf16.mxu0 %v2929
    %4241 = vmatpush1.bf16.msra.mxu0 %v2928
    %4242 = vmatprep.subr.bf16.mxu0 %v2937
    %4243 = vmatpush1.bf16.msra.mxu0 %v2936
    %4244 = vmatprep.subr.bf16.mxu0 %v2945
    %4245 = vmatpush1.bf16.msra.mxu0 %v2944
    %4246 = vmatprep.subr.bf16.mxu0 %v2953
    %4247 = vmatpush1.bf16.msra.mxu0 %v2952
    %4248 = vmatprep.subr.bf16.mxu0 %v2961
    %4249 = vmatpush1.bf16.msra.mxu0 %v2960
    %4250 = vmatprep.subr.bf16.mxu0 %v2969
    %4251 = vmatpush1.bf16.msra.mxu0 %v2968
    %4252 = vmatprep.subr.bf16.mxu0 %v2977
    %4253 = vmatpush1.bf16.msra.mxu0 %v2976
    %4254 = vmatprep.subr.bf16.mxu0 %v2985
    %4255 = vmatpush1.bf16.msra.mxu0 %v2984
    %4256 = vmatprep.subr.bf16.mxu0 %v2993
    %4257 = vmatpush1.bf16.msra.mxu0 %v2992
    %4258 = vmatprep.subr.bf16.mxu0 %v3001
    %4259 = vmatpush1.bf16.msra.mxu0 %v3000
    %4260 = vmatprep.mubr.bf16.mxu0 %v779
    %4261 = vmatmul.mubr.bf16.gmra.mrb[0].mxu0 %v778
    %v4262 = vpop.f32.mrb[0].mxu0
    %v4263 = vadd.f32 %v1319, %v4262
    %v4264 = vpop.f32.mrb[0].mxu0
    %v4265 = vadd.f32 %v1323, %v4264
    %v4266 = vpop.f32.mrb[0].mxu0
    %v4267 = vpop.f32.mrb[0].mxu0
    %4268 = vdwg.mxu0
    %4269 = vmatprep.subr.bf16.mxu0 %v3009
    %4270 = vmatpush1.bf16.msra.mxu0 %v3008
    %4271 = vmatprep.subr.bf16.mxu0 %v3017
    %4272 = vmatpush1.bf16.msra.mxu0 %v3016
    %4273 = vmatprep.subr.bf16.mxu0 %v3025
    %4274 = vmatpush1.bf16.msra.mxu0 %v3024
    %4275 = vmatprep.subr.bf16.mxu0 %v3033
    %4276 = vmatpush1.bf16.msra.mxu0 %v3032
    %4277 = vmatprep.subr.bf16.mxu0 %v3041
    %4278 = vmatpush1.bf16.msra.mxu0 %v3040
    %4279 = vmatprep.subr.bf16.mxu0 %v3049
    %4280 = vmatpush1.bf16.msra.mxu0 %v3048
    %4281 = vmatprep.subr.bf16.mxu0 %v3057
    %4282 = vmatpush1.bf16.msra.mxu0 %v3056
    %4283 = vmatprep.subr.bf16.mxu0 %v3065
    %4284 = vmatpush1.bf16.msra.mxu0 %v3064
    %4285 = vmatprep.subr.bf16.mxu0 %v3073
    %4286 = vmatpush1.bf16.msra.mxu0 %v3072
    %4287 = vmatprep.subr.bf16.mxu0 %v3081
    %4288 = vmatpush1.bf16.msra.mxu0 %v3080
    %4289 = vmatprep.subr.bf16.mxu0 %v3089
    %4290 = vmatpush1.bf16.msra.mxu0 %v3088
    %4291 = vmatprep.subr.bf16.mxu0 %v3097
    %4292 = vmatpush1.bf16.msra.mxu0 %v3096
    %4293 = vmatprep.subr.bf16.mxu0 %v3105
    %4294 = vmatpush1.bf16.msra.mxu0 %v3104
    %4295 = vmatprep.subr.bf16.mxu0 %v3113
    %4296 = vmatpush1.bf16.msra.mxu0 %v3112
    %4297 = vmatprep.subr.bf16.mxu0 %v3121
    %4298 = vmatpush1.bf16.msra.mxu0 %v3120
    %4299 = vmatprep.subr.bf16.mxu0 %v3129
    %4300 = vmatpush1.bf16.msra.mxu0 %v3128
    %4301 = vmatprep.mubr.bf16.mxu0 %v781
    %4302 = vmatmul.mubr.bf16.gmra.mrb[0].mxu0 %v780
    %v4303 = vpop.f32.mrb[0].mxu0
    %v4304 = vadd.f32 %v4263, %v4303
    %v4305 = vpop.f32.mrb[0].mxu0
    %v4306 = vadd.f32 %v4265, %v4305
    %v4307 = vpop.f32.mrb[0].mxu0
    %v4308 = vpop.f32.mrb[0].mxu0
    %4309 = vdwg.mxu0
    %4310 = vmatprep.subr.bf16.mxu0 %v3137
    %4311 = vmatpush1.bf16.msra.mxu0 %v3136
    %4312 = vmatprep.subr.bf16.mxu0 %v3145
    %4313 = vmatpush1.bf16.msra.mxu0 %v3144
    %4314 = vmatprep.subr.bf16.mxu0 %v3153
    %4315 = vmatpush1.bf16.msra.mxu0 %v3152
    %4316 = vmatprep.subr.bf16.mxu0 %v3161
    %4317 = vmatpush1.bf16.msra.mxu0 %v3160
    %4318 = vmatprep.subr.bf16.mxu0 %v3169
    %4319 = vmatpush1.bf16.msra.mxu0 %v3168
    %4320 = vmatprep.subr.bf16.mxu0 %v3177
    %4321 = vmatpush1.bf16.msra.mxu0 %v3176
    %4322 = vmatprep.subr.bf16.mxu0 %v3185
    %4323 = vmatpush1.bf16.msra.mxu0 %v3184
    %4324 = vmatprep.subr.bf16.mxu0 %v3193
    %4325 = vmatpush1.bf16.msra.mxu0 %v3192
    %4326 = vmatprep.subr.bf16.mxu0 %v3201
    %4327 = vmatpush1.bf16.msra.mxu0 %v3200
    %4328 = vmatprep.subr.bf16.mxu0 %v3209
    %4329 = vmatpush1.bf16.msra.mxu0 %v3208
    %4330 = vmatprep.subr.bf16.mxu0 %v3217
    %4331 = vmatpush1.bf16.msra.mxu0 %v3216
    %4332 = vmatprep.subr.bf16.mxu0 %v3225
    %4333 = vmatpush1.bf16.msra.mxu0 %v3224
    %4334 = vmatprep.subr.bf16.mxu0 %v3233
    %4335 = vmatpush1.bf16.msra.mxu0 %v3232
    %4336 = vmatprep.subr.bf16.mxu0 %v3241
    %4337 = vmatpush1.bf16.msra.mxu0 %v3240
    %4338 = vmatprep.subr.bf16.mxu0 %v3249
    %4339 = vmatpush1.bf16.msra.mxu0 %v3248
    %4340 = vmatprep.subr.bf16.mxu0 %v3257
    %4341 = vmatpush1.bf16.msra.mxu0 %v3256
    %4342 = vmatprep.mubr.bf16.mxu0 %v783
    %4343 = vmatmul.mubr.bf16.gmra.mrb[0].mxu0 %v782
    %v4344 = vpop.f32.mrb[0].mxu0
    %v4345 = vadd.f32 %v4304, %v4344
    %v4346 = vpop.f32.mrb[0].mxu0
    %v4347 = vadd.f32 %v4306, %v4346
    %v4348 = vpop.f32.mrb[0].mxu0
    %v4349 = vpop.f32.mrb[0].mxu0
    %4350 = vdwg.mxu0
    %4351 = vmatprep.subr.bf16.mxu0 %v3265
    %4352 = vmatpush1.bf16.msra.mxu0 %v3264
    %4353 = vmatprep.subr.bf16.mxu0 %v3273
    %4354 = vmatpush1.bf16.msra.mxu0 %v3272
    %4355 = vmatprep.subr.bf16.mxu0 %v3281
    %4356 = vmatpush1.bf16.msra.mxu0 %v3280
    %4357 = vmatprep.subr.bf16.mxu0 %v3289
    %4358 = vmatpush1.bf16.msra.mxu0 %v3288
    %4359 = vmatprep.subr.bf16.mxu0 %v3297
    %4360 = vmatpush1.bf16.msra.mxu0 %v3296
    %4361 = vmatprep.subr.bf16.mxu0 %v3305
    %4362 = vmatpush1.bf16.msra.mxu0 %v3304
    %4363 = vmatprep.subr.bf16.mxu0 %v3313
    %4364 = vmatpush1.bf16.msra.mxu0 %v3312
    %4365 = vmatprep.subr.bf16.mxu0 %v3321
    %4366 = vmatpush1.bf16.msra.mxu0 %v3320
    %4367 = vmatprep.subr.bf16.mxu0 %v3329
    %4368 = vmatpush1.bf16.msra.mxu0 %v3328
    %4369 = vmatprep.subr.bf16.mxu0 %v3337
    %4370 = vmatpush1.bf16.msra.mxu0 %v3336
    %4371 = vmatprep.subr.bf16.mxu0 %v3345
    %4372 = vmatpush1.bf16.msra.mxu0 %v3344
    %4373 = vmatprep.subr.bf16.mxu0 %v3353
    %4374 = vmatpush1.bf16.msra.mxu0 %v3352
    %4375 = vmatprep.subr.bf16.mxu0 %v3361
    %4376 = vmatpush1.bf16.msra.mxu0 %v3360
    %4377 = vmatprep.subr.bf16.mxu0 %v3369
    %4378 = vmatpush1.bf16.msra.mxu0 %v3368
    %4379 = vmatprep.subr.bf16.mxu0 %v3377
    %4380 = vmatpush1.bf16.msra.mxu0 %v3376
    %4381 = vmatprep.subr.bf16.mxu0 %v3385
    %4382 = vmatpush1.bf16.msra.mxu0 %v3384
    %4383 = vmatprep.mubr.bf16.mxu0 %v785
    %4384 = vmatmul.mubr.bf16.gmra.mrb[0].mxu0 %v784
    %v4385 = vpop.f32.mrb[0].mxu0
    %v4386 = vadd.f32 %v4345, %v4385
    %v4387 = vpop.f32.mrb[0].mxu0
    %v4388 = vadd.f32 %v4347, %v4387
    %v4389 = vpop.f32.mrb[0].mxu0
    %v4390 = vpop.f32.mrb[0].mxu0
    %4391 = vdwg.mxu0
    %4392 = vmatprep.subr.bf16.mxu0 %v2883
    %4393 = vmatpush1.bf16.msra.mxu0 %v2882
    %4394 = vmatprep.subr.bf16.mxu0 %v2891
    %4395 = vmatpush1.bf16.msra.mxu0 %v2890
    %4396 = vmatprep.subr.bf16.mxu0 %v2899
    %4397 = vmatpush1.bf16.msra.mxu0 %v2898
    %4398 = vmatprep.subr.bf16.mxu0 %v2907
    %4399 = vmatpush1.bf16.msra.mxu0 %v2906
    %4400 = vmatprep.subr.bf16.mxu0 %v2915
    %4401 = vmatpush1.bf16.msra.mxu0 %v2914
    %4402 = vmatprep.subr.bf16.mxu0 %v2923
    %4403 = vmatpush1.bf16.msra.mxu0 %v2922
    %4404 = vmatprep.subr.bf16.mxu0 %v2931
    %4405 = vmatpush1.bf16.msra.mxu0 %v2930
    %4406 = vmatprep.subr.bf16.mxu0 %v2939
    %4407 = vmatpush1.bf16.msra.mxu0 %v2938
    %4408 = vmatprep.subr.bf16.mxu0 %v2947
    %4409 = vmatpush1.bf16.msra.mxu0 %v2946
    %4410 = vmatprep.subr.bf16.mxu0 %v2955
    %4411 = vmatpush1.bf16.msra.mxu0 %v2954
    %4412 = vmatprep.subr.bf16.mxu0 %v2963
    %4413 = vmatpush1.bf16.msra.mxu0 %v2962
    %4414 = vmatprep.subr.bf16.mxu0 %v2971
    %4415 = vmatpush1.bf16.msra.mxu0 %v2970
    %4416 = vmatprep.subr.bf16.mxu0 %v2979
    %4417 = vmatpush1.bf16.msra.mxu0 %v2978
    %4418 = vmatprep.subr.bf16.mxu0 %v2987
    %4419 = vmatpush1.bf16.msra.mxu0 %v2986
    %4420 = vmatprep.subr.bf16.mxu0 %v2995
    %4421 = vmatpush1.bf16.msra.mxu0 %v2994
    %4422 = vmatprep.subr.bf16.mxu0 %v3003
    %4423 = vmatpush1.bf16.msra.mxu0 %v3002
    %4424 = vmatprep.mubr.bf16.mxu0 %v779
    %4425 = vmatmul.mubr.bf16.gmra.mrb[0].mxu0 %v778
    %v4426 = vpop.f32.mrb[0].mxu0
    %v4427 = vadd.f32 %v1327, %v4426
    %v4428 = vpop.f32.mrb[0].mxu0
    %v4429 = vadd.f32 %v1331, %v4428
    %v4430 = vpop.f32.mrb[0].mxu0
    %v4431 = vpop.f32.mrb[0].mxu0
    %4432 = vdwg.mxu0
    %4433 = vmatprep.subr.bf16.mxu0 %v3011
    %4434 = vmatpush1.bf16.msra.mxu0 %v3010
    %4435 = vmatprep.subr.bf16.mxu0 %v3019
    %4436 = vmatpush1.bf16.msra.mxu0 %v3018
    %4437 = vmatprep.subr.bf16.mxu0 %v3027
    %4438 = vmatpush1.bf16.msra.mxu0 %v3026
    %4439 = vmatprep.subr.bf16.mxu0 %v3035
    %4440 = vmatpush1.bf16.msra.mxu0 %v3034
    %4441 = vmatprep.subr.bf16.mxu0 %v3043
    %4442 = vmatpush1.bf16.msra.mxu0 %v3042
    %4443 = vmatprep.subr.bf16.mxu0 %v3051
    %4444 = vmatpush1.bf16.msra.mxu0 %v3050
    %4445 = vmatprep.subr.bf16.mxu0 %v3059
    %4446 = vmatpush1.bf16.msra.mxu0 %v3058
    %4447 = vmatprep.subr.bf16.mxu0 %v3067
    %4448 = vmatpush1.bf16.msra.mxu0 %v3066
    %4449 = vmatprep.subr.bf16.mxu0 %v3075
    %4450 = vmatpush1.bf16.msra.mxu0 %v3074
    %4451 = vmatprep.subr.bf16.mxu0 %v3083
    %4452 = vmatpush1.bf16.msra.mxu0 %v3082
    %4453 = vmatprep.subr.bf16.mxu0 %v3091
    %4454 = vmatpush1.bf16.msra.mxu0 %v3090
    %4455 = vmatprep.subr.bf16.mxu0 %v3099
    %4456 = vmatpush1.bf16.msra.mxu0 %v3098
    %4457 = vmatprep.subr.bf16.mxu0 %v3107
    %4458 = vmatpush1.bf16.msra.mxu0 %v3106
    %4459 = vmatprep.subr.bf16.mxu0 %v3115
    %4460 = vmatpush1.bf16.msra.mxu0 %v3114
    %4461 = vmatprep.subr.bf16.mxu0 %v3123
    %4462 = vmatpush1.bf16.msra.mxu0 %v3122
    %4463 = vmatprep.subr.bf16.mxu0 %v3131
    %4464 = vmatpush1.bf16.msra.mxu0 %v3130
    %4465 = vmatprep.mubr.bf16.mxu0 %v781
    %4466 = vmatmul.mubr.bf16.gmra.mrb[0].mxu0 %v780
    %v4467 = vpop.f32.mrb[0].mxu0
    %v4468 = vadd.f32 %v4427, %v4467
    %v4469 = vpop.f32.mrb[0].mxu0
    %v4470 = vadd.f32 %v4429, %v4469
    %v4471 = vpop.f32.mrb[0].mxu0
    %v4472 = vpop.f32.mrb[0].mxu0
    %4473 = vdwg.mxu0
    %4474 = vmatprep.subr.bf16.mxu0 %v3139
    %4475 = vmatpush1.bf16.msra.mxu0 %v3138
    %4476 = vmatprep.subr.bf16.mxu0 %v3147
    %4477 = vmatpush1.bf16.msra.mxu0 %v3146
    %4478 = vmatprep.subr.bf16.mxu0 %v3155
    %4479 = vmatpush1.bf16.msra.mxu0 %v3154
    %4480 = vmatprep.subr.bf16.mxu0 %v3163
    %4481 = vmatpush1.bf16.msra.mxu0 %v3162
    %4482 = vmatprep.subr.bf16.mxu0 %v3171
    %4483 = vmatpush1.bf16.msra.mxu0 %v3170
    %4484 = vmatprep.subr.bf16.mxu0 %v3179
    %4485 = vmatpush1.bf16.msra.mxu0 %v3178
    %4486 = vmatprep.subr.bf16.mxu0 %v3187
    %4487 = vmatpush1.bf16.msra.mxu0 %v3186
    %4488 = vmatprep.subr.bf16.mxu0 %v3195
    %4489 = vmatpush1.bf16.msra.mxu0 %v3194
    %4490 = vmatprep.subr.bf16.mxu0 %v3203
    %4491 = vmatpush1.bf16.msra.mxu0 %v3202
    %4492 = vmatprep.subr.bf16.mxu0 %v3211
    %4493 = vmatpush1.bf16.msra.mxu0 %v3210
    %4494 = vmatprep.subr.bf16.mxu0 %v3219
    %4495 = vmatpush1.bf16.msra.mxu0 %v3218
    %4496 = vmatprep.subr.bf16.mxu0 %v3227
    %4497 = vmatpush1.bf16.msra.mxu0 %v3226
    %4498 = vmatprep.subr.bf16.mxu0 %v3235
    %4499 = vmatpush1.bf16.msra.mxu0 %v3234
    %4500 = vmatprep.subr.bf16.mxu0 %v3243
    %4501 = vmatpush1.bf16.msra.mxu0 %v3242
    %4502 = vmatprep.subr.bf16.mxu0 %v3251
    %4503 = vmatpush1.bf16.msra.mxu0 %v3250
    %4504 = vmatprep.subr.bf16.mxu0 %v3259
    %4505 = vmatpush1.bf16.msra.mxu0 %v3258
    %4506 = vmatprep.mubr.bf16.mxu0 %v783
    %4507 = vmatmul.mubr.bf16.gmra.mrb[0].mxu0 %v782
    %v4508 = vpop.f32.mrb[0].mxu0
    %v4509 = vadd.f32 %v4468, %v4508
    %v4510 = vpop.f32.mrb[0].mxu0
    %v4511 = vadd.f32 %v4470, %v4510
    %v4512 = vpop.f32.mrb[0].mxu0
    %v4513 = vpop.f32.mrb[0].mxu0
    %4514 = vdwg.mxu0
    %4515 = vmatprep.subr.bf16.mxu0 %v3267
    %4516 = vmatpush1.bf16.msra.mxu0 %v3266
    %4517 = vmatprep.subr.bf16.mxu0 %v3275
    %4518 = vmatpush1.bf16.msra.mxu0 %v3274
    %4519 = vmatprep.subr.bf16.mxu0 %v3283
    %4520 = vmatpush1.bf16.msra.mxu0 %v3282
    %4521 = vmatprep.subr.bf16.mxu0 %v3291
    %4522 = vmatpush1.bf16.msra.mxu0 %v3290
    %4523 = vmatprep.subr.bf16.mxu0 %v3299
    %4524 = vmatpush1.bf16.msra.mxu0 %v3298
    %4525 = vmatprep.subr.bf16.mxu0 %v3307
    %4526 = vmatpush1.bf16.msra.mxu0 %v3306
    %4527 = vmatprep.subr.bf16.mxu0 %v3315
    %4528 = vmatpush1.bf16.msra.mxu0 %v3314
    %4529 = vmatprep.subr.bf16.mxu0 %v3323
    %4530 = vmatpush1.bf16.msra.mxu0 %v3322
    %4531 = vmatprep.subr.bf16.mxu0 %v3331
    %4532 = vmatpush1.bf16.msra.mxu0 %v3330
    %4533 = vmatprep.subr.bf16.mxu0 %v3339
    %4534 = vmatpush1.bf16.msra.mxu0 %v3338
    %4535 = vmatprep.subr.bf16.mxu0 %v3347
    %4536 = vmatpush1.bf16.msra.mxu0 %v3346
    %4537 = vmatprep.subr.bf16.mxu0 %v3355
    %4538 = vmatpush1.bf16.msra.mxu0 %v3354
    %4539 = vmatprep.subr.bf16.mxu0 %v3363
    %4540 = vmatpush1.bf16.msra.mxu0 %v3362
    %4541 = vmatprep.subr.bf16.mxu0 %v3371
    %4542 = vmatpush1.bf16.msra.mxu0 %v3370
    %4543 = vmatprep.subr.bf16.mxu0 %v3379
    %4544 = vmatpush1.bf16.msra.mxu0 %v3378
    %4545 = vmatprep.subr.bf16.mxu0 %v3387
    %4546 = vmatpush1.bf16.msra.mxu0 %v3386
    %4547 = vmatprep.mubr.bf16.mxu0 %v785
    %4548 = vmatmul.mubr.bf16.gmra.mrb[0].mxu0 %v784
    %v4549 = vpop.f32.mrb[0].mxu0
    %v4550 = vadd.f32 %v4509, %v4549
    %v4551 = vpop.f32.mrb[0].mxu0
    %v4552 = vadd.f32 %v4511, %v4551
    %v4553 = vpop.f32.mrb[0].mxu0
    %v4554 = vpop.f32.mrb[0].mxu0
    %4555 = vdwg.mxu0
    %v4556 = vmax.f32 %v4058, 0.0
    %v4557 = vmax.f32 %v4060, 0.0
    %v4558 = vmax.f32 %v4222, 0.0
    %v4559 = vmax.f32 %v4224, 0.0
    %v4560 = vmax.f32 %v4386, 0.0
    %v4561 = vmax.f32 %v4388, 0.0
    %v4562 = vmax.f32 %v4550, 0.0
    %v4563 = vmax.f32 %v4552, 0.0
    %v4564 = vpack.c.bf16 %v4556, %v4556
    %v4565 = vpack.c.bf16 %v4557, %v4557
    %v4566 = vpack.c.bf16 %v4558, %v4558
    %v4567 = vpack.c.bf16 %v4559, %v4559
    %v4568 = vpack.c.bf16 %v4560, %v4560
    %v4569 = vpack.c.bf16 %v4561, %v4561
    %v4570 = vpack.c.bf16 %v4562, %v4562
    %v4571 = vpack.c.bf16 %v4563, %v4563
    %v4572 = vld [vmem:[%s7] sm:$0xf]
    %v4573 = vld [vmem:[%s7 + $0x4] sm:$0xf]
    %v4574 = vld [vmem:[%s7 + $0x8] sm:$0xf]
    %v4575 = vld [vmem:[%s7 + $0xc] sm:$0xf]
    %v4576 = vld [vmem:[%s7 + $0x10] sm:$0xf]
    %v4577 = vld [vmem:[%s7 + $0x14] sm:$0xf]
    %v4578 = vld [vmem:[%s7 + $0x18] sm:$0xf]
    %v4579 = vld [vmem:[%s7 + $0x1c] sm:$0xf]
    %v4580 = vld [vmem:[%s7 + $0x20] sm:$0xf]
    %v4581 = vld [vmem:[%s7 + $0x24] sm:$0xf]
    %v4582 = vld [vmem:[%s7 + $0x28] sm:$0xf]
    %v4583 = vld [vmem:[%s7 + $0x2c] sm:$0xf]
    %v4584 = vld [vmem:[%s7 + $0x30] sm:$0xf]
    %v4585 = vld [vmem:[%s7 + $0x34] sm:$0xf]
    %v4586 = vld [vmem:[%s7 + $0x38] sm:$0xf]
    %v4587 = vld [vmem:[%s7 + $0x3c] sm:$0xf]
    %v4588 = vld [vmem:[%s7 + $0x40] sm:$0xf]
    %v4589 = vld [vmem:[%s7 + $0x44] sm:$0xf]
    %v4590 = vld [vmem:[%s7 + $0x48] sm:$0xf]
    %v4591 = vld [vmem:[%s7 + $0x4c] sm:$0xf]
    %v4592 = vld [vmem:[%s7 + $0x50] sm:$0xf]
    %v4593 = vld [vmem:[%s7 + $0x54] sm:$0xf]
    %v4594 = vld [vmem:[%s7 + $0x58] sm:$0xf]
    %v4595 = vld [vmem:[%s7 + $0x5c] sm:$0xf]
    %v4596 = vld [vmem:[%s7 + $0x60] sm:$0xf]
    %v4597 = vld [vmem:[%s7 + $0x64] sm:$0xf]
    %v4598 = vld [vmem:[%s7 + $0x68] sm:$0xf]
    %v4599 = vld [vmem:[%s7 + $0x6c] sm:$0xf]
    %v4600 = vld [vmem:[%s7 + $0x70] sm:$0xf]
    %v4601 = vld [vmem:[%s7 + $0x74] sm:$0xf]
    %v4602 = vld [vmem:[%s7 + $0x78] sm:$0xf]
    %v4603 = vld [vmem:[%s7 + $0x7c] sm:$0xf]
    %v4604 = vld [vmem:[%s7 + $0x80] sm:$0xf]
    %v4605 = vld [vmem:[%s7 + $0x84] sm:$0xf]
    %v4606 = vld [vmem:[%s7 + $0x88] sm:$0xf]
    %v4607 = vld [vmem:[%s7 + $0x8c] sm:$0xf]
    %v4608 = vld [vmem:[%s7 + $0x90] sm:$0xf]
    %v4609 = vld [vmem:[%s7 + $0x94] sm:$0xf]
    %v4610 = vld [vmem:[%s7 + $0x98] sm:$0xf]
    %v4611 = vld [vmem:[%s7 + $0x9c] sm:$0xf]
    %v4612 = vld [vmem:[%s7 + $0xa0] sm:$0xf]
    %v4613 = vld [vmem:[%s7 + $0xa4] sm:$0xf]
    %v4614 = vld [vmem:[%s7 + $0xa8] sm:$0xf]
    %v4615 = vld [vmem:[%s7 + $0xac] sm:$0xf]
    %v4616 = vld [vmem:[%s7 + $0xb0] sm:$0xf]
    %v4617 = vld [vmem:[%s7 + $0xb4] sm:$0xf]
    %v4618 = vld [vmem:[%s7 + $0xb8] sm:$0xf]
    %v4619 = vld [vmem:[%s7 + $0xbc] sm:$0xf]
    %v4620 = vld [vmem:[%s7 + $0xc0] sm:$0xf]
    %v4621 = vld [vmem:[%s7 + $0xc4] sm:$0xf]
    %v4622 = vld [vmem:[%s7 + $0xc8] sm:$0xf]
    %v4623 = vld [vmem:[%s7 + $0xcc] sm:$0xf]
    %v4624 = vld [vmem:[%s7 + $0xd0] sm:$0xf]
    %v4625 = vld [vmem:[%s7 + $0xd4] sm:$0xf]
    %v4626 = vld [vmem:[%s7 + $0xd8] sm:$0xf]
    %v4627 = vld [vmem:[%s7 + $0xdc] sm:$0xf]
    %v4628 = vld [vmem:[%s7 + $0xe0] sm:$0xf]
    %v4629 = vld [vmem:[%s7 + $0xe4] sm:$0xf]
    %v4630 = vld [vmem:[%s7 + $0xe8] sm:$0xf]
    %v4631 = vld [vmem:[%s7 + $0xec] sm:$0xf]
    %v4632 = vld [vmem:[%s7 + $0xf0] sm:$0xf]
    %v4633 = vld [vmem:[%s7 + $0xf4] sm:$0xf]
    %v4634 = vld [vmem:[%s7 + $0xf8] sm:$0xf]
    %v4635 = vld [vmem:[%s7 + $0xfc] sm:$0xf]
    %v4636 = vld [vmem:[%s7 + $0x100] sm:$0xf]
    %v4637 = vld [vmem:[%s7 + $0x104] sm:$0xf]
    %v4638 = vld [vmem:[%s7 + $0x108] sm:$0xf]
    %v4639 = vld [vmem:[%s7 + $0x10c] sm:$0xf]
    %v4640 = vld [vmem:[%s7 + $0x110] sm:$0xf]
    %v4641 = vld [vmem:[%s7 + $0x114] sm:$0xf]
    %v4642 = vld [vmem:[%s7 + $0x118] sm:$0xf]
    %v4643 = vld [vmem:[%s7 + $0x11c] sm:$0xf]
    %v4644 = vld [vmem:[%s7 + $0x120] sm:$0xf]
    %v4645 = vld [vmem:[%s7 + $0x124] sm:$0xf]
    %v4646 = vld [vmem:[%s7 + $0x128] sm:$0xf]
    %v4647 = vld [vmem:[%s7 + $0x12c] sm:$0xf]
    %v4648 = vld [vmem:[%s7 + $0x130] sm:$0xf]
    %v4649 = vld [vmem:[%s7 + $0x134] sm:$0xf]
    %v4650 = vld [vmem:[%s7 + $0x138] sm:$0xf]
    %v4651 = vld [vmem:[%s7 + $0x13c] sm:$0xf]
    %v4652 = vld [vmem:[%s7 + $0x140] sm:$0xf]
    %v4653 = vld [vmem:[%s7 + $0x144] sm:$0xf]
    %v4654 = vld [vmem:[%s7 + $0x148] sm:$0xf]
    %v4655 = vld [vmem:[%s7 + $0x14c] sm:$0xf]
    %v4656 = vld [vmem:[%s7 + $0x150] sm:$0xf]
    %v4657 = vld [vmem:[%s7 + $0x154] sm:$0xf]
    %v4658 = vld [vmem:[%s7 + $0x158] sm:$0xf]
    %v4659 = vld [vmem:[%s7 + $0x15c] sm:$0xf]
    %v4660 = vld [vmem:[%s7 + $0x160] sm:$0xf]
    %v4661 = vld [vmem:[%s7 + $0x164] sm:$0xf]
    %v4662 = vld [vmem:[%s7 + $0x168] sm:$0xf]
    %v4663 = vld [vmem:[%s7 + $0x16c] sm:$0xf]
    %v4664 = vld [vmem:[%s7 + $0x170] sm:$0xf]
    %v4665 = vld [vmem:[%s7 + $0x174] sm:$0xf]
    %v4666 = vld [vmem:[%s7 + $0x178] sm:$0xf]
    %v4667 = vld [vmem:[%s7 + $0x17c] sm:$0xf]
    %v4668 = vld [vmem:[%s7 + $0x180] sm:$0xf]
    %v4669 = vld [vmem:[%s7 + $0x184] sm:$0xf]
    %v4670 = vld [vmem:[%s7 + $0x188] sm:$0xf]
    %v4671 = vld [vmem:[%s7 + $0x18c] sm:$0xf]
    %v4672 = vld [vmem:[%s7 + $0x190] sm:$0xf]
    %v4673 = vld [vmem:[%s7 + $0x194] sm:$0xf]
    %v4674 = vld [vmem:[%s7 + $0x198] sm:$0xf]
    %v4675 = vld [vmem:[%s7 + $0x19c] sm:$0xf]
    %v4676 = vld [vmem:[%s7 + $0x1a0] sm:$0xf]
    %v4677 = vld [vmem:[%s7 + $0x1a4] sm:$0xf]
    %v4678 = vld [vmem:[%s7 + $0x1a8] sm:$0xf]
    %v4679 = vld [vmem:[%s7 + $0x1ac] sm:$0xf]
    %v4680 = vld [vmem:[%s7 + $0x1b0] sm:$0xf]
    %v4681 = vld [vmem:[%s7 + $0x1b4] sm:$0xf]
    %v4682 = vld [vmem:[%s7 + $0x1b8] sm:$0xf]
    %v4683 = vld [vmem:[%s7 + $0x1bc] sm:$0xf]
    %v4684 = vld [vmem:[%s7 + $0x1c0] sm:$0xf]
    %v4685 = vld [vmem:[%s7 + $0x1c4] sm:$0xf]
    %v4686 = vld [vmem:[%s7 + $0x1c8] sm:$0xf]
    %v4687 = vld [vmem:[%s7 + $0x1cc] sm:$0xf]
    %v4688 = vld [vmem:[%s7 + $0x1d0] sm:$0xf]
    %v4689 = vld [vmem:[%s7 + $0x1d4] sm:$0xf]
    %v4690 = vld [vmem:[%s7 + $0x1d8] sm:$0xf]
    %v4691 = vld [vmem:[%s7 + $0x1dc] sm:$0xf]
    %v4692 = vld [vmem:[%s7 + $0x1e0] sm:$0xf]
    %v4693 = vld [vmem:[%s7 + $0x1e4] sm:$0xf]
    %v4694 = vld [vmem:[%s7 + $0x1e8] sm:$0xf]
    %v4695 = vld [vmem:[%s7 + $0x1ec] sm:$0xf]
    %v4696 = vld [vmem:[%s7 + $0x1f0] sm:$0xf]
    %v4697 = vld [vmem:[%s7 + $0x1f4] sm:$0xf]
    %v4698 = vld [vmem:[%s7 + $0x1f8] sm:$0xf]
    %v4699 = vld [vmem:[%s7 + $0x1fc] sm:$0xf]
    %v4700 = vld [vmem:[#allocation13] sm:$0x1]
    %v4702 = vlaneseq
    %v4703 = vshrl.u32 %v4702, 7
    %v4704 = vsub.s32 0, %v4703
    %v4705 = vrot.slane %v4700, %v4704
    %v4835 = vunpack.c.l.b16 %v4572
    %v4836 = vunpack.c.l.b16 %v4573
    %v4837 = vunpack.c.l.b16 %v4574
    %v4838 = vunpack.c.l.b16 %v4575
    %v4839 = vunpack.c.l.b16 %v4576
    %v4840 = vunpack.c.l.b16 %v4577
    %v4841 = vunpack.c.l.b16 %v4578
    %v4842 = vunpack.c.l.b16 %v4579
    %v4843 = vunpack.c.l.b16 %v4580
    %v4844 = vunpack.c.l.b16 %v4581
    %v4845 = vunpack.c.l.b16 %v4582
    %v4846 = vunpack.c.l.b16 %v4583
    %v4847 = vunpack.c.l.b16 %v4584
    %v4848 = vunpack.c.l.b16 %v4585
    %v4849 = vunpack.c.l.b16 %v4586
    %v4850 = vunpack.c.l.b16 %v4587
    %v4851 = vunpack.c.l.b16 %v4588
    %v4852 = vunpack.c.l.b16 %v4589
    %v4853 = vunpack.c.l.b16 %v4590
    %v4854 = vunpack.c.l.b16 %v4591
    %v4855 = vunpack.c.l.b16 %v4592
    %v4856 = vunpack.c.l.b16 %v4593
    %v4857 = vunpack.c.l.b16 %v4594
    %v4858 = vunpack.c.l.b16 %v4595
    %v4859 = vunpack.c.l.b16 %v4596
    %v4860 = vunpack.c.l.b16 %v4597
    %v4861 = vunpack.c.l.b16 %v4598
    %v4862 = vunpack.c.l.b16 %v4599
    %v4863 = vunpack.c.l.b16 %v4600
    %v4864 = vunpack.c.l.b16 %v4601
    %v4865 = vunpack.c.l.b16 %v4602
    %v4866 = vunpack.c.l.b16 %v4603
    %v4867 = vunpack.c.l.b16 %v4604
    %v4868 = vunpack.c.l.b16 %v4605
    %v4869 = vunpack.c.l.b16 %v4606
    %v4870 = vunpack.c.l.b16 %v4607
    %v4871 = vunpack.c.l.b16 %v4608
    %v4872 = vunpack.c.l.b16 %v4609
    %v4873 = vunpack.c.l.b16 %v4610
    %v4874 = vunpack.c.l.b16 %v4611
    %v4875 = vunpack.c.l.b16 %v4612
    %v4876 = vunpack.c.l.b16 %v4613
    %v4877 = vunpack.c.l.b16 %v4614
    %v4878 = vunpack.c.l.b16 %v4615
    %v4879 = vunpack.c.l.b16 %v4616
    %v4880 = vunpack.c.l.b16 %v4617
    %v4881 = vunpack.c.l.b16 %v4618
    %v4882 = vunpack.c.l.b16 %v4619
    %v4883 = vunpack.c.l.b16 %v4620
    %v4884 = vunpack.c.l.b16 %v4621
    %v4885 = vunpack.c.l.b16 %v4622
    %v4886 = vunpack.c.l.b16 %v4623
    %v4887 = vunpack.c.l.b16 %v4624
    %v4888 = vunpack.c.l.b16 %v4625
    %v4889 = vunpack.c.l.b16 %v4626
    %v4890 = vunpack.c.l.b16 %v4627
    %v4891 = vunpack.c.l.b16 %v4628
    %v4892 = vunpack.c.l.b16 %v4629
    %v4893 = vunpack.c.l.b16 %v4630
    %v4894 = vunpack.c.l.b16 %v4631
    %v4895 = vunpack.c.l.b16 %v4632
    %v4896 = vunpack.c.l.b16 %v4633
    %v4897 = vunpack.c.l.b16 %v4634
    %v4898 = vunpack.c.l.b16 %v4635
    %v4899 = vunpack.c.l.b16 %v4636
    %v4900 = vunpack.c.l.b16 %v4637
    %v4901 = vunpack.c.l.b16 %v4638
    %v4902 = vunpack.c.l.b16 %v4639
    %v4903 = vunpack.c.l.b16 %v4640
    %v4904 = vunpack.c.l.b16 %v4641
    %v4905 = vunpack.c.l.b16 %v4642
    %v4906 = vunpack.c.l.b16 %v4643
    %v4907 = vunpack.c.l.b16 %v4644
    %v4908 = vunpack.c.l.b16 %v4645
    %v4909 = vunpack.c.l.b16 %v4646
    %v4910 = vunpack.c.l.b16 %v4647
    %v4911 = vunpack.c.l.b16 %v4648
    %v4912 = vunpack.c.l.b16 %v4649
    %v4913 = vunpack.c.l.b16 %v4650
    %v4914 = vunpack.c.l.b16 %v4651
    %v4915 = vunpack.c.l.b16 %v4652
    %v4916 = vunpack.c.l.b16 %v4653
    %v4917 = vunpack.c.l.b16 %v4654
    %v4918 = vunpack.c.l.b16 %v4655
    %v4919 = vunpack.c.l.b16 %v4656
    %v4920 = vunpack.c.l.b16 %v4657
    %v4921 = vunpack.c.l.b16 %v4658
    %v4922 = vunpack.c.l.b16 %v4659
    %v4923 = vunpack.c.l.b16 %v4660
    %v4924 = vunpack.c.l.b16 %v4661
    %v4925 = vunpack.c.l.b16 %v4662
    %v4926 = vunpack.c.l.b16 %v4663
    %v4927 = vunpack.c.l.b16 %v4664
    %v4928 = vunpack.c.l.b16 %v4665
    %v4929 = vunpack.c.l.b16 %v4666
    %v4930 = vunpack.c.l.b16 %v4667
    %v4931 = vunpack.c.l.b16 %v4668
    %v4932 = vunpack.c.l.b16 %v4669
    %v4933 = vunpack.c.l.b16 %v4670
    %v4934 = vunpack.c.l.b16 %v4671
    %v4935 = vunpack.c.l.b16 %v4672
    %v4936 = vunpack.c.l.b16 %v4673
    %v4937 = vunpack.c.l.b16 %v4674
    %v4938 = vunpack.c.l.b16 %v4675
    %v4939 = vunpack.c.l.b16 %v4676
    %v4940 = vunpack.c.l.b16 %v4677
    %v4941 = vunpack.c.l.b16 %v4678
    %v4942 = vunpack.c.l.b16 %v4679
    %v4943 = vunpack.c.l.b16 %v4680
    %v4944 = vunpack.c.l.b16 %v4681
    %v4945 = vunpack.c.l.b16 %v4682
    %v4946 = vunpack.c.l.b16 %v4683
    %v4947 = vunpack.c.l.b16 %v4684
    %v4948 = vunpack.c.l.b16 %v4685
    %v4949 = vunpack.c.l.b16 %v4686
    %v4950 = vunpack.c.l.b16 %v4687
    %v4951 = vunpack.c.l.b16 %v4688
    %v4952 = vunpack.c.l.b16 %v4689
    %v4953 = vunpack.c.l.b16 %v4690
    %v4954 = vunpack.c.l.b16 %v4691
    %v4955 = vunpack.c.l.b16 %v4692
    %v4956 = vunpack.c.l.b16 %v4693
    %v4957 = vunpack.c.l.b16 %v4694
    %v4958 = vunpack.c.l.b16 %v4695
    %v4959 = vunpack.c.l.b16 %v4696
    %v4960 = vunpack.c.l.b16 %v4697
    %v4961 = vunpack.c.l.b16 %v4698
    %v4962 = vunpack.c.l.b16 %v4699
    %v4963 = vpack.c.b16 %v4836, %v4835
    %v4964 = vpack.c.b16 %v4838, %v4837
    %v4965 = vpack.c.b16 %v4840, %v4839
    %v4966 = vpack.c.b16 %v4842, %v4841
    %v4967 = vpack.c.b16 %v4844, %v4843
    %v4968 = vpack.c.b16 %v4846, %v4845
    %v4969 = vpack.c.b16 %v4848, %v4847
    %v4970 = vpack.c.b16 %v4850, %v4849
    %v4971 = vpack.c.b16 %v4852, %v4851
    %v4972 = vpack.c.b16 %v4854, %v4853
    %v4973 = vpack.c.b16 %v4856, %v4855
    %v4974 = vpack.c.b16 %v4858, %v4857
    %v4975 = vpack.c.b16 %v4860, %v4859
    %v4976 = vpack.c.b16 %v4862, %v4861
    %v4977 = vpack.c.b16 %v4864, %v4863
    %v4978 = vpack.c.b16 %v4866, %v4865
    %v4979 = vpack.c.b16 %v4868, %v4867
    %v4980 = vpack.c.b16 %v4870, %v4869
    %v4981 = vpack.c.b16 %v4872, %v4871
    %v4982 = vpack.c.b16 %v4874, %v4873
    %v4983 = vpack.c.b16 %v4876, %v4875
    %v4984 = vpack.c.b16 %v4878, %v4877
    %v4985 = vpack.c.b16 %v4880, %v4879
    %v4986 = vpack.c.b16 %v4882, %v4881
    %v4987 = vpack.c.b16 %v4884, %v4883
    %v4988 = vpack.c.b16 %v4886, %v4885
    %v4989 = vpack.c.b16 %v4888, %v4887
    %v4990 = vpack.c.b16 %v4890, %v4889
    %v4991 = vpack.c.b16 %v4892, %v4891
    %v4992 = vpack.c.b16 %v4894, %v4893
    %v4993 = vpack.c.b16 %v4896, %v4895
    %v4994 = vpack.c.b16 %v4898, %v4897
    %v4995 = vpack.c.b16 %v4900, %v4899
    %v4996 = vpack.c.b16 %v4902, %v4901
    %v4997 = vpack.c.b16 %v4904, %v4903
    %v4998 = vpack.c.b16 %v4906, %v4905
    %v4999 = vpack.c.b16 %v4908, %v4907
    %v5000 = vpack.c.b16 %v4910, %v4909
    %v5001 = vpack.c.b16 %v4912, %v4911
    %v5002 = vpack.c.b16 %v4914, %v4913
    %v5003 = vpack.c.b16 %v4916, %v4915
    %v5004 = vpack.c.b16 %v4918, %v4917
    %v5005 = vpack.c.b16 %v4920, %v4919
    %v5006 = vpack.c.b16 %v4922, %v4921
    %v5007 = vpack.c.b16 %v4924, %v4923
    %v5008 = vpack.c.b16 %v4926, %v4925
    %v5009 = vpack.c.b16 %v4928, %v4927
    %v5010 = vpack.c.b16 %v4930, %v4929
    %v5011 = vpack.c.b16 %v4932, %v4931
    %v5012 = vpack.c.b16 %v4934, %v4933
    %v5013 = vpack.c.b16 %v4936, %v4935
    %v5014 = vpack.c.b16 %v4938, %v4937
    %v5015 = vpack.c.b16 %v4940, %v4939
    %v5016 = vpack.c.b16 %v4942, %v4941
    %v5017 = vpack.c.b16 %v4944, %v4943
    %v5018 = vpack.c.b16 %v4946, %v4945
    %v5019 = vpack.c.b16 %v4948, %v4947
    %v5020 = vpack.c.b16 %v4950, %v4949
    %v5021 = vpack.c.b16 %v4952, %v4951
    %v5022 = vpack.c.b16 %v4954, %v4953
    %v5023 = vpack.c.b16 %v4956, %v4955
    %v5024 = vpack.c.b16 %v4958, %v4957
    %v5025 = vpack.c.b16 %v4960, %v4959
    %v5026 = vpack.c.b16 %v4962, %v4961
    %5091 = vmatprep.subr.bf16.mxu0 0
    %5092 = vmatpush1.bf16.msra.mxu0 %v4963
    %5093 = vmatprep.subr.bf16.mxu0 0
    %5094 = vmatpush1.bf16.msra.mxu0 %v4964
    %5095 = vmatprep.subr.bf16.mxu0 0
    %5096 = vmatpush1.bf16.msra.mxu0 %v4965
    %5097 = vmatprep.subr.bf16.mxu0 0
    %5098 = vmatpush1.bf16.msra.mxu0 %v4966
    %5099 = vmatprep.subr.bf16.mxu0 0
    %5100 = vmatpush1.bf16.msra.mxu0 %v4967
    %5101 = vmatprep.subr.bf16.mxu0 0
    %5102 = vmatpush1.bf16.msra.mxu0 %v4968
    %5103 = vmatprep.subr.bf16.mxu0 0
    %5104 = vmatpush1.bf16.msra.mxu0 %v4969
    %5105 = vmatprep.subr.bf16.mxu0 0
    %5106 = vmatpush1.bf16.msra.mxu0 %v4970
    %5107 = vmatprep.subr.bf16.mxu0 0
    %5108 = vmatpush1.bf16.msra.mxu0 %v4971
    %5109 = vmatprep.subr.bf16.mxu0 0
    %5110 = vmatpush1.bf16.msra.mxu0 %v4972
    %5111 = vmatprep.subr.bf16.mxu0 0
    %5112 = vmatpush1.bf16.msra.mxu0 %v4973
    %5113 = vmatprep.subr.bf16.mxu0 0
    %5114 = vmatpush1.bf16.msra.mxu0 %v4974
    %5115 = vmatprep.subr.bf16.mxu0 0
    %5116 = vmatpush1.bf16.msra.mxu0 %v4975
    %5117 = vmatprep.subr.bf16.mxu0 0
    %5118 = vmatpush1.bf16.msra.mxu0 %v4976
    %5119 = vmatprep.subr.bf16.mxu0 0
    %5120 = vmatpush1.bf16.msra.mxu0 %v4977
    %5121 = vmatprep.subr.bf16.mxu0 0
    %5122 = vmatpush1.bf16.msra.mxu0 %v4978
    %5123 = vmatprep.mubr.bf16.mxu0 %v4565
    %5124 = vmatmul.mubr.bf16.gmra.mrb[0].mxu0 %v4564
    %v5125 = vpop.f32.mrb[0].mxu0
    %v5126 = vadd.f32 %v4705, %v5125
    %v5127 = vpop.f32.mrb[0].mxu0
    %v5128 = vpop.f32.mrb[0].mxu0
    %v5129 = vpop.f32.mrb[0].mxu0
    %5130 = vdwg.mxu0
    %5131 = vmatprep.subr.bf16.mxu0 0
    %5132 = vmatpush1.bf16.msra.mxu0 %v4979
    %5133 = vmatprep.subr.bf16.mxu0 0
    %5134 = vmatpush1.bf16.msra.mxu0 %v4980
    %5135 = vmatprep.subr.bf16.mxu0 0
    %5136 = vmatpush1.bf16.msra.mxu0 %v4981
    %5137 = vmatprep.subr.bf16.mxu0 0
    %5138 = vmatpush1.bf16.msra.mxu0 %v4982
    %5139 = vmatprep.subr.bf16.mxu0 0
    %5140 = vmatpush1.bf16.msra.mxu0 %v4983
    %5141 = vmatprep.subr.bf16.mxu0 0
    %5142 = vmatpush1.bf16.msra.mxu0 %v4984
    %5143 = vmatprep.subr.bf16.mxu0 0
    %5144 = vmatpush1.bf16.msra.mxu0 %v4985
    %5145 = vmatprep.subr.bf16.mxu0 0
    %5146 = vmatpush1.bf16.msra.mxu0 %v4986
    %5147 = vmatprep.subr.bf16.mxu0 0
    %5148 = vmatpush1.bf16.msra.mxu0 %v4987
    %5149 = vmatprep.subr.bf16.mxu0 0
    %5150 = vmatpush1.bf16.msra.mxu0 %v4988
    %5151 = vmatprep.subr.bf16.mxu0 0
    %5152 = vmatpush1.bf16.msra.mxu0 %v4989
    %5153 = vmatprep.subr.bf16.mxu0 0
    %5154 = vmatpush1.bf16.msra.mxu0 %v4990
    %5155 = vmatprep.subr.bf16.mxu0 0
    %5156 = vmatpush1.bf16.msra.mxu0 %v4991
    %5157 = vmatprep.subr.bf16.mxu0 0
    %5158 = vmatpush1.bf16.msra.mxu0 %v4992
    %5159 = vmatprep.subr.bf16.mxu0 0
    %5160 = vmatpush1.bf16.msra.mxu0 %v4993
    %5161 = vmatprep.subr.bf16.mxu0 0
    %5162 = vmatpush1.bf16.msra.mxu0 %v4994
    %5163 = vmatprep.mubr.bf16.mxu0 %v4567
    %5164 = vmatmul.mubr.bf16.gmra.mrb[0].mxu0 %v4566
    %v5165 = vpop.f32.mrb[0].mxu0
    %v5166 = vadd.f32 %v5126, %v5165
    %v5167 = vpop.f32.mrb[0].mxu0
    %v5168 = vpop.f32.mrb[0].mxu0
    %v5169 = vpop.f32.mrb[0].mxu0
    %5170 = vdwg.mxu0
    %5171 = vmatprep.subr.bf16.mxu0 0
    %5172 = vmatpush1.bf16.msra.mxu0 %v4995
    %5173 = vmatprep.subr.bf16.mxu0 0
    %5174 = vmatpush1.bf16.msra.mxu0 %v4996
    %5175 = vmatprep.subr.bf16.mxu0 0
    %5176 = vmatpush1.bf16.msra.mxu0 %v4997
    %5177 = vmatprep.subr.bf16.mxu0 0
    %5178 = vmatpush1.bf16.msra.mxu0 %v4998
    %5179 = vmatprep.subr.bf16.mxu0 0
    %5180 = vmatpush1.bf16.msra.mxu0 %v4999
    %5181 = vmatprep.subr.bf16.mxu0 0
    %5182 = vmatpush1.bf16.msra.mxu0 %v5000
    %5183 = vmatprep.subr.bf16.mxu0 0
    %5184 = vmatpush1.bf16.msra.mxu0 %v5001
    %5185 = vmatprep.subr.bf16.mxu0 0
    %5186 = vmatpush1.bf16.msra.mxu0 %v5002
    %5187 = vmatprep.subr.bf16.mxu0 0
    %5188 = vmatpush1.bf16.msra.mxu0 %v5003
    %5189 = vmatprep.subr.bf16.mxu0 0
    %5190 = vmatpush1.bf16.msra.mxu0 %v5004
    %5191 = vmatprep.subr.bf16.mxu0 0
    %5192 = vmatpush1.bf16.msra.mxu0 %v5005
    %5193 = vmatprep.subr.bf16.mxu0 0
    %5194 = vmatpush1.bf16.msra.mxu0 %v5006
    %5195 = vmatprep.subr.bf16.mxu0 0
    %5196 = vmatpush1.bf16.msra.mxu0 %v5007
    %5197 = vmatprep.subr.bf16.mxu0 0
    %5198 = vmatpush1.bf16.msra.mxu0 %v5008
    %5199 = vmatprep.subr.bf16.mxu0 0
    %5200 = vmatpush1.bf16.msra.mxu0 %v5009
    %5201 = vmatprep.subr.bf16.mxu0 0
    %5202 = vmatpush1.bf16.msra.mxu0 %v5010
    %5203 = vmatprep.mubr.bf16.mxu0 %v4569
    %5204 = vmatmul.mubr.bf16.gmra.mrb[0].mxu0 %v4568
    %v5205 = vpop.f32.mrb[0].mxu0
    %v5206 = vadd.f32 %v5166, %v5205
    %v5207 = vpop.f32.mrb[0].mxu0
    %v5208 = vpop.f32.mrb[0].mxu0
    %v5209 = vpop.f32.mrb[0].mxu0
    %5210 = vdwg.mxu0
    %5211 = vmatprep.subr.bf16.mxu0 0
    %5212 = vmatpush1.bf16.msra.mxu0 %v5011
    %5213 = vmatprep.subr.bf16.mxu0 0
    %5214 = vmatpush1.bf16.msra.mxu0 %v5012
    %5215 = vmatprep.subr.bf16.mxu0 0
    %5216 = vmatpush1.bf16.msra.mxu0 %v5013
    %5217 = vmatprep.subr.bf16.mxu0 0
    %5218 = vmatpush1.bf16.msra.mxu0 %v5014
    %5219 = vmatprep.subr.bf16.mxu0 0
    %5220 = vmatpush1.bf16.msra.mxu0 %v5015
    %5221 = vmatprep.subr.bf16.mxu0 0
    %5222 = vmatpush1.bf16.msra.mxu0 %v5016
    %5223 = vmatprep.subr.bf16.mxu0 0
    %5224 = vmatpush1.bf16.msra.mxu0 %v5017
    %5225 = vmatprep.subr.bf16.mxu0 0
    %5226 = vmatpush1.bf16.msra.mxu0 %v5018
    %5227 = vmatprep.subr.bf16.mxu0 0
    %5228 = vmatpush1.bf16.msra.mxu0 %v5019
    %5229 = vmatprep.subr.bf16.mxu0 0
    %5230 = vmatpush1.bf16.msra.mxu0 %v5020
    %5231 = vmatprep.subr.bf16.mxu0 0
    %5232 = vmatpush1.bf16.msra.mxu0 %v5021
    %5233 = vmatprep.subr.bf16.mxu0 0
    %5234 = vmatpush1.bf16.msra.mxu0 %v5022
    %5235 = vmatprep.subr.bf16.mxu0 0
    %5236 = vmatpush1.bf16.msra.mxu0 %v5023
    %5237 = vmatprep.subr.bf16.mxu0 0
    %5238 = vmatpush1.bf16.msra.mxu0 %v5024
    %5239 = vmatprep.subr.bf16.mxu0 0
    %5240 = vmatpush1.bf16.msra.mxu0 %v5025
    %5241 = vmatprep.subr.bf16.mxu0 0
    %5242 = vmatpush1.bf16.msra.mxu0 %v5026
    %5243 = vmatprep.mubr.bf16.mxu0 %v4571
    %5244 = vmatmul.mubr.bf16.gmra.mrb[0].mxu0 %v4570
    %v5245 = vpop.f32.mrb[0].mxu0
    %v5246 = vadd.f32 %v5206, %v5245
    %v5247 = vpop.f32.mrb[0].mxu0
    %v5248 = vpop.f32.mrb[0].mxu0
    %v5249 = vpop.f32.mrb[0].mxu0
    %5250 = vdwg.mxu0
    %5252 = vrot.lane.b32.xlu0 %v5246, 127
    %v5253 = vpop.permute.xlu0 %5252
    %vm5255 = vcmask 41984
    %v5256 = vsel %vm5255, %v5253, 0.0
    %5257 = vadd.xlane.f32.xlu0 %v5256
    %v5258 = vpop.xlane.xlu0 %5257
    %v5259 = vrcp.pop 6.0
    %v5260 = vmul.f32 %v5258, %v5259
    %v5261 = vsub.f32 %v5246, %v5260
    %5262 = vset.pattern.permute.xlu0 0
    %5263 = vperm.xlu0 %5262, %v5246
    %v5264 = vpop.permute.xlu0 %5263
    %v5266 = vadd.f32 %v5264, %v5261
    %5268 = vrot.lane.b32.xlu0 %v5266, 127
    %v5269 = vpop.permute.xlu0 %5268
    %5271 = vst.msk [vmem:[#allocation14] sm:$0x3] %vm5255, %v5269
    // Predicated region
    $region66: #{tpu_custom_call.1} parent=1 // pred_check
      _
    $region67: #{tpu_custom_call.1} parent=1 // pred_check_branch
      %5273 = sbr.rel (0) target = $region69
    $region68: #{tpu_custom_call.1} parent=1 // pred_region
      %s5275 = ssub.s32 32, 32
      %5276 = vsyncadd [#allocation4], %s5275
      %s5278 = sshll.u32 [#allocation14], 4
      %s5279 = int_to_ptr.vmem [resolvable:$true] %s5278
      %5281 = dma.vmem_to_hbm [thread:$0]  %s5279, 32, %s9, [#allocation4]
    $region69: #{tpu_custom_call.1} parent=1 // pred_fallthru
      _
    // Predicated region
    $region70: #{tpu_custom_call.1} parent=1 // pred_check
      _
    $region71: #{tpu_custom_call.1} parent=1 // pred_check_branch
      %5283 = sbr.rel (0) target = $region73
    $region72: #{tpu_custom_call.1} parent=1 // pred_region
      %5284 = dma.done [#allocation4], 32
    $region73: #{tpu_custom_call.1} parent=1 // pred_fallthru
      _
    %5285 = vsyncpa [#allocation3], 1
    %5286 = vsyncpa [#allocation6], 1
    %5287 = vsyncpa [#allocation9], 1
    %5288 = vsyncpa [#allocation12], 1
    %5289 = vsyncpa [#allocation4], 1

</llo_original>
